<compile_context>
chip_gen: v7x
topology: tpu7x:2x2x1
jax: 0.10.0
libtpu: 0.0.40
codegen_flags: <defaults>
</compile_context>

<pallas_src>
import jax
import jax.numpy as jnp
from jax.experimental import pallas as pl
from jax.experimental.pallas import tpu as pltpu

# ----------------------------- small config ---------------------------------
NUM_CLASSES = 10
IMG_SIZE    = 16
IN_CHANNELS = 4
PATCH_SIZE  = 8
NUM_LAYERS  = 2
EMBED_DIM   = 32
MLP_SIZE    = 64
NUM_HEADS   = 4
HEAD_DIM    = EMBED_DIM // NUM_HEADS
NUM_PATCHES = (IMG_SIZE // PATCH_SIZE) ** 2        # 4
SEQ         = NUM_PATCHES + 1                      # 5 (cls token + patches)
LN_EPS      = 1e-5
SCALE       = float(HEAD_DIM) ** -0.5


# ------------------------------ kernel helpers -------------------------------
def _layer_norm(x, w, b):
    mu = jnp.mean(x, axis=-1, keepdims=True)
    var = jnp.mean((x - mu) ** 2, axis=-1, keepdims=True)
    return (x - mu) * jax.lax.rsqrt(var + LN_EPS) * w + b


def _gelu(x):
    # exact (erf) GELU, matching torch.nn.GELU() default
    return 0.5 * x * (1.0 + jax.lax.erf(x * 0.7071067811865476))


def _split_heads(qkv, base):
    # qkv: [S, 3E]; returns [H, S, Dh] for the block of lanes starting at `base`
    return jnp.concatenate(
        [qkv[None, :, base + h * HEAD_DIM: base + (h + 1) * HEAD_DIM]
         for h in range(NUM_HEADS)],
        axis=0)


# ------------------------------ fused Pallas kernel --------------------------
def vit_fused_kernel(patches_ref, patch_w_ref, patch_b_ref, cls_ref, pos_ref,
                     ln1w_ref, ln1b_ref, wqkv_ref, bqkv_ref, wo_ref, bo_ref,
                     ln2w_ref, ln2b_ref, w1_ref, b1_ref, w2_ref, b2_ref,
                     clnw_ref, clnb_ref, cw_ref, cb_ref,
                     logits_ref, heat_ref):
    B = patches_ref.shape[0] // NUM_PATCHES

    # --- patch embedding for the whole batch in one matmul ---
    pe = (jnp.dot(patches_ref[...], patch_w_ref[...],
                  preferred_element_type=jnp.float32)
          + patch_b_ref[...])                                   # [B*Np, E]

    # identity matrix for the rollout (built once; 2-D iota required on TPU)
    row = jax.lax.broadcasted_iota(jnp.int32, (SEQ, SEQ), 0)
    col = jax.lax.broadcasted_iota(jnp.int32, (SEQ, SEQ), 1)
    eye = (row == col).astype(jnp.float32)

    cls_tok = cls_ref[...]                                       # [1, E]
    pos = pos_ref[...]                                           # [S, E]

    cls_rows = []
    heatmaps = []
    for b in range(B):                                           # static unroll
        pe_b = pe[b * NUM_PATCHES:(b + 1) * NUM_PATCHES, :]      # [Np, E]
        x = jnp.concatenate([cls_tok, pe_b], axis=0) + pos       # [S, E]
        # TODO(synk): embedding/mlp/attn Dropout layers are inference-mode identities.

        hm = None
        for l in range(NUM_LAYERS):                              # static unroll
            # --- MSA block: LN -> MultiheadAttention -> residual ---
            xn = _layer_norm(x, ln1w_ref[l], ln1b_ref[l])
            qkv = (jnp.dot(xn, wqkv_ref[l],
                           preferred_element_type=jnp.float32)
                   + bqkv_ref[l])                                 # [S, 3E]
            q = _split_heads(qkv, 0)                              # [H, S, Dh]
            k = _split_heads(qkv, EMBED_DIM)
            v = _split_heads(qkv, 2 * EMBED_DIM)

            s = jnp.einsum('hqd,hkd->hqk', q, k,
                           preferred_element_type=jnp.float32) * SCALE   # [H,S,S]
            s = s - jnp.max(s, axis=-1, keepdims=True)
            p = jnp.exp(s)
            p = p * pl.reciprocal(jnp.sum(p, axis=-1, keepdims=True),
                                  approx=True)                   # softmax over keys
            attn = jnp.mean(p, axis=0)                           # head-avg weights [S,S]

            pv = jnp.einsum('hqk,hkd->hqd', p, v,
                            preferred_element_type=jnp.float32)  # [H, S, Dh]
            heads_cat = jnp.concatenate(
                [pv[h] for h in range(NUM_HEADS)], axis=-1)      # [S, E]
            ao = (jnp.dot(heads_cat, wo_ref[l],
                          preferred_element_type=jnp.float32)
                  + bo_ref[l])
            x1 = x + ao                                          # residual

            # --- MLP block: LN -> Linear -> GELU -> Linear -> residual ---
            xn2 = _layer_norm(x1, ln2w_ref[l], ln2b_ref[l])
            h1 = _gelu(jnp.dot(xn2, w1_ref[l],
                               preferred_element_type=jnp.float32) + b1_ref[l])
            h2 = jnp.dot(h1, w2_ref[l],
                         preferred_element_type=jnp.float32) + b2_ref[l]
            x = x1 + h2

            # --- fused attention rollout (never leaves VMEM) ---
            if l == 0:
                hm = attn
            else:
                hm = jnp.dot(0.5 * attn + 0.5 * eye, hm,
                             preferred_element_type=jnp.float32)

        cls_rows.append(x[0:1, :])                               # [1, E]
        heatmaps.append(hm[None])                                # [1, S, S]

    # --- classifier head on the cls tokens of the whole batch ---
    cls_all = jnp.concatenate(cls_rows, axis=0)                  # [B, E]
    cls_n = _layer_norm(cls_all, clnw_ref[...], clnb_ref[...])
    logits_ref[...] = (jnp.dot(cls_n, cw_ref[...],
                               preferred_element_type=jnp.float32)
                       + cb_ref[...])
    heat_ref[...] = jnp.concatenate(heatmaps, axis=0)            # [B, S, S]


# ------------------------------- ViT forward ---------------------------------
def vit_forward(x_nchw, params):
    B = x_nchw.shape[0]
    P, Hp = PATCH_SIZE, IMG_SIZE // PATCH_SIZE

    # patchify (pure layout glue): NCHW -> [B*Np, C*P*P] in (c, ph, pw) order
    patches = x_nchw.reshape(B, IN_CHANNELS, Hp, P, Hp, P)
    patches = patches.transpose(0, 2, 4, 1, 3, 5).reshape(
        B * NUM_PATCHES, IN_CHANNELS * P * P)

    vmem = pl.BlockSpec(memory_space=pltpu.MemorySpace.VMEM)
    args = [patches,
            params['patch_w'], params['patch_b'], params['cls'], params['pos'],
            params['ln1_w'], params['ln1_b'], params['w_qkv'], params['b_qkv'],
            params['w_out'], params['b_out'], params['ln2_w'], params['ln2_b'],
            params['w1'], params['b1'], params['w2'], params['b2'],
            params['cls_ln_w'], params['cls_ln_b'],
            params['cls_w'], params['cls_b']]

    logits, heat = pl.pallas_call(
        vit_fused_kernel,
        out_shape=(jax.ShapeDtypeStruct((B, NUM_CLASSES), jnp.float32),
                   jax.ShapeDtypeStruct((B, SEQ, SEQ), jnp.float32)),
        in_specs=[vmem] * len(args),
        out_specs=(vmem, vmem),
    )(*args)
    # NOTE(v7x): a leading grid axis of size 2 over batch (dimension_semantics
    # =("parallel",)) could split the two batch elements across the two
    # TensorCores; omitted here to keep a single overhead-free grid step on
    # v5e/v6e at these tiny sizes.
    return {'class': logits, 'heatmap': heat}


# ------------------------------- init params ---------------------------------
def init_params(key):
    keys = iter(jax.random.split(key, 32))

    def nrm(shape, scale=0.02):
        return (scale * jax.random.normal(next(keys), shape)).astype(jnp.float32)

    L, E, M = NUM_LAYERS, EMBED_DIM, MLP_SIZE
    params = {}
    params['cls'] = jax.random.normal(next(keys), (1, E), jnp.float32)
    params['pos'] = jax.random.normal(next(keys), (SEQ, E), jnp.float32)

    conv_w = nrm((E, IN_CHANNELS, PATCH_SIZE, PATCH_SIZE))        # [E, C, P, P]
    params['patch_w'] = conv_w.reshape(E, -1).T                   # [C*P*P, E]
    params['patch_b'] = nrm((1, E))

    # per-layer weights stacked along a leading layer axis
    params['ln1_w'] = jnp.ones((L, 1, E), jnp.float32)
    params['ln1_b'] = jnp.zeros((L, 1, E), jnp.float32)
    params['w_qkv'] = nrm((L, E, 3 * E))
    params['b_qkv'] = jnp.zeros((L, 1, 3 * E), jnp.float32)
    params['w_out'] = nrm((L, E, E))
    params['b_out'] = jnp.zeros((L, 1, E), jnp.float32)
    params['ln2_w'] = jnp.ones((L, 1, E), jnp.float32)
    params['ln2_b'] = jnp.zeros((L, 1, E), jnp.float32)
    params['w1'] = nrm((L, E, M))
    params['b1'] = jnp.zeros((L, 1, M), jnp.float32)
    params['w2'] = nrm((L, M, E))
    params['b2'] = jnp.zeros((L, 1, E), jnp.float32)

    params['cls_ln_w'] = jnp.ones((1, E), jnp.float32)
    params['cls_ln_b'] = jnp.zeros((1, E), jnp.float32)
    params['cls_w'] = nrm((E, NUM_CLASSES))
    params['cls_b'] = jnp.zeros((1, NUM_CLASSES), jnp.float32)
    return params


if __name__ == "__main__":
    key = jax.random.PRNGKey(0)
    pkey, xkey = jax.random.split(key)
    params = init_params(pkey)

    x = jax.random.normal(xkey, (2, IN_CHANNELS, IMG_SIZE, IMG_SIZE), jnp.float32)

    fwd = jax.jit(vit_forward)
    out = fwd(x, params)
    out = jax.block_until_ready(out)

    assert out['class'].shape == (2, NUM_CLASSES)
    assert out['heatmap'].shape == (2, SEQ, SEQ)
    assert jnp.all(jnp.isfinite(out['class']))
    assert jnp.all(jnp.isfinite(out['heatmap']))
    print("KERNEL_OK")
</pallas_src>

<mosaic_0001>
module attributes {stable_mosaic.version = 11 : i64} {
  func.func @vit_fused_kernel(%arg0: memref<8x256xf32, #tpu.memory_space<vmem>>, %arg1: memref<256x32xf32, #tpu.memory_space<vmem>>, %arg2: memref<1x32xf32, #tpu.memory_space<vmem>>, %arg3: memref<1x32xf32, #tpu.memory_space<vmem>>, %arg4: memref<5x32xf32, #tpu.memory_space<vmem>>, %arg5: memref<2x1x32xf32, #tpu.memory_space<vmem>>, %arg6: memref<2x1x32xf32, #tpu.memory_space<vmem>>, %arg7: memref<2x32x96xf32, #tpu.memory_space<vmem>>, %arg8: memref<2x1x96xf32, #tpu.memory_space<vmem>>, %arg9: memref<2x32x32xf32, #tpu.memory_space<vmem>>, %arg10: memref<2x1x32xf32, #tpu.memory_space<vmem>>, %arg11: memref<2x1x32xf32, #tpu.memory_space<vmem>>, %arg12: memref<2x1x32xf32, #tpu.memory_space<vmem>>, %arg13: memref<2x32x64xf32, #tpu.memory_space<vmem>>, %arg14: memref<2x1x64xf32, #tpu.memory_space<vmem>>, %arg15: memref<2x64x32xf32, #tpu.memory_space<vmem>>, %arg16: memref<2x1x32xf32, #tpu.memory_space<vmem>>, %arg17: memref<1x32xf32, #tpu.memory_space<vmem>>, %arg18: memref<1x32xf32, #tpu.memory_space<vmem>>, %arg19: memref<32x10xf32, #tpu.memory_space<vmem>>, %arg20: memref<1x10xf32, #tpu.memory_space<vmem>>, %arg21: memref<2x10xf32, #tpu.memory_space<vmem>>, %arg22: memref<2x5x5xf32, #tpu.memory_space<vmem>>) attributes {dimension_semantics = [], scalar_prefetch = 0 : i64, scratch_operands = 0 : i64, tpu.core_type = #tpu.core_type<tc>} {
    %c0 = arith.constant 0 : index
    %c0_0 = arith.constant 0 : index
    %0 = vector.load %arg0[%c0, %c0_0] : memref<8x256xf32, #tpu.memory_space<vmem>>, vector<8x256xf32>
    %c0_1 = arith.constant 0 : index
    %c0_2 = arith.constant 0 : index
    %1 = vector.load %arg1[%c0_1, %c0_2] : memref<256x32xf32, #tpu.memory_space<vmem>>, vector<256x32xf32>
    %cst = arith.constant dense<0.000000e+00> : vector<8x32xf32>
    %2 = tpu.matmul %0, %1, %cst {dimension_numbers = #tpu.dot_dimension_numbers<[1], [0], [0], [1], [0, 0, 1, 1], [], []>} : vector<8x256xf32>, vector<256x32xf32>, vector<8x32xf32> -> vector<8x32xf32>
    %c0_3 = arith.constant 0 : index
    %c0_4 = arith.constant 0 : index
    %3 = vector.load %arg2[%c0_3, %c0_4] : memref<1x32xf32, #tpu.memory_space<vmem>>, vector<1x32xf32>
    %4 = vector.broadcast %3 : vector<1x32xf32> to vector<8x32xf32>
    %5 = arith.addf %2, %4 : vector<8x32xf32>
    %6 = tpu.iota {dimensions = array<i32: 0>} : vector<5x5xi32>
    %7 = tpu.iota {dimensions = array<i32: 1>} : vector<5x5xi32>
    %8 = arith.cmpi eq, %6, %7 : vector<5x5xi32>
    %9 = arith.extui %8 : vector<5x5xi1> to vector<5x5xi32>
    %10 = arith.sitofp %9 : vector<5x5xi32> to vector<5x5xf32>
    %c0_5 = arith.constant 0 : index
    %c0_6 = arith.constant 0 : index
    %11 = vector.load %arg3[%c0_5, %c0_6] : memref<1x32xf32, #tpu.memory_space<vmem>>, vector<1x32xf32>
    %c0_7 = arith.constant 0 : index
    %c0_8 = arith.constant 0 : index
    %12 = vector.load %arg4[%c0_7, %c0_8] : memref<5x32xf32, #tpu.memory_space<vmem>>, vector<5x32xf32>
    %13 = vector.extract_strided_slice %5 {offsets = [0, 0], sizes = [4, 32], strides = [1, 1]} : vector<8x32xf32> to vector<4x32xf32>
    %14 = tpu.concatenate %11, %13 in 0 : vector<1x32xf32>, vector<4x32xf32> -> vector<5x32xf32>
    %15 = arith.addf %14, %12 : vector<5x32xf32>
    %c0_9 = arith.constant 0 : index
    %c0_10 = arith.constant 0 : index
    %c0_11 = arith.constant 0 : index
    %16 = vector.load %arg5[%c0_9, %c0_10, %c0_11] : memref<2x1x32xf32, #tpu.memory_space<vmem>>, vector<1x1x32xf32>
    %17 = vector.shape_cast %16 : vector<1x1x32xf32> to vector<1x32xf32>
    %c0_12 = arith.constant 0 : index
    %c0_13 = arith.constant 0 : index
    %c0_14 = arith.constant 0 : index
    %18 = vector.load %arg6[%c0_12, %c0_13, %c0_14] : memref<2x1x32xf32, #tpu.memory_space<vmem>>, vector<1x1x32xf32>
    %19 = vector.shape_cast %18 : vector<1x1x32xf32> to vector<1x32xf32>
    %cst_15 = arith.constant dense<0.000000e+00> : vector<5xf32>
    %20 = vector.multi_reduction <add>, %15, %cst_15 [1] : vector<5x32xf32> to vector<5xf32>
    %21 = vector.shape_cast %20 : vector<5xf32> to vector<5x1xf32>
    %cst_16 = arith.constant 3.200000e+01 : f32
    %22 = vector.broadcast %cst_16 : f32 to vector<5x1xf32>
    %23 = arith.divf %21, %22 : vector<5x1xf32>
    %24 = vector.broadcast %23 : vector<5x1xf32> to vector<5x32xf32>
    %25 = arith.subf %15, %24 : vector<5x32xf32>
    %26 = arith.mulf %25, %25 : vector<5x32xf32>
    %cst_17 = arith.constant dense<0.000000e+00> : vector<5xf32>
    %27 = vector.multi_reduction <add>, %26, %cst_17 [1] : vector<5x32xf32> to vector<5xf32>
    %28 = vector.shape_cast %27 : vector<5xf32> to vector<5x1xf32>
    %cst_18 = arith.constant 3.200000e+01 : f32
    %29 = vector.broadcast %cst_18 : f32 to vector<5x1xf32>
    %30 = arith.divf %28, %29 : vector<5x1xf32>
    %31 = vector.broadcast %23 : vector<5x1xf32> to vector<5x32xf32>
    %32 = arith.subf %15, %31 : vector<5x32xf32>
    %cst_19 = arith.constant 9.99999974E-6 : f32
    %33 = vector.broadcast %cst_19 : f32 to vector<5x1xf32>
    %34 = arith.addf %30, %33 : vector<5x1xf32>
    %35 = math.rsqrt %34 : vector<5x1xf32>
    %36 = vector.broadcast %35 : vector<5x1xf32> to vector<5x32xf32>
    %37 = arith.mulf %32, %36 : vector<5x32xf32>
    %38 = vector.broadcast %17 : vector<1x32xf32> to vector<5x32xf32>
    %39 = arith.mulf %37, %38 : vector<5x32xf32>
    %40 = vector.broadcast %19 : vector<1x32xf32> to vector<5x32xf32>
    %41 = arith.addf %39, %40 : vector<5x32xf32>
    %c0_20 = arith.constant 0 : index
    %c0_21 = arith.constant 0 : index
    %c0_22 = arith.constant 0 : index
    %42 = vector.load %arg7[%c0_20, %c0_21, %c0_22] : memref<2x32x96xf32, #tpu.memory_space<vmem>>, vector<1x32x96xf32>
    %43 = vector.shape_cast %42 : vector<1x32x96xf32> to vector<32x96xf32>
    %cst_23 = arith.constant dense<0.000000e+00> : vector<5x96xf32>
    %44 = tpu.matmul %41, %43, %cst_23 {dimension_numbers = #tpu.dot_dimension_numbers<[1], [0], [0], [1], [0, 0, 1, 1], [], []>} : vector<5x32xf32>, vector<32x96xf32>, vector<5x96xf32> -> vector<5x96xf32>
    %c0_24 = arith.constant 0 : index
    %c0_25 = arith.constant 0 : index
    %c0_26 = arith.constant 0 : index
    %45 = vector.load %arg8[%c0_24, %c0_25, %c0_26] : memref<2x1x96xf32, #tpu.memory_space<vmem>>, vector<1x1x96xf32>
    %46 = vector.shape_cast %45 : vector<1x1x96xf32> to vector<1x96xf32>
    %47 = vector.broadcast %46 : vector<1x96xf32> to vector<5x96xf32>
    %48 = arith.addf %44, %47 : vector<5x96xf32>
    %49 = vector.extract_strided_slice %48 {offsets = [0, 0], sizes = [5, 8], strides = [1, 1]} : vector<5x96xf32> to vector<5x8xf32>
    %50 = vector.shape_cast %49 : vector<5x8xf32> to vector<1x5x8xf32>
    %51 = vector.extract_strided_slice %48 {offsets = [0, 8], sizes = [5, 8], strides = [1, 1]} : vector<5x96xf32> to vector<5x8xf32>
    %52 = vector.shape_cast %51 : vector<5x8xf32> to vector<1x5x8xf32>
    %53 = vector.extract_strided_slice %48 {offsets = [0, 16], sizes = [5, 8], strides = [1, 1]} : vector<5x96xf32> to vector<5x8xf32>
    %54 = vector.shape_cast %53 : vector<5x8xf32> to vector<1x5x8xf32>
    %55 = vector.extract_strided_slice %48 {offsets = [0, 24], sizes = [5, 8], strides = [1, 1]} : vector<5x96xf32> to vector<5x8xf32>
    %56 = vector.shape_cast %55 : vector<5x8xf32> to vector<1x5x8xf32>
    %57 = tpu.concatenate %50, %52, %54, %56 in 0 : vector<1x5x8xf32>, vector<1x5x8xf32>, vector<1x5x8xf32>, vector<1x5x8xf32> -> vector<4x5x8xf32>
    %58 = vector.extract_strided_slice %48 {offsets = [0, 32], sizes = [5, 8], strides = [1, 1]} : vector<5x96xf32> to vector<5x8xf32>
    %59 = vector.shape_cast %58 : vector<5x8xf32> to vector<1x5x8xf32>
    %60 = vector.extract_strided_slice %48 {offsets = [0, 40], sizes = [5, 8], strides = [1, 1]} : vector<5x96xf32> to vector<5x8xf32>
    %61 = vector.shape_cast %60 : vector<5x8xf32> to vector<1x5x8xf32>
    %62 = vector.extract_strided_slice %48 {offsets = [0, 48], sizes = [5, 8], strides = [1, 1]} : vector<5x96xf32> to vector<5x8xf32>
    %63 = vector.shape_cast %62 : vector<5x8xf32> to vector<1x5x8xf32>
    %64 = vector.extract_strided_slice %48 {offsets = [0, 56], sizes = [5, 8], strides = [1, 1]} : vector<5x96xf32> to vector<5x8xf32>
    %65 = vector.shape_cast %64 : vector<5x8xf32> to vector<1x5x8xf32>
    %66 = tpu.concatenate %59, %61, %63, %65 in 0 : vector<1x5x8xf32>, vector<1x5x8xf32>, vector<1x5x8xf32>, vector<1x5x8xf32> -> vector<4x5x8xf32>
    %67 = vector.extract_strided_slice %48 {offsets = [0, 64], sizes = [5, 8], strides = [1, 1]} : vector<5x96xf32> to vector<5x8xf32>
    %68 = vector.shape_cast %67 : vector<5x8xf32> to vector<1x5x8xf32>
    %69 = vector.extract_strided_slice %48 {offsets = [0, 72], sizes = [5, 8], strides = [1, 1]} : vector<5x96xf32> to vector<5x8xf32>
    %70 = vector.shape_cast %69 : vector<5x8xf32> to vector<1x5x8xf32>
    %71 = vector.extract_strided_slice %48 {offsets = [0, 80], sizes = [5, 8], strides = [1, 1]} : vector<5x96xf32> to vector<5x8xf32>
    %72 = vector.shape_cast %71 : vector<5x8xf32> to vector<1x5x8xf32>
    %73 = vector.extract_strided_slice %48 {offsets = [0, 88], sizes = [5, 8], strides = [1, 1]} : vector<5x96xf32> to vector<5x8xf32>
    %74 = vector.shape_cast %73 : vector<5x8xf32> to vector<1x5x8xf32>
    %75 = tpu.concatenate %68, %70, %72, %74 in 0 : vector<1x5x8xf32>, vector<1x5x8xf32>, vector<1x5x8xf32>, vector<1x5x8xf32> -> vector<4x5x8xf32>
    "tpu.trace_start"() <{level = 10 : i32, message = "hqd,hkd->hqk"}> : () -> ()
    %cst_27 = arith.constant dense<0.000000e+00> : vector<4x5x5xf32>
    %76 = tpu.matmul %57, %66, %cst_27 {dimension_numbers = #tpu.dot_dimension_numbers<[2], [2], [1], [1], [0, 0, 0, 1, 1, 1], [0], [0]>} : vector<4x5x8xf32>, vector<4x5x8xf32>, vector<4x5x5xf32> -> vector<4x5x5xf32>
    "tpu.trace_stop"() : () -> ()
    %cst_28 = arith.constant 0.353553385 : f32
    %77 = vector.broadcast %cst_28 : f32 to vector<4x5x5xf32>
    %78 = arith.mulf %76, %77 : vector<4x5x5xf32>
    %cst_29 = arith.constant dense<0xFF800000> : vector<4x5xf32>
    %79 = vector.multi_reduction <maximumf>, %78, %cst_29 [2] : vector<4x5x5xf32> to vector<4x5xf32>
    %80 = vector.shape_cast %79 : vector<4x5xf32> to vector<4x5x1xf32>
    %81 = vector.broadcast %80 : vector<4x5x1xf32> to vector<4x5x5xf32>
    %82 = arith.subf %78, %81 : vector<4x5x5xf32>
    %83 = math.exp %82 : vector<4x5x5xf32>
    %cst_30 = arith.constant dense<0.000000e+00> : vector<4x5xf32>
    %84 = vector.multi_reduction <add>, %83, %cst_30 [2] : vector<4x5x5xf32> to vector<4x5xf32>
    %85 = vector.shape_cast %84 : vector<4x5xf32> to vector<4x5x1xf32>
    %86 = tpu.reciprocal %85 {approx = true} : vector<4x5x1xf32> -> vector<4x5x1xf32>
    %87 = vector.broadcast %86 : vector<4x5x1xf32> to vector<4x5x5xf32>
    %88 = arith.mulf %83, %87 : vector<4x5x5xf32>
    %cst_31 = arith.constant dense<0.000000e+00> : vector<5x5xf32>
    %89 = vector.multi_reduction <add>, %88, %cst_31 [0] : vector<4x5x5xf32> to vector<5x5xf32>
    %cst_32 = arith.constant 4.000000e+00 : f32
    %90 = vector.broadcast %cst_32 : f32 to vector<5x5xf32>
    %91 = arith.divf %89, %90 : vector<5x5xf32>
    "tpu.trace_start"() <{level = 10 : i32, message = "hqk,hkd->hqd"}> : () -> ()
    %cst_33 = arith.constant dense<0.000000e+00> : vector<4x5x8xf32>
    %92 = tpu.matmul %88, %75, %cst_33 {dimension_numbers = #tpu.dot_dimension_numbers<[2], [1], [1], [2], [0, 0, 0, 1, 1, 2], [0], [0]>} : vector<4x5x5xf32>, vector<4x5x8xf32>, vector<4x5x8xf32> -> vector<4x5x8xf32>
    "tpu.trace_stop"() : () -> ()
    %93 = vector.extract_strided_slice %92 {offsets = [0, 0, 0], sizes = [1, 5, 8], strides = [1, 1, 1]} : vector<4x5x8xf32> to vector<1x5x8xf32>
    %94 = vector.shape_cast %93 : vector<1x5x8xf32> to vector<5x8xf32>
    %95 = vector.extract_strided_slice %92 {offsets = [1, 0, 0], sizes = [1, 5, 8], strides = [1, 1, 1]} : vector<4x5x8xf32> to vector<1x5x8xf32>
    %96 = vector.shape_cast %95 : vector<1x5x8xf32> to vector<5x8xf32>
    %97 = vector.extract_strided_slice %92 {offsets = [2, 0, 0], sizes = [1, 5, 8], strides = [1, 1, 1]} : vector<4x5x8xf32> to vector<1x5x8xf32>
    %98 = vector.shape_cast %97 : vector<1x5x8xf32> to vector<5x8xf32>
    %99 = vector.extract_strided_slice %92 {offsets = [3, 0, 0], sizes = [1, 5, 8], strides = [1, 1, 1]} : vector<4x5x8xf32> to vector<1x5x8xf32>
    %100 = vector.shape_cast %99 : vector<1x5x8xf32> to vector<5x8xf32>
    %101 = tpu.concatenate %94, %96, %98, %100 in 1 : vector<5x8xf32>, vector<5x8xf32>, vector<5x8xf32>, vector<5x8xf32> -> vector<5x32xf32>
    %c0_34 = arith.constant 0 : index
    %c0_35 = arith.constant 0 : index
    %c0_36 = arith.constant 0 : index
    %102 = vector.load %arg9[%c0_34, %c0_35, %c0_36] : memref<2x32x32xf32, #tpu.memory_space<vmem>>, vector<1x32x32xf32>
    %103 = vector.shape_cast %102 : vector<1x32x32xf32> to vector<32x32xf32>
    %cst_37 = arith.constant dense<0.000000e+00> : vector<5x32xf32>
    %104 = tpu.matmul %101, %103, %cst_37 {dimension_numbers = #tpu.dot_dimension_numbers<[1], [0], [0], [1], [0, 0, 1, 1], [], []>} : vector<5x32xf32>, vector<32x32xf32>, vector<5x32xf32> -> vector<5x32xf32>
    %c0_38 = arith.constant 0 : index
    %c0_39 = arith.constant 0 : index
    %c0_40 = arith.constant 0 : index
    %105 = vector.load %arg10[%c0_38, %c0_39, %c0_40] : memref<2x1x32xf32, #tpu.memory_space<vmem>>, vector<1x1x32xf32>
    %106 = vector.shape_cast %105 : vector<1x1x32xf32> to vector<1x32xf32>
    %107 = vector.broadcast %106 : vector<1x32xf32> to vector<5x32xf32>
    %108 = arith.addf %104, %107 : vector<5x32xf32>
    %109 = arith.addf %15, %108 : vector<5x32xf32>
    %c0_41 = arith.constant 0 : index
    %c0_42 = arith.constant 0 : index
    %c0_43 = arith.constant 0 : index
    %110 = vector.load %arg11[%c0_41, %c0_42, %c0_43] : memref<2x1x32xf32, #tpu.memory_space<vmem>>, vector<1x1x32xf32>
    %111 = vector.shape_cast %110 : vector<1x1x32xf32> to vector<1x32xf32>
    %c0_44 = arith.constant 0 : index
    %c0_45 = arith.constant 0 : index
    %c0_46 = arith.constant 0 : index
    %112 = vector.load %arg12[%c0_44, %c0_45, %c0_46] : memref<2x1x32xf32, #tpu.memory_space<vmem>>, vector<1x1x32xf32>
    %113 = vector.shape_cast %112 : vector<1x1x32xf32> to vector<1x32xf32>
    %cst_47 = arith.constant dense<0.000000e+00> : vector<5xf32>
    %114 = vector.multi_reduction <add>, %109, %cst_47 [1] : vector<5x32xf32> to vector<5xf32>
    %115 = vector.shape_cast %114 : vector<5xf32> to vector<5x1xf32>
    %cst_48 = arith.constant 3.200000e+01 : f32
    %116 = vector.broadcast %cst_48 : f32 to vector<5x1xf32>
    %117 = arith.divf %115, %116 : vector<5x1xf32>
    %118 = vector.broadcast %117 : vector<5x1xf32> to vector<5x32xf32>
    %119 = arith.subf %109, %118 : vector<5x32xf32>
    %120 = arith.mulf %119, %119 : vector<5x32xf32>
    %cst_49 = arith.constant dense<0.000000e+00> : vector<5xf32>
    %121 = vector.multi_reduction <add>, %120, %cst_49 [1] : vector<5x32xf32> to vector<5xf32>
    %122 = vector.shape_cast %121 : vector<5xf32> to vector<5x1xf32>
    %cst_50 = arith.constant 3.200000e+01 : f32
    %123 = vector.broadcast %cst_50 : f32 to vector<5x1xf32>
    %124 = arith.divf %122, %123 : vector<5x1xf32>
    %125 = vector.broadcast %117 : vector<5x1xf32> to vector<5x32xf32>
    %126 = arith.subf %109, %125 : vector<5x32xf32>
    %cst_51 = arith.constant 9.99999974E-6 : f32
    %127 = vector.broadcast %cst_51 : f32 to vector<5x1xf32>
    %128 = arith.addf %124, %127 : vector<5x1xf32>
    %129 = math.rsqrt %128 : vector<5x1xf32>
    %130 = vector.broadcast %129 : vector<5x1xf32> to vector<5x32xf32>
    %131 = arith.mulf %126, %130 : vector<5x32xf32>
    %132 = vector.broadcast %111 : vector<1x32xf32> to vector<5x32xf32>
    %133 = arith.mulf %131, %132 : vector<5x32xf32>
    %134 = vector.broadcast %113 : vector<1x32xf32> to vector<5x32xf32>
    %135 = arith.addf %133, %134 : vector<5x32xf32>
    %c0_52 = arith.constant 0 : index
    %c0_53 = arith.constant 0 : index
    %c0_54 = arith.constant 0 : index
    %136 = vector.load %arg13[%c0_52, %c0_53, %c0_54] : memref<2x32x64xf32, #tpu.memory_space<vmem>>, vector<1x32x64xf32>
    %137 = vector.shape_cast %136 : vector<1x32x64xf32> to vector<32x64xf32>
    %cst_55 = arith.constant dense<0.000000e+00> : vector<5x64xf32>
    %138 = tpu.matmul %135, %137, %cst_55 {dimension_numbers = #tpu.dot_dimension_numbers<[1], [0], [0], [1], [0, 0, 1, 1], [], []>} : vector<5x32xf32>, vector<32x64xf32>, vector<5x64xf32> -> vector<5x64xf32>
    %c0_56 = arith.constant 0 : index
    %c0_57 = arith.constant 0 : index
    %c0_58 = arith.constant 0 : index
    %139 = vector.load %arg14[%c0_56, %c0_57, %c0_58] : memref<2x1x64xf32, #tpu.memory_space<vmem>>, vector<1x1x64xf32>
    %140 = vector.shape_cast %139 : vector<1x1x64xf32> to vector<1x64xf32>
    %141 = vector.broadcast %140 : vector<1x64xf32> to vector<5x64xf32>
    %142 = arith.addf %138, %141 : vector<5x64xf32>
    %cst_59 = arith.constant 5.000000e-01 : f32
    %143 = vector.broadcast %cst_59 : f32 to vector<5x64xf32>
    %144 = arith.mulf %143, %142 : vector<5x64xf32>
    %cst_60 = arith.constant 0.707106769 : f32
    %145 = vector.broadcast %cst_60 : f32 to vector<5x64xf32>
    %146 = arith.mulf %142, %145 : vector<5x64xf32>
    %147 = math.erf %146 : vector<5x64xf32>
    %cst_61 = arith.constant 1.000000e+00 : f32
    %148 = vector.broadcast %cst_61 : f32 to vector<5x64xf32>
    %149 = arith.addf %148, %147 : vector<5x64xf32>
    %150 = arith.mulf %144, %149 : vector<5x64xf32>
    %c0_62 = arith.constant 0 : index
    %c0_63 = arith.constant 0 : index
    %c0_64 = arith.constant 0 : index
    %151 = vector.load %arg15[%c0_62, %c0_63, %c0_64] : memref<2x64x32xf32, #tpu.memory_space<vmem>>, vector<1x64x32xf32>
    %152 = vector.shape_cast %151 : vector<1x64x32xf32> to vector<64x32xf32>
    %cst_65 = arith.constant dense<0.000000e+00> : vector<5x32xf32>
    %153 = tpu.matmul %150, %152, %cst_65 {dimension_numbers = #tpu.dot_dimension_numbers<[1], [0], [0], [1], [0, 0, 1, 1], [], []>} : vector<5x64xf32>, vector<64x32xf32>, vector<5x32xf32> -> vector<5x32xf32>
    %c0_66 = arith.constant 0 : index
    %c0_67 = arith.constant 0 : index
    %c0_68 = arith.constant 0 : index
    %154 = vector.load %arg16[%c0_66, %c0_67, %c0_68] : memref<2x1x32xf32, #tpu.memory_space<vmem>>, vector<1x1x32xf32>
    %155 = vector.shape_cast %154 : vector<1x1x32xf32> to vector<1x32xf32>
    %156 = vector.broadcast %155 : vector<1x32xf32> to vector<5x32xf32>
    %157 = arith.addf %153, %156 : vector<5x32xf32>
    %158 = arith.addf %109, %157 : vector<5x32xf32>
    %c1 = arith.constant 1 : index
    %c0_69 = arith.constant 0 : index
    %c0_70 = arith.constant 0 : index
    %159 = vector.load %arg5[%c1, %c0_69, %c0_70] : memref<2x1x32xf32, #tpu.memory_space<vmem>>, vector<1x1x32xf32>
    %160 = vector.shape_cast %159 : vector<1x1x32xf32> to vector<1x32xf32>
    %c1_71 = arith.constant 1 : index
    %c0_72 = arith.constant 0 : index
    %c0_73 = arith.constant 0 : index
    %161 = vector.load %arg6[%c1_71, %c0_72, %c0_73] : memref<2x1x32xf32, #tpu.memory_space<vmem>>, vector<1x1x32xf32>
    %162 = vector.shape_cast %161 : vector<1x1x32xf32> to vector<1x32xf32>
    %cst_74 = arith.constant dense<0.000000e+00> : vector<5xf32>
    %163 = vector.multi_reduction <add>, %158, %cst_74 [1] : vector<5x32xf32> to vector<5xf32>
    %164 = vector.shape_cast %163 : vector<5xf32> to vector<5x1xf32>
    %cst_75 = arith.constant 3.200000e+01 : f32
    %165 = vector.broadcast %cst_75 : f32 to vector<5x1xf32>
    %166 = arith.divf %164, %165 : vector<5x1xf32>
    %167 = vector.broadcast %166 : vector<5x1xf32> to vector<5x32xf32>
    %168 = arith.subf %158, %167 : vector<5x32xf32>
    %169 = arith.mulf %168, %168 : vector<5x32xf32>
    %cst_76 = arith.constant dense<0.000000e+00> : vector<5xf32>
    %170 = vector.multi_reduction <add>, %169, %cst_76 [1] : vector<5x32xf32> to vector<5xf32>
    %171 = vector.shape_cast %170 : vector<5xf32> to vector<5x1xf32>
    %cst_77 = arith.constant 3.200000e+01 : f32
    %172 = vector.broadcast %cst_77 : f32 to vector<5x1xf32>
    %173 = arith.divf %171, %172 : vector<5x1xf32>
    %174 = vector.broadcast %166 : vector<5x1xf32> to vector<5x32xf32>
    %175 = arith.subf %158, %174 : vector<5x32xf32>
    %cst_78 = arith.constant 9.99999974E-6 : f32
    %176 = vector.broadcast %cst_78 : f32 to vector<5x1xf32>
    %177 = arith.addf %173, %176 : vector<5x1xf32>
    %178 = math.rsqrt %177 : vector<5x1xf32>
    %179 = vector.broadcast %178 : vector<5x1xf32> to vector<5x32xf32>
    %180 = arith.mulf %175, %179 : vector<5x32xf32>
    %181 = vector.broadcast %160 : vector<1x32xf32> to vector<5x32xf32>
    %182 = arith.mulf %180, %181 : vector<5x32xf32>
    %183 = vector.broadcast %162 : vector<1x32xf32> to vector<5x32xf32>
    %184 = arith.addf %182, %183 : vector<5x32xf32>
    %c1_79 = arith.constant 1 : index
    %c0_80 = arith.constant 0 : index
    %c0_81 = arith.constant 0 : index
    %185 = vector.load %arg7[%c1_79, %c0_80, %c0_81] : memref<2x32x96xf32, #tpu.memory_space<vmem>>, vector<1x32x96xf32>
    %186 = vector.shape_cast %185 : vector<1x32x96xf32> to vector<32x96xf32>
    %cst_82 = arith.constant dense<0.000000e+00> : vector<5x96xf32>
    %187 = tpu.matmul %184, %186, %cst_82 {dimension_numbers = #tpu.dot_dimension_numbers<[1], [0], [0], [1], [0, 0, 1, 1], [], []>} : vector<5x32xf32>, vector<32x96xf32>, vector<5x96xf32> -> vector<5x96xf32>
    %c1_83 = arith.constant 1 : index
    %c0_84 = arith.constant 0 : index
    %c0_85 = arith.constant 0 : index
    %188 = vector.load %arg8[%c1_83, %c0_84, %c0_85] : memref<2x1x96xf32, #tpu.memory_space<vmem>>, vector<1x1x96xf32>
    %189 = vector.shape_cast %188 : vector<1x1x96xf32> to vector<1x96xf32>
    %190 = vector.broadcast %189 : vector<1x96xf32> to vector<5x96xf32>
    %191 = arith.addf %187, %190 : vector<5x96xf32>
    %192 = vector.extract_strided_slice %191 {offsets = [0, 0], sizes = [5, 8], strides = [1, 1]} : vector<5x96xf32> to vector<5x8xf32>
    %193 = vector.shape_cast %192 : vector<5x8xf32> to vector<1x5x8xf32>
    %194 = vector.extract_strided_slice %191 {offsets = [0, 8], sizes = [5, 8], strides = [1, 1]} : vector<5x96xf32> to vector<5x8xf32>
    %195 = vector.shape_cast %194 : vector<5x8xf32> to vector<1x5x8xf32>
    %196 = vector.extract_strided_slice %191 {offsets = [0, 16], sizes = [5, 8], strides = [1, 1]} : vector<5x96xf32> to vector<5x8xf32>
    %197 = vector.shape_cast %196 : vector<5x8xf32> to vector<1x5x8xf32>
    %198 = vector.extract_strided_slice %191 {offsets = [0, 24], sizes = [5, 8], strides = [1, 1]} : vector<5x96xf32> to vector<5x8xf32>
    %199 = vector.shape_cast %198 : vector<5x8xf32> to vector<1x5x8xf32>
    %200 = tpu.concatenate %193, %195, %197, %199 in 0 : vector<1x5x8xf32>, vector<1x5x8xf32>, vector<1x5x8xf32>, vector<1x5x8xf32> -> vector<4x5x8xf32>
    %201 = vector.extract_strided_slice %191 {offsets = [0, 32], sizes = [5, 8], strides = [1, 1]} : vector<5x96xf32> to vector<5x8xf32>
    %202 = vector.shape_cast %201 : vector<5x8xf32> to vector<1x5x8xf32>
    %203 = vector.extract_strided_slice %191 {offsets = [0, 40], sizes = [5, 8], strides = [1, 1]} : vector<5x96xf32> to vector<5x8xf32>
    %204 = vector.shape_cast %203 : vector<5x8xf32> to vector<1x5x8xf32>
    %205 = vector.extract_strided_slice %191 {offsets = [0, 48], sizes = [5, 8], strides = [1, 1]} : vector<5x96xf32> to vector<5x8xf32>
    %206 = vector.shape_cast %205 : vector<5x8xf32> to vector<1x5x8xf32>
    %207 = vector.extract_strided_slice %191 {offsets = [0, 56], sizes = [5, 8], strides = [1, 1]} : vector<5x96xf32> to vector<5x8xf32>
    %208 = vector.shape_cast %207 : vector<5x8xf32> to vector<1x5x8xf32>
    %209 = tpu.concatenate %202, %204, %206, %208 in 0 : vector<1x5x8xf32>, vector<1x5x8xf32>, vector<1x5x8xf32>, vector<1x5x8xf32> -> vector<4x5x8xf32>
    %210 = vector.extract_strided_slice %191 {offsets = [0, 64], sizes = [5, 8], strides = [1, 1]} : vector<5x96xf32> to vector<5x8xf32>
    %211 = vector.shape_cast %210 : vector<5x8xf32> to vector<1x5x8xf32>
    %212 = vector.extract_strided_slice %191 {offsets = [0, 72], sizes = [5, 8], strides = [1, 1]} : vector<5x96xf32> to vector<5x8xf32>
    %213 = vector.shape_cast %212 : vector<5x8xf32> to vector<1x5x8xf32>
    %214 = vector.extract_strided_slice %191 {offsets = [0, 80], sizes = [5, 8], strides = [1, 1]} : vector<5x96xf32> to vector<5x8xf32>
    %215 = vector.shape_cast %214 : vector<5x8xf32> to vector<1x5x8xf32>
    %216 = vector.extract_strided_slice %191 {offsets = [0, 88], sizes = [5, 8], strides = [1, 1]} : vector<5x96xf32> to vector<5x8xf32>
    %217 = vector.shape_cast %216 : vector<5x8xf32> to vector<1x5x8xf32>
    %218 = tpu.concatenate %211, %213, %215, %217 in 0 : vector<1x5x8xf32>, vector<1x5x8xf32>, vector<1x5x8xf32>, vector<1x5x8xf32> -> vector<4x5x8xf32>
    "tpu.trace_start"() <{level = 10 : i32, message = "hqd,hkd->hqk"}> : () -> ()
    %cst_86 = arith.constant dense<0.000000e+00> : vector<4x5x5xf32>
    %219 = tpu.matmul %200, %209, %cst_86 {dimension_numbers = #tpu.dot_dimension_numbers<[2], [2], [1], [1], [0, 0, 0, 1, 1, 1], [0], [0]>} : vector<4x5x8xf32>, vector<4x5x8xf32>, vector<4x5x5xf32> -> vector<4x5x5xf32>
    "tpu.trace_stop"() : () -> ()
    %cst_87 = arith.constant 0.353553385 : f32
    %220 = vector.broadcast %cst_87 : f32 to vector<4x5x5xf32>
    %221 = arith.mulf %219, %220 : vector<4x5x5xf32>
    %cst_88 = arith.constant dense<0xFF800000> : vector<4x5xf32>
    %222 = vector.multi_reduction <maximumf>, %221, %cst_88 [2] : vector<4x5x5xf32> to vector<4x5xf32>
    %223 = vector.shape_cast %222 : vector<4x5xf32> to vector<4x5x1xf32>
    %224 = vector.broadcast %223 : vector<4x5x1xf32> to vector<4x5x5xf32>
    %225 = arith.subf %221, %224 : vector<4x5x5xf32>
    %226 = math.exp %225 : vector<4x5x5xf32>
    %cst_89 = arith.constant dense<0.000000e+00> : vector<4x5xf32>
    %227 = vector.multi_reduction <add>, %226, %cst_89 [2] : vector<4x5x5xf32> to vector<4x5xf32>
    %228 = vector.shape_cast %227 : vector<4x5xf32> to vector<4x5x1xf32>
    %229 = tpu.reciprocal %228 {approx = true} : vector<4x5x1xf32> -> vector<4x5x1xf32>
    %230 = vector.broadcast %229 : vector<4x5x1xf32> to vector<4x5x5xf32>
    %231 = arith.mulf %226, %230 : vector<4x5x5xf32>
    %cst_90 = arith.constant dense<0.000000e+00> : vector<5x5xf32>
    %232 = vector.multi_reduction <add>, %231, %cst_90 [0] : vector<4x5x5xf32> to vector<5x5xf32>
    %cst_91 = arith.constant 4.000000e+00 : f32
    %233 = vector.broadcast %cst_91 : f32 to vector<5x5xf32>
    %234 = arith.divf %232, %233 : vector<5x5xf32>
    "tpu.trace_start"() <{level = 10 : i32, message = "hqk,hkd->hqd"}> : () -> ()
    %cst_92 = arith.constant dense<0.000000e+00> : vector<4x5x8xf32>
    %235 = tpu.matmul %231, %218, %cst_92 {dimension_numbers = #tpu.dot_dimension_numbers<[2], [1], [1], [2], [0, 0, 0, 1, 1, 2], [0], [0]>} : vector<4x5x5xf32>, vector<4x5x8xf32>, vector<4x5x8xf32> -> vector<4x5x8xf32>
    "tpu.trace_stop"() : () -> ()
    %236 = vector.extract_strided_slice %235 {offsets = [0, 0, 0], sizes = [1, 5, 8], strides = [1, 1, 1]} : vector<4x5x8xf32> to vector<1x5x8xf32>
    %237 = vector.shape_cast %236 : vector<1x5x8xf32> to vector<5x8xf32>
    %238 = vector.extract_strided_slice %235 {offsets = [1, 0, 0], sizes = [1, 5, 8], strides = [1, 1, 1]} : vector<4x5x8xf32> to vector<1x5x8xf32>
    %239 = vector.shape_cast %238 : vector<1x5x8xf32> to vector<5x8xf32>
    %240 = vector.extract_strided_slice %235 {offsets = [2, 0, 0], sizes = [1, 5, 8], strides = [1, 1, 1]} : vector<4x5x8xf32> to vector<1x5x8xf32>
    %241 = vector.shape_cast %240 : vector<1x5x8xf32> to vector<5x8xf32>
    %242 = vector.extract_strided_slice %235 {offsets = [3, 0, 0], sizes = [1, 5, 8], strides = [1, 1, 1]} : vector<4x5x8xf32> to vector<1x5x8xf32>
    %243 = vector.shape_cast %242 : vector<1x5x8xf32> to vector<5x8xf32>
    %244 = tpu.concatenate %237, %239, %241, %243 in 1 : vector<5x8xf32>, vector<5x8xf32>, vector<5x8xf32>, vector<5x8xf32> -> vector<5x32xf32>
    %c1_93 = arith.constant 1 : index
    %c0_94 = arith.constant 0 : index
    %c0_95 = arith.constant 0 : index
    %245 = vector.load %arg9[%c1_93, %c0_94, %c0_95] : memref<2x32x32xf32, #tpu.memory_space<vmem>>, vector<1x32x32xf32>
    %246 = vector.shape_cast %245 : vector<1x32x32xf32> to vector<32x32xf32>
    %cst_96 = arith.constant dense<0.000000e+00> : vector<5x32xf32>
    %247 = tpu.matmul %244, %246, %cst_96 {dimension_numbers = #tpu.dot_dimension_numbers<[1], [0], [0], [1], [0, 0, 1, 1], [], []>} : vector<5x32xf32>, vector<32x32xf32>, vector<5x32xf32> -> vector<5x32xf32>
    %c1_97 = arith.constant 1 : index
    %c0_98 = arith.constant 0 : index
    %c0_99 = arith.constant 0 : index
    %248 = vector.load %arg10[%c1_97, %c0_98, %c0_99] : memref<2x1x32xf32, #tpu.memory_space<vmem>>, vector<1x1x32xf32>
    %249 = vector.shape_cast %248 : vector<1x1x32xf32> to vector<1x32xf32>
    %250 = vector.broadcast %249 : vector<1x32xf32> to vector<5x32xf32>
    %251 = arith.addf %247, %250 : vector<5x32xf32>
    %252 = arith.addf %158, %251 : vector<5x32xf32>
    %c1_100 = arith.constant 1 : index
    %c0_101 = arith.constant 0 : index
    %c0_102 = arith.constant 0 : index
    %253 = vector.load %arg11[%c1_100, %c0_101, %c0_102] : memref<2x1x32xf32, #tpu.memory_space<vmem>>, vector<1x1x32xf32>
    %254 = vector.shape_cast %253 : vector<1x1x32xf32> to vector<1x32xf32>
    %c1_103 = arith.constant 1 : index
    %c0_104 = arith.constant 0 : index
    %c0_105 = arith.constant 0 : index
    %255 = vector.load %arg12[%c1_103, %c0_104, %c0_105] : memref<2x1x32xf32, #tpu.memory_space<vmem>>, vector<1x1x32xf32>
    %256 = vector.shape_cast %255 : vector<1x1x32xf32> to vector<1x32xf32>
    %cst_106 = arith.constant dense<0.000000e+00> : vector<5xf32>
    %257 = vector.multi_reduction <add>, %252, %cst_106 [1] : vector<5x32xf32> to vector<5xf32>
    %258 = vector.shape_cast %257 : vector<5xf32> to vector<5x1xf32>
    %cst_107 = arith.constant 3.200000e+01 : f32
    %259 = vector.broadcast %cst_107 : f32 to vector<5x1xf32>
    %260 = arith.divf %258, %259 : vector<5x1xf32>
    %261 = vector.broadcast %260 : vector<5x1xf32> to vector<5x32xf32>
    %262 = arith.subf %252, %261 : vector<5x32xf32>
    %263 = arith.mulf %262, %262 : vector<5x32xf32>
    %cst_108 = arith.constant dense<0.000000e+00> : vector<5xf32>
    %264 = vector.multi_reduction <add>, %263, %cst_108 [1] : vector<5x32xf32> to vector<5xf32>
    %265 = vector.shape_cast %264 : vector<5xf32> to vector<5x1xf32>
    %cst_109 = arith.constant 3.200000e+01 : f32
    %266 = vector.broadcast %cst_109 : f32 to vector<5x1xf32>
    %267 = arith.divf %265, %266 : vector<5x1xf32>
    %268 = vector.broadcast %260 : vector<5x1xf32> to vector<5x32xf32>
    %269 = arith.subf %252, %268 : vector<5x32xf32>
    %cst_110 = arith.constant 9.99999974E-6 : f32
    %270 = vector.broadcast %cst_110 : f32 to vector<5x1xf32>
    %271 = arith.addf %267, %270 : vector<5x1xf32>
    %272 = math.rsqrt %271 : vector<5x1xf32>
    %273 = vector.broadcast %272 : vector<5x1xf32> to vector<5x32xf32>
    %274 = arith.mulf %269, %273 : vector<5x32xf32>
    %275 = vector.broadcast %254 : vector<1x32xf32> to vector<5x32xf32>
    %276 = arith.mulf %274, %275 : vector<5x32xf32>
    %277 = vector.broadcast %256 : vector<1x32xf32> to vector<5x32xf32>
    %278 = arith.addf %276, %277 : vector<5x32xf32>
    %c1_111 = arith.constant 1 : index
    %c0_112 = arith.constant 0 : index
    %c0_113 = arith.constant 0 : index
    %279 = vector.load %arg13[%c1_111, %c0_112, %c0_113] : memref<2x32x64xf32, #tpu.memory_space<vmem>>, vector<1x32x64xf32>
    %280 = vector.shape_cast %279 : vector<1x32x64xf32> to vector<32x64xf32>
    %cst_114 = arith.constant dense<0.000000e+00> : vector<5x64xf32>
    %281 = tpu.matmul %278, %280, %cst_114 {dimension_numbers = #tpu.dot_dimension_numbers<[1], [0], [0], [1], [0, 0, 1, 1], [], []>} : vector<5x32xf32>, vector<32x64xf32>, vector<5x64xf32> -> vector<5x64xf32>
    %c1_115 = arith.constant 1 : index
    %c0_116 = arith.constant 0 : index
    %c0_117 = arith.constant 0 : index
    %282 = vector.load %arg14[%c1_115, %c0_116, %c0_117] : memref<2x1x64xf32, #tpu.memory_space<vmem>>, vector<1x1x64xf32>
    %283 = vector.shape_cast %282 : vector<1x1x64xf32> to vector<1x64xf32>
    %284 = vector.broadcast %283 : vector<1x64xf32> to vector<5x64xf32>
    %285 = arith.addf %281, %284 : vector<5x64xf32>
    %cst_118 = arith.constant 5.000000e-01 : f32
    %286 = vector.broadcast %cst_118 : f32 to vector<5x64xf32>
    %287 = arith.mulf %286, %285 : vector<5x64xf32>
    %cst_119 = arith.constant 0.707106769 : f32
    %288 = vector.broadcast %cst_119 : f32 to vector<5x64xf32>
    %289 = arith.mulf %285, %288 : vector<5x64xf32>
    %290 = math.erf %289 : vector<5x64xf32>
    %cst_120 = arith.constant 1.000000e+00 : f32
    %291 = vector.broadcast %cst_120 : f32 to vector<5x64xf32>
    %292 = arith.addf %291, %290 : vector<5x64xf32>
    %293 = arith.mulf %287, %292 : vector<5x64xf32>
    %c1_121 = arith.constant 1 : index
    %c0_122 = arith.constant 0 : index
    %c0_123 = arith.constant 0 : index
    %294 = vector.load %arg15[%c1_121, %c0_122, %c0_123] : memref<2x64x32xf32, #tpu.memory_space<vmem>>, vector<1x64x32xf32>
    %295 = vector.shape_cast %294 : vector<1x64x32xf32> to vector<64x32xf32>
    %cst_124 = arith.constant dense<0.000000e+00> : vector<5x32xf32>
    %296 = tpu.matmul %293, %295, %cst_124 {dimension_numbers = #tpu.dot_dimension_numbers<[1], [0], [0], [1], [0, 0, 1, 1], [], []>} : vector<5x64xf32>, vector<64x32xf32>, vector<5x32xf32> -> vector<5x32xf32>
    %c1_125 = arith.constant 1 : index
    %c0_126 = arith.constant 0 : index
    %c0_127 = arith.constant 0 : index
    %297 = vector.load %arg16[%c1_125, %c0_126, %c0_127] : memref<2x1x32xf32, #tpu.memory_space<vmem>>, vector<1x1x32xf32>
    %298 = vector.shape_cast %297 : vector<1x1x32xf32> to vector<1x32xf32>
    %299 = vector.broadcast %298 : vector<1x32xf32> to vector<5x32xf32>
    %300 = arith.addf %296, %299 : vector<5x32xf32>
    %301 = arith.addf %252, %300 : vector<5x32xf32>
    %cst_128 = arith.constant 5.000000e-01 : f32
    %302 = vector.broadcast %cst_128 : f32 to vector<5x5xf32>
    %303 = arith.mulf %302, %234 : vector<5x5xf32>
    %cst_129 = arith.constant 5.000000e-01 : f32
    %304 = vector.broadcast %cst_129 : f32 to vector<5x5xf32>
    %305 = arith.mulf %304, %10 : vector<5x5xf32>
    %306 = arith.addf %303, %305 : vector<5x5xf32>
    %cst_130 = arith.constant dense<0.000000e+00> : vector<5x5xf32>
    %307 = tpu.matmul %306, %91, %cst_130 {dimension_numbers = #tpu.dot_dimension_numbers<[1], [0], [0], [1], [0, 0, 1, 1], [], []>} : vector<5x5xf32>, vector<5x5xf32>, vector<5x5xf32> -> vector<5x5xf32>
    %308 = vector.extract_strided_slice %301 {offsets = [0, 0], sizes = [1, 32], strides = [1, 1]} : vector<5x32xf32> to vector<1x32xf32>
    %309 = vector.shape_cast %307 : vector<5x5xf32> to vector<1x5x5xf32>
    %310 = vector.extract_strided_slice %5 {offsets = [4, 0], sizes = [4, 32], strides = [1, 1]} : vector<8x32xf32> to vector<4x32xf32>
    %311 = tpu.concatenate %11, %310 in 0 : vector<1x32xf32>, vector<4x32xf32> -> vector<5x32xf32>
    %312 = arith.addf %311, %12 : vector<5x32xf32>
    %c0_131 = arith.constant 0 : index
    %c0_132 = arith.constant 0 : index
    %c0_133 = arith.constant 0 : index
    %313 = vector.load %arg5[%c0_131, %c0_132, %c0_133] : memref<2x1x32xf32, #tpu.memory_space<vmem>>, vector<1x1x32xf32>
    %314 = vector.shape_cast %313 : vector<1x1x32xf32> to vector<1x32xf32>
    %c0_134 = arith.constant 0 : index
    %c0_135 = arith.constant 0 : index
    %c0_136 = arith.constant 0 : index
    %315 = vector.load %arg6[%c0_134, %c0_135, %c0_136] : memref<2x1x32xf32, #tpu.memory_space<vmem>>, vector<1x1x32xf32>
    %316 = vector.shape_cast %315 : vector<1x1x32xf32> to vector<1x32xf32>
    %cst_137 = arith.constant dense<0.000000e+00> : vector<5xf32>
    %317 = vector.multi_reduction <add>, %312, %cst_137 [1] : vector<5x32xf32> to vector<5xf32>
    %318 = vector.shape_cast %317 : vector<5xf32> to vector<5x1xf32>
    %cst_138 = arith.constant 3.200000e+01 : f32
    %319 = vector.broadcast %cst_138 : f32 to vector<5x1xf32>
    %320 = arith.divf %318, %319 : vector<5x1xf32>
    %321 = vector.broadcast %320 : vector<5x1xf32> to vector<5x32xf32>
    %322 = arith.subf %312, %321 : vector<5x32xf32>
    %323 = arith.mulf %322, %322 : vector<5x32xf32>
    %cst_139 = arith.constant dense<0.000000e+00> : vector<5xf32>
    %324 = vector.multi_reduction <add>, %323, %cst_139 [1] : vector<5x32xf32> to vector<5xf32>
    %325 = vector.shape_cast %324 : vector<5xf32> to vector<5x1xf32>
    %cst_140 = arith.constant 3.200000e+01 : f32
    %326 = vector.broadcast %cst_140 : f32 to vector<5x1xf32>
    %327 = arith.divf %325, %326 : vector<5x1xf32>
    %328 = vector.broadcast %320 : vector<5x1xf32> to vector<5x32xf32>
    %329 = arith.subf %312, %328 : vector<5x32xf32>
    %cst_141 = arith.constant 9.99999974E-6 : f32
    %330 = vector.broadcast %cst_141 : f32 to vector<5x1xf32>
    %331 = arith.addf %327, %330 : vector<5x1xf32>
    %332 = math.rsqrt %331 : vector<5x1xf32>
    %333 = vector.broadcast %332 : vector<5x1xf32> to vector<5x32xf32>
    %334 = arith.mulf %329, %333 : vector<5x32xf32>
    %335 = vector.broadcast %314 : vector<1x32xf32> to vector<5x32xf32>
    %336 = arith.mulf %334, %335 : vector<5x32xf32>
    %337 = vector.broadcast %316 : vector<1x32xf32> to vector<5x32xf32>
    %338 = arith.addf %336, %337 : vector<5x32xf32>
    %c0_142 = arith.constant 0 : index
    %c0_143 = arith.constant 0 : index
    %c0_144 = arith.constant 0 : index
    %339 = vector.load %arg7[%c0_142, %c0_143, %c0_144] : memref<2x32x96xf32, #tpu.memory_space<vmem>>, vector<1x32x96xf32>
    %340 = vector.shape_cast %339 : vector<1x32x96xf32> to vector<32x96xf32>
    %cst_145 = arith.constant dense<0.000000e+00> : vector<5x96xf32>
    %341 = tpu.matmul %338, %340, %cst_145 {dimension_numbers = #tpu.dot_dimension_numbers<[1], [0], [0], [1], [0, 0, 1, 1], [], []>} : vector<5x32xf32>, vector<32x96xf32>, vector<5x96xf32> -> vector<5x96xf32>
    %c0_146 = arith.constant 0 : index
    %c0_147 = arith.constant 0 : index
    %c0_148 = arith.constant 0 : index
    %342 = vector.load %arg8[%c0_146, %c0_147, %c0_148] : memref<2x1x96xf32, #tpu.memory_space<vmem>>, vector<1x1x96xf32>
    %343 = vector.shape_cast %342 : vector<1x1x96xf32> to vector<1x96xf32>
    %344 = vector.broadcast %343 : vector<1x96xf32> to vector<5x96xf32>
    %345 = arith.addf %341, %344 : vector<5x96xf32>
    %346 = vector.extract_strided_slice %345 {offsets = [0, 0], sizes = [5, 8], strides = [1, 1]} : vector<5x96xf32> to vector<5x8xf32>
    %347 = vector.shape_cast %346 : vector<5x8xf32> to vector<1x5x8xf32>
    %348 = vector.extract_strided_slice %345 {offsets = [0, 8], sizes = [5, 8], strides = [1, 1]} : vector<5x96xf32> to vector<5x8xf32>
    %349 = vector.shape_cast %348 : vector<5x8xf32> to vector<1x5x8xf32>
    %350 = vector.extract_strided_slice %345 {offsets = [0, 16], sizes = [5, 8], strides = [1, 1]} : vector<5x96xf32> to vector<5x8xf32>
    %351 = vector.shape_cast %350 : vector<5x8xf32> to vector<1x5x8xf32>
    %352 = vector.extract_strided_slice %345 {offsets = [0, 24], sizes = [5, 8], strides = [1, 1]} : vector<5x96xf32> to vector<5x8xf32>
    %353 = vector.shape_cast %352 : vector<5x8xf32> to vector<1x5x8xf32>
    %354 = tpu.concatenate %347, %349, %351, %353 in 0 : vector<1x5x8xf32>, vector<1x5x8xf32>, vector<1x5x8xf32>, vector<1x5x8xf32> -> vector<4x5x8xf32>
    %355 = vector.extract_strided_slice %345 {offsets = [0, 32], sizes = [5, 8], strides = [1, 1]} : vector<5x96xf32> to vector<5x8xf32>
    %356 = vector.shape_cast %355 : vector<5x8xf32> to vector<1x5x8xf32>
    %357 = vector.extract_strided_slice %345 {offsets = [0, 40], sizes = [5, 8], strides = [1, 1]} : vector<5x96xf32> to vector<5x8xf32>
    %358 = vector.shape_cast %357 : vector<5x8xf32> to vector<1x5x8xf32>
    %359 = vector.extract_strided_slice %345 {offsets = [0, 48], sizes = [5, 8], strides = [1, 1]} : vector<5x96xf32> to vector<5x8xf32>
    %360 = vector.shape_cast %359 : vector<5x8xf32> to vector<1x5x8xf32>
    %361 = vector.extract_strided_slice %345 {offsets = [0, 56], sizes = [5, 8], strides = [1, 1]} : vector<5x96xf32> to vector<5x8xf32>
    %362 = vector.shape_cast %361 : vector<5x8xf32> to vector<1x5x8xf32>
    %363 = tpu.concatenate %356, %358, %360, %362 in 0 : vector<1x5x8xf32>, vector<1x5x8xf32>, vector<1x5x8xf32>, vector<1x5x8xf32> -> vector<4x5x8xf32>
    %364 = vector.extract_strided_slice %345 {offsets = [0, 64], sizes = [5, 8], strides = [1, 1]} : vector<5x96xf32> to vector<5x8xf32>
    %365 = vector.shape_cast %364 : vector<5x8xf32> to vector<1x5x8xf32>
    %366 = vector.extract_strided_slice %345 {offsets = [0, 72], sizes = [5, 8], strides = [1, 1]} : vector<5x96xf32> to vector<5x8xf32>
    %367 = vector.shape_cast %366 : vector<5x8xf32> to vector<1x5x8xf32>
    %368 = vector.extract_strided_slice %345 {offsets = [0, 80], sizes = [5, 8], strides = [1, 1]} : vector<5x96xf32> to vector<5x8xf32>
    %369 = vector.shape_cast %368 : vector<5x8xf32> to vector<1x5x8xf32>
    %370 = vector.extract_strided_slice %345 {offsets = [0, 88], sizes = [5, 8], strides = [1, 1]} : vector<5x96xf32> to vector<5x8xf32>
    %371 = vector.shape_cast %370 : vector<5x8xf32> to vector<1x5x8xf32>
    %372 = tpu.concatenate %365, %367, %369, %371 in 0 : vector<1x5x8xf32>, vector<1x5x8xf32>, vector<1x5x8xf32>, vector<1x5x8xf32> -> vector<4x5x8xf32>
    "tpu.trace_start"() <{level = 10 : i32, message = "hqd,hkd->hqk"}> : () -> ()
    %cst_149 = arith.constant dense<0.000000e+00> : vector<4x5x5xf32>
    %373 = tpu.matmul %354, %363, %cst_149 {dimension_numbers = #tpu.dot_dimension_numbers<[2], [2], [1], [1], [0, 0, 0, 1, 1, 1], [0], [0]>} : vector<4x5x8xf32>, vector<4x5x8xf32>, vector<4x5x5xf32> -> vector<4x5x5xf32>
    "tpu.trace_stop"() : () -> ()
    %cst_150 = arith.constant 0.353553385 : f32
    %374 = vector.broadcast %cst_150 : f32 to vector<4x5x5xf32>
    %375 = arith.mulf %373, %374 : vector<4x5x5xf32>
    %cst_151 = arith.constant dense<0xFF800000> : vector<4x5xf32>
    %376 = vector.multi_reduction <maximumf>, %375, %cst_151 [2] : vector<4x5x5xf32> to vector<4x5xf32>
    %377 = vector.shape_cast %376 : vector<4x5xf32> to vector<4x5x1xf32>
    %378 = vector.broadcast %377 : vector<4x5x1xf32> to vector<4x5x5xf32>
    %379 = arith.subf %375, %378 : vector<4x5x5xf32>
    %380 = math.exp %379 : vector<4x5x5xf32>
    %cst_152 = arith.constant dense<0.000000e+00> : vector<4x5xf32>
    %381 = vector.multi_reduction <add>, %380, %cst_152 [2] : vector<4x5x5xf32> to vector<4x5xf32>
    %382 = vector.shape_cast %381 : vector<4x5xf32> to vector<4x5x1xf32>
    %383 = tpu.reciprocal %382 {approx = true} : vector<4x5x1xf32> -> vector<4x5x1xf32>
    %384 = vector.broadcast %383 : vector<4x5x1xf32> to vector<4x5x5xf32>
    %385 = arith.mulf %380, %384 : vector<4x5x5xf32>
    %cst_153 = arith.constant dense<0.000000e+00> : vector<5x5xf32>
    %386 = vector.multi_reduction <add>, %385, %cst_153 [0] : vector<4x5x5xf32> to vector<5x5xf32>
    %cst_154 = arith.constant 4.000000e+00 : f32
    %387 = vector.broadcast %cst_154 : f32 to vector<5x5xf32>
    %388 = arith.divf %386, %387 : vector<5x5xf32>
    "tpu.trace_start"() <{level = 10 : i32, message = "hqk,hkd->hqd"}> : () -> ()
    %cst_155 = arith.constant dense<0.000000e+00> : vector<4x5x8xf32>
    %389 = tpu.matmul %385, %372, %cst_155 {dimension_numbers = #tpu.dot_dimension_numbers<[2], [1], [1], [2], [0, 0, 0, 1, 1, 2], [0], [0]>} : vector<4x5x5xf32>, vector<4x5x8xf32>, vector<4x5x8xf32> -> vector<4x5x8xf32>
    "tpu.trace_stop"() : () -> ()
    %390 = vector.extract_strided_slice %389 {offsets = [0, 0, 0], sizes = [1, 5, 8], strides = [1, 1, 1]} : vector<4x5x8xf32> to vector<1x5x8xf32>
    %391 = vector.shape_cast %390 : vector<1x5x8xf32> to vector<5x8xf32>
    %392 = vector.extract_strided_slice %389 {offsets = [1, 0, 0], sizes = [1, 5, 8], strides = [1, 1, 1]} : vector<4x5x8xf32> to vector<1x5x8xf32>
    %393 = vector.shape_cast %392 : vector<1x5x8xf32> to vector<5x8xf32>
    %394 = vector.extract_strided_slice %389 {offsets = [2, 0, 0], sizes = [1, 5, 8], strides = [1, 1, 1]} : vector<4x5x8xf32> to vector<1x5x8xf32>
    %395 = vector.shape_cast %394 : vector<1x5x8xf32> to vector<5x8xf32>
    %396 = vector.extract_strided_slice %389 {offsets = [3, 0, 0], sizes = [1, 5, 8], strides = [1, 1, 1]} : vector<4x5x8xf32> to vector<1x5x8xf32>
    %397 = vector.shape_cast %396 : vector<1x5x8xf32> to vector<5x8xf32>
    %398 = tpu.concatenate %391, %393, %395, %397 in 1 : vector<5x8xf32>, vector<5x8xf32>, vector<5x8xf32>, vector<5x8xf32> -> vector<5x32xf32>
    %c0_156 = arith.constant 0 : index
    %c0_157 = arith.constant 0 : index
    %c0_158 = arith.constant 0 : index
    %399 = vector.load %arg9[%c0_156, %c0_157, %c0_158] : memref<2x32x32xf32, #tpu.memory_space<vmem>>, vector<1x32x32xf32>
    %400 = vector.shape_cast %399 : vector<1x32x32xf32> to vector<32x32xf32>
    %cst_159 = arith.constant dense<0.000000e+00> : vector<5x32xf32>
    %401 = tpu.matmul %398, %400, %cst_159 {dimension_numbers = #tpu.dot_dimension_numbers<[1], [0], [0], [1], [0, 0, 1, 1], [], []>} : vector<5x32xf32>, vector<32x32xf32>, vector<5x32xf32> -> vector<5x32xf32>
    %c0_160 = arith.constant 0 : index
    %c0_161 = arith.constant 0 : index
    %c0_162 = arith.constant 0 : index
    %402 = vector.load %arg10[%c0_160, %c0_161, %c0_162] : memref<2x1x32xf32, #tpu.memory_space<vmem>>, vector<1x1x32xf32>
    %403 = vector.shape_cast %402 : vector<1x1x32xf32> to vector<1x32xf32>
    %404 = vector.broadcast %403 : vector<1x32xf32> to vector<5x32xf32>
    %405 = arith.addf %401, %404 : vector<5x32xf32>
    %406 = arith.addf %312, %405 : vector<5x32xf32>
    %c0_163 = arith.constant 0 : index
    %c0_164 = arith.constant 0 : index
    %c0_165 = arith.constant 0 : index
    %407 = vector.load %arg11[%c0_163, %c0_164, %c0_165] : memref<2x1x32xf32, #tpu.memory_space<vmem>>, vector<1x1x32xf32>
    %408 = vector.shape_cast %407 : vector<1x1x32xf32> to vector<1x32xf32>
    %c0_166 = arith.constant 0 : index
    %c0_167 = arith.constant 0 : index
    %c0_168 = arith.constant 0 : index
    %409 = vector.load %arg12[%c0_166, %c0_167, %c0_168] : memref<2x1x32xf32, #tpu.memory_space<vmem>>, vector<1x1x32xf32>
    %410 = vector.shape_cast %409 : vector<1x1x32xf32> to vector<1x32xf32>
    %cst_169 = arith.constant dense<0.000000e+00> : vector<5xf32>
    %411 = vector.multi_reduction <add>, %406, %cst_169 [1] : vector<5x32xf32> to vector<5xf32>
    %412 = vector.shape_cast %411 : vector<5xf32> to vector<5x1xf32>
    %cst_170 = arith.constant 3.200000e+01 : f32
    %413 = vector.broadcast %cst_170 : f32 to vector<5x1xf32>
    %414 = arith.divf %412, %413 : vector<5x1xf32>
    %415 = vector.broadcast %414 : vector<5x1xf32> to vector<5x32xf32>
    %416 = arith.subf %406, %415 : vector<5x32xf32>
    %417 = arith.mulf %416, %416 : vector<5x32xf32>
    %cst_171 = arith.constant dense<0.000000e+00> : vector<5xf32>
    %418 = vector.multi_reduction <add>, %417, %cst_171 [1] : vector<5x32xf32> to vector<5xf32>
    %419 = vector.shape_cast %418 : vector<5xf32> to vector<5x1xf32>
    %cst_172 = arith.constant 3.200000e+01 : f32
    %420 = vector.broadcast %cst_172 : f32 to vector<5x1xf32>
    %421 = arith.divf %419, %420 : vector<5x1xf32>
    %422 = vector.broadcast %414 : vector<5x1xf32> to vector<5x32xf32>
    %423 = arith.subf %406, %422 : vector<5x32xf32>
    %cst_173 = arith.constant 9.99999974E-6 : f32
    %424 = vector.broadcast %cst_173 : f32 to vector<5x1xf32>
    %425 = arith.addf %421, %424 : vector<5x1xf32>
    %426 = math.rsqrt %425 : vector<5x1xf32>
    %427 = vector.broadcast %426 : vector<5x1xf32> to vector<5x32xf32>
    %428 = arith.mulf %423, %427 : vector<5x32xf32>
    %429 = vector.broadcast %408 : vector<1x32xf32> to vector<5x32xf32>
    %430 = arith.mulf %428, %429 : vector<5x32xf32>
    %431 = vector.broadcast %410 : vector<1x32xf32> to vector<5x32xf32>
    %432 = arith.addf %430, %431 : vector<5x32xf32>
    %c0_174 = arith.constant 0 : index
    %c0_175 = arith.constant 0 : index
    %c0_176 = arith.constant 0 : index
    %433 = vector.load %arg13[%c0_174, %c0_175, %c0_176] : memref<2x32x64xf32, #tpu.memory_space<vmem>>, vector<1x32x64xf32>
    %434 = vector.shape_cast %433 : vector<1x32x64xf32> to vector<32x64xf32>
    %cst_177 = arith.constant dense<0.000000e+00> : vector<5x64xf32>
    %435 = tpu.matmul %432, %434, %cst_177 {dimension_numbers = #tpu.dot_dimension_numbers<[1], [0], [0], [1], [0, 0, 1, 1], [], []>} : vector<5x32xf32>, vector<32x64xf32>, vector<5x64xf32> -> vector<5x64xf32>
    %c0_178 = arith.constant 0 : index
    %c0_179 = arith.constant 0 : index
    %c0_180 = arith.constant 0 : index
    %436 = vector.load %arg14[%c0_178, %c0_179, %c0_180] : memref<2x1x64xf32, #tpu.memory_space<vmem>>, vector<1x1x64xf32>
    %437 = vector.shape_cast %436 : vector<1x1x64xf32> to vector<1x64xf32>
    %438 = vector.broadcast %437 : vector<1x64xf32> to vector<5x64xf32>
    %439 = arith.addf %435, %438 : vector<5x64xf32>
    %cst_181 = arith.constant 5.000000e-01 : f32
    %440 = vector.broadcast %cst_181 : f32 to vector<5x64xf32>
    %441 = arith.mulf %440, %439 : vector<5x64xf32>
    %cst_182 = arith.constant 0.707106769 : f32
    %442 = vector.broadcast %cst_182 : f32 to vector<5x64xf32>
    %443 = arith.mulf %439, %442 : vector<5x64xf32>
    %444 = math.erf %443 : vector<5x64xf32>
    %cst_183 = arith.constant 1.000000e+00 : f32
    %445 = vector.broadcast %cst_183 : f32 to vector<5x64xf32>
    %446 = arith.addf %445, %444 : vector<5x64xf32>
    %447 = arith.mulf %441, %446 : vector<5x64xf32>
    %c0_184 = arith.constant 0 : index
    %c0_185 = arith.constant 0 : index
    %c0_186 = arith.constant 0 : index
    %448 = vector.load %arg15[%c0_184, %c0_185, %c0_186] : memref<2x64x32xf32, #tpu.memory_space<vmem>>, vector<1x64x32xf32>
    %449 = vector.shape_cast %448 : vector<1x64x32xf32> to vector<64x32xf32>
    %cst_187 = arith.constant dense<0.000000e+00> : vector<5x32xf32>
    %450 = tpu.matmul %447, %449, %cst_187 {dimension_numbers = #tpu.dot_dimension_numbers<[1], [0], [0], [1], [0, 0, 1, 1], [], []>} : vector<5x64xf32>, vector<64x32xf32>, vector<5x32xf32> -> vector<5x32xf32>
    %c0_188 = arith.constant 0 : index
    %c0_189 = arith.constant 0 : index
    %c0_190 = arith.constant 0 : index
    %451 = vector.load %arg16[%c0_188, %c0_189, %c0_190] : memref<2x1x32xf32, #tpu.memory_space<vmem>>, vector<1x1x32xf32>
    %452 = vector.shape_cast %451 : vector<1x1x32xf32> to vector<1x32xf32>
    %453 = vector.broadcast %452 : vector<1x32xf32> to vector<5x32xf32>
    %454 = arith.addf %450, %453 : vector<5x32xf32>
    %455 = arith.addf %406, %454 : vector<5x32xf32>
    %c1_191 = arith.constant 1 : index
    %c0_192 = arith.constant 0 : index
    %c0_193 = arith.constant 0 : index
    %456 = vector.load %arg5[%c1_191, %c0_192, %c0_193] : memref<2x1x32xf32, #tpu.memory_space<vmem>>, vector<1x1x32xf32>
    %457 = vector.shape_cast %456 : vector<1x1x32xf32> to vector<1x32xf32>
    %c1_194 = arith.constant 1 : index
    %c0_195 = arith.constant 0 : index
    %c0_196 = arith.constant 0 : index
    %458 = vector.load %arg6[%c1_194, %c0_195, %c0_196] : memref<2x1x32xf32, #tpu.memory_space<vmem>>, vector<1x1x32xf32>
    %459 = vector.shape_cast %458 : vector<1x1x32xf32> to vector<1x32xf32>
    %cst_197 = arith.constant dense<0.000000e+00> : vector<5xf32>
    %460 = vector.multi_reduction <add>, %455, %cst_197 [1] : vector<5x32xf32> to vector<5xf32>
    %461 = vector.shape_cast %460 : vector<5xf32> to vector<5x1xf32>
    %cst_198 = arith.constant 3.200000e+01 : f32
    %462 = vector.broadcast %cst_198 : f32 to vector<5x1xf32>
    %463 = arith.divf %461, %462 : vector<5x1xf32>
    %464 = vector.broadcast %463 : vector<5x1xf32> to vector<5x32xf32>
    %465 = arith.subf %455, %464 : vector<5x32xf32>
    %466 = arith.mulf %465, %465 : vector<5x32xf32>
    %cst_199 = arith.constant dense<0.000000e+00> : vector<5xf32>
    %467 = vector.multi_reduction <add>, %466, %cst_199 [1] : vector<5x32xf32> to vector<5xf32>
    %468 = vector.shape_cast %467 : vector<5xf32> to vector<5x1xf32>
    %cst_200 = arith.constant 3.200000e+01 : f32
    %469 = vector.broadcast %cst_200 : f32 to vector<5x1xf32>
    %470 = arith.divf %468, %469 : vector<5x1xf32>
    %471 = vector.broadcast %463 : vector<5x1xf32> to vector<5x32xf32>
    %472 = arith.subf %455, %471 : vector<5x32xf32>
    %cst_201 = arith.constant 9.99999974E-6 : f32
    %473 = vector.broadcast %cst_201 : f32 to vector<5x1xf32>
    %474 = arith.addf %470, %473 : vector<5x1xf32>
    %475 = math.rsqrt %474 : vector<5x1xf32>
    %476 = vector.broadcast %475 : vector<5x1xf32> to vector<5x32xf32>
    %477 = arith.mulf %472, %476 : vector<5x32xf32>
    %478 = vector.broadcast %457 : vector<1x32xf32> to vector<5x32xf32>
    %479 = arith.mulf %477, %478 : vector<5x32xf32>
    %480 = vector.broadcast %459 : vector<1x32xf32> to vector<5x32xf32>
    %481 = arith.addf %479, %480 : vector<5x32xf32>
    %c1_202 = arith.constant 1 : index
    %c0_203 = arith.constant 0 : index
    %c0_204 = arith.constant 0 : index
    %482 = vector.load %arg7[%c1_202, %c0_203, %c0_204] : memref<2x32x96xf32, #tpu.memory_space<vmem>>, vector<1x32x96xf32>
    %483 = vector.shape_cast %482 : vector<1x32x96xf32> to vector<32x96xf32>
    %cst_205 = arith.constant dense<0.000000e+00> : vector<5x96xf32>
    %484 = tpu.matmul %481, %483, %cst_205 {dimension_numbers = #tpu.dot_dimension_numbers<[1], [0], [0], [1], [0, 0, 1, 1], [], []>} : vector<5x32xf32>, vector<32x96xf32>, vector<5x96xf32> -> vector<5x96xf32>
    %c1_206 = arith.constant 1 : index
    %c0_207 = arith.constant 0 : index
    %c0_208 = arith.constant 0 : index
    %485 = vector.load %arg8[%c1_206, %c0_207, %c0_208] : memref<2x1x96xf32, #tpu.memory_space<vmem>>, vector<1x1x96xf32>
    %486 = vector.shape_cast %485 : vector<1x1x96xf32> to vector<1x96xf32>
    %487 = vector.broadcast %486 : vector<1x96xf32> to vector<5x96xf32>
    %488 = arith.addf %484, %487 : vector<5x96xf32>
    %489 = vector.extract_strided_slice %488 {offsets = [0, 0], sizes = [5, 8], strides = [1, 1]} : vector<5x96xf32> to vector<5x8xf32>
    %490 = vector.shape_cast %489 : vector<5x8xf32> to vector<1x5x8xf32>
    %491 = vector.extract_strided_slice %488 {offsets = [0, 8], sizes = [5, 8], strides = [1, 1]} : vector<5x96xf32> to vector<5x8xf32>
    %492 = vector.shape_cast %491 : vector<5x8xf32> to vector<1x5x8xf32>
    %493 = vector.extract_strided_slice %488 {offsets = [0, 16], sizes = [5, 8], strides = [1, 1]} : vector<5x96xf32> to vector<5x8xf32>
    %494 = vector.shape_cast %493 : vector<5x8xf32> to vector<1x5x8xf32>
    %495 = vector.extract_strided_slice %488 {offsets = [0, 24], sizes = [5, 8], strides = [1, 1]} : vector<5x96xf32> to vector<5x8xf32>
    %496 = vector.shape_cast %495 : vector<5x8xf32> to vector<1x5x8xf32>
    %497 = tpu.concatenate %490, %492, %494, %496 in 0 : vector<1x5x8xf32>, vector<1x5x8xf32>, vector<1x5x8xf32>, vector<1x5x8xf32> -> vector<4x5x8xf32>
    %498 = vector.extract_strided_slice %488 {offsets = [0, 32], sizes = [5, 8], strides = [1, 1]} : vector<5x96xf32> to vector<5x8xf32>
    %499 = vector.shape_cast %498 : vector<5x8xf32> to vector<1x5x8xf32>
    %500 = vector.extract_strided_slice %488 {offsets = [0, 40], sizes = [5, 8], strides = [1, 1]} : vector<5x96xf32> to vector<5x8xf32>
    %501 = vector.shape_cast %500 : vector<5x8xf32> to vector<1x5x8xf32>
    %502 = vector.extract_strided_slice %488 {offsets = [0, 48], sizes = [5, 8], strides = [1, 1]} : vector<5x96xf32> to vector<5x8xf32>
    %503 = vector.shape_cast %502 : vector<5x8xf32> to vector<1x5x8xf32>
    %504 = vector.extract_strided_slice %488 {offsets = [0, 56], sizes = [5, 8], strides = [1, 1]} : vector<5x96xf32> to vector<5x8xf32>
    %505 = vector.shape_cast %504 : vector<5x8xf32> to vector<1x5x8xf32>
    %506 = tpu.concatenate %499, %501, %503, %505 in 0 : vector<1x5x8xf32>, vector<1x5x8xf32>, vector<1x5x8xf32>, vector<1x5x8xf32> -> vector<4x5x8xf32>
    %507 = vector.extract_strided_slice %488 {offsets = [0, 64], sizes = [5, 8], strides = [1, 1]} : vector<5x96xf32> to vector<5x8xf32>
    %508 = vector.shape_cast %507 : vector<5x8xf32> to vector<1x5x8xf32>
    %509 = vector.extract_strided_slice %488 {offsets = [0, 72], sizes = [5, 8], strides = [1, 1]} : vector<5x96xf32> to vector<5x8xf32>
    %510 = vector.shape_cast %509 : vector<5x8xf32> to vector<1x5x8xf32>
    %511 = vector.extract_strided_slice %488 {offsets = [0, 80], sizes = [5, 8], strides = [1, 1]} : vector<5x96xf32> to vector<5x8xf32>
    %512 = vector.shape_cast %511 : vector<5x8xf32> to vector<1x5x8xf32>
    %513 = vector.extract_strided_slice %488 {offsets = [0, 88], sizes = [5, 8], strides = [1, 1]} : vector<5x96xf32> to vector<5x8xf32>
    %514 = vector.shape_cast %513 : vector<5x8xf32> to vector<1x5x8xf32>
    %515 = tpu.concatenate %508, %510, %512, %514 in 0 : vector<1x5x8xf32>, vector<1x5x8xf32>, vector<1x5x8xf32>, vector<1x5x8xf32> -> vector<4x5x8xf32>
    "tpu.trace_start"() <{level = 10 : i32, message = "hqd,hkd->hqk"}> : () -> ()
    %cst_209 = arith.constant dense<0.000000e+00> : vector<4x5x5xf32>
    %516 = tpu.matmul %497, %506, %cst_209 {dimension_numbers = #tpu.dot_dimension_numbers<[2], [2], [1], [1], [0, 0, 0, 1, 1, 1], [0], [0]>} : vector<4x5x8xf32>, vector<4x5x8xf32>, vector<4x5x5xf32> -> vector<4x5x5xf32>
    "tpu.trace_stop"() : () -> ()
    %cst_210 = arith.constant 0.353553385 : f32
    %517 = vector.broadcast %cst_210 : f32 to vector<4x5x5xf32>
    %518 = arith.mulf %516, %517 : vector<4x5x5xf32>
    %cst_211 = arith.constant dense<0xFF800000> : vector<4x5xf32>
    %519 = vector.multi_reduction <maximumf>, %518, %cst_211 [2] : vector<4x5x5xf32> to vector<4x5xf32>
    %520 = vector.shape_cast %519 : vector<4x5xf32> to vector<4x5x1xf32>
    %521 = vector.broadcast %520 : vector<4x5x1xf32> to vector<4x5x5xf32>
    %522 = arith.subf %518, %521 : vector<4x5x5xf32>
    %523 = math.exp %522 : vector<4x5x5xf32>
    %cst_212 = arith.constant dense<0.000000e+00> : vector<4x5xf32>
    %524 = vector.multi_reduction <add>, %523, %cst_212 [2] : vector<4x5x5xf32> to vector<4x5xf32>
    %525 = vector.shape_cast %524 : vector<4x5xf32> to vector<4x5x1xf32>
    %526 = tpu.reciprocal %525 {approx = true} : vector<4x5x1xf32> -> vector<4x5x1xf32>
    %527 = vector.broadcast %526 : vector<4x5x1xf32> to vector<4x5x5xf32>
    %528 = arith.mulf %523, %527 : vector<4x5x5xf32>
    %cst_213 = arith.constant dense<0.000000e+00> : vector<5x5xf32>
    %529 = vector.multi_reduction <add>, %528, %cst_213 [0] : vector<4x5x5xf32> to vector<5x5xf32>
    %cst_214 = arith.constant 4.000000e+00 : f32
    %530 = vector.broadcast %cst_214 : f32 to vector<5x5xf32>
    %531 = arith.divf %529, %530 : vector<5x5xf32>
    "tpu.trace_start"() <{level = 10 : i32, message = "hqk,hkd->hqd"}> : () -> ()
    %cst_215 = arith.constant dense<0.000000e+00> : vector<4x5x8xf32>
    %532 = tpu.matmul %528, %515, %cst_215 {dimension_numbers = #tpu.dot_dimension_numbers<[2], [1], [1], [2], [0, 0, 0, 1, 1, 2], [0], [0]>} : vector<4x5x5xf32>, vector<4x5x8xf32>, vector<4x5x8xf32> -> vector<4x5x8xf32>
    "tpu.trace_stop"() : () -> ()
    %533 = vector.extract_strided_slice %532 {offsets = [0, 0, 0], sizes = [1, 5, 8], strides = [1, 1, 1]} : vector<4x5x8xf32> to vector<1x5x8xf32>
    %534 = vector.shape_cast %533 : vector<1x5x8xf32> to vector<5x8xf32>
    %535 = vector.extract_strided_slice %532 {offsets = [1, 0, 0], sizes = [1, 5, 8], strides = [1, 1, 1]} : vector<4x5x8xf32> to vector<1x5x8xf32>
    %536 = vector.shape_cast %535 : vector<1x5x8xf32> to vector<5x8xf32>
    %537 = vector.extract_strided_slice %532 {offsets = [2, 0, 0], sizes = [1, 5, 8], strides = [1, 1, 1]} : vector<4x5x8xf32> to vector<1x5x8xf32>
    %538 = vector.shape_cast %537 : vector<1x5x8xf32> to vector<5x8xf32>
    %539 = vector.extract_strided_slice %532 {offsets = [3, 0, 0], sizes = [1, 5, 8], strides = [1, 1, 1]} : vector<4x5x8xf32> to vector<1x5x8xf32>
    %540 = vector.shape_cast %539 : vector<1x5x8xf32> to vector<5x8xf32>
    %541 = tpu.concatenate %534, %536, %538, %540 in 1 : vector<5x8xf32>, vector<5x8xf32>, vector<5x8xf32>, vector<5x8xf32> -> vector<5x32xf32>
    %c1_216 = arith.constant 1 : index
    %c0_217 = arith.constant 0 : index
    %c0_218 = arith.constant 0 : index
    %542 = vector.load %arg9[%c1_216, %c0_217, %c0_218] : memref<2x32x32xf32, #tpu.memory_space<vmem>>, vector<1x32x32xf32>
    %543 = vector.shape_cast %542 : vector<1x32x32xf32> to vector<32x32xf32>
    %cst_219 = arith.constant dense<0.000000e+00> : vector<5x32xf32>
    %544 = tpu.matmul %541, %543, %cst_219 {dimension_numbers = #tpu.dot_dimension_numbers<[1], [0], [0], [1], [0, 0, 1, 1], [], []>} : vector<5x32xf32>, vector<32x32xf32>, vector<5x32xf32> -> vector<5x32xf32>
    %c1_220 = arith.constant 1 : index
    %c0_221 = arith.constant 0 : index
    %c0_222 = arith.constant 0 : index
    %545 = vector.load %arg10[%c1_220, %c0_221, %c0_222] : memref<2x1x32xf32, #tpu.memory_space<vmem>>, vector<1x1x32xf32>
    %546 = vector.shape_cast %545 : vector<1x1x32xf32> to vector<1x32xf32>
    %547 = vector.broadcast %546 : vector<1x32xf32> to vector<5x32xf32>
    %548 = arith.addf %544, %547 : vector<5x32xf32>
    %549 = arith.addf %455, %548 : vector<5x32xf32>
    %c1_223 = arith.constant 1 : index
    %c0_224 = arith.constant 0 : index
    %c0_225 = arith.constant 0 : index
    %550 = vector.load %arg11[%c1_223, %c0_224, %c0_225] : memref<2x1x32xf32, #tpu.memory_space<vmem>>, vector<1x1x32xf32>
    %551 = vector.shape_cast %550 : vector<1x1x32xf32> to vector<1x32xf32>
    %c1_226 = arith.constant 1 : index
    %c0_227 = arith.constant 0 : index
    %c0_228 = arith.constant 0 : index
    %552 = vector.load %arg12[%c1_226, %c0_227, %c0_228] : memref<2x1x32xf32, #tpu.memory_space<vmem>>, vector<1x1x32xf32>
    %553 = vector.shape_cast %552 : vector<1x1x32xf32> to vector<1x32xf32>
    %cst_229 = arith.constant dense<0.000000e+00> : vector<5xf32>
    %554 = vector.multi_reduction <add>, %549, %cst_229 [1] : vector<5x32xf32> to vector<5xf32>
    %555 = vector.shape_cast %554 : vector<5xf32> to vector<5x1xf32>
    %cst_230 = arith.constant 3.200000e+01 : f32
    %556 = vector.broadcast %cst_230 : f32 to vector<5x1xf32>
    %557 = arith.divf %555, %556 : vector<5x1xf32>
    %558 = vector.broadcast %557 : vector<5x1xf32> to vector<5x32xf32>
    %559 = arith.subf %549, %558 : vector<5x32xf32>
    %560 = arith.mulf %559, %559 : vector<5x32xf32>
    %cst_231 = arith.constant dense<0.000000e+00> : vector<5xf32>
    %561 = vector.multi_reduction <add>, %560, %cst_231 [1] : vector<5x32xf32> to vector<5xf32>
    %562 = vector.shape_cast %561 : vector<5xf32> to vector<5x1xf32>
    %cst_232 = arith.constant 3.200000e+01 : f32
    %563 = vector.broadcast %cst_232 : f32 to vector<5x1xf32>
    %564 = arith.divf %562, %563 : vector<5x1xf32>
    %565 = vector.broadcast %557 : vector<5x1xf32> to vector<5x32xf32>
    %566 = arith.subf %549, %565 : vector<5x32xf32>
    %cst_233 = arith.constant 9.99999974E-6 : f32
    %567 = vector.broadcast %cst_233 : f32 to vector<5x1xf32>
    %568 = arith.addf %564, %567 : vector<5x1xf32>
    %569 = math.rsqrt %568 : vector<5x1xf32>
    %570 = vector.broadcast %569 : vector<5x1xf32> to vector<5x32xf32>
    %571 = arith.mulf %566, %570 : vector<5x32xf32>
    %572 = vector.broadcast %551 : vector<1x32xf32> to vector<5x32xf32>
    %573 = arith.mulf %571, %572 : vector<5x32xf32>
    %574 = vector.broadcast %553 : vector<1x32xf32> to vector<5x32xf32>
    %575 = arith.addf %573, %574 : vector<5x32xf32>
    %c1_234 = arith.constant 1 : index
    %c0_235 = arith.constant 0 : index
    %c0_236 = arith.constant 0 : index
    %576 = vector.load %arg13[%c1_234, %c0_235, %c0_236] : memref<2x32x64xf32, #tpu.memory_space<vmem>>, vector<1x32x64xf32>
    %577 = vector.shape_cast %576 : vector<1x32x64xf32> to vector<32x64xf32>
    %cst_237 = arith.constant dense<0.000000e+00> : vector<5x64xf32>
    %578 = tpu.matmul %575, %577, %cst_237 {dimension_numbers = #tpu.dot_dimension_numbers<[1], [0], [0], [1], [0, 0, 1, 1], [], []>} : vector<5x32xf32>, vector<32x64xf32>, vector<5x64xf32> -> vector<5x64xf32>
    %c1_238 = arith.constant 1 : index
    %c0_239 = arith.constant 0 : index
    %c0_240 = arith.constant 0 : index
    %579 = vector.load %arg14[%c1_238, %c0_239, %c0_240] : memref<2x1x64xf32, #tpu.memory_space<vmem>>, vector<1x1x64xf32>
    %580 = vector.shape_cast %579 : vector<1x1x64xf32> to vector<1x64xf32>
    %581 = vector.broadcast %580 : vector<1x64xf32> to vector<5x64xf32>
    %582 = arith.addf %578, %581 : vector<5x64xf32>
    %cst_241 = arith.constant 5.000000e-01 : f32
    %583 = vector.broadcast %cst_241 : f32 to vector<5x64xf32>
    %584 = arith.mulf %583, %582 : vector<5x64xf32>
    %cst_242 = arith.constant 0.707106769 : f32
    %585 = vector.broadcast %cst_242 : f32 to vector<5x64xf32>
    %586 = arith.mulf %582, %585 : vector<5x64xf32>
    %587 = math.erf %586 : vector<5x64xf32>
    %cst_243 = arith.constant 1.000000e+00 : f32
    %588 = vector.broadcast %cst_243 : f32 to vector<5x64xf32>
    %589 = arith.addf %588, %587 : vector<5x64xf32>
    %590 = arith.mulf %584, %589 : vector<5x64xf32>
    %c1_244 = arith.constant 1 : index
    %c0_245 = arith.constant 0 : index
    %c0_246 = arith.constant 0 : index
    %591 = vector.load %arg15[%c1_244, %c0_245, %c0_246] : memref<2x64x32xf32, #tpu.memory_space<vmem>>, vector<1x64x32xf32>
    %592 = vector.shape_cast %591 : vector<1x64x32xf32> to vector<64x32xf32>
    %cst_247 = arith.constant dense<0.000000e+00> : vector<5x32xf32>
    %593 = tpu.matmul %590, %592, %cst_247 {dimension_numbers = #tpu.dot_dimension_numbers<[1], [0], [0], [1], [0, 0, 1, 1], [], []>} : vector<5x64xf32>, vector<64x32xf32>, vector<5x32xf32> -> vector<5x32xf32>
    %c1_248 = arith.constant 1 : index
    %c0_249 = arith.constant 0 : index
    %c0_250 = arith.constant 0 : index
    %594 = vector.load %arg16[%c1_248, %c0_249, %c0_250] : memref<2x1x32xf32, #tpu.memory_space<vmem>>, vector<1x1x32xf32>
    %595 = vector.shape_cast %594 : vector<1x1x32xf32> to vector<1x32xf32>
    %596 = vector.broadcast %595 : vector<1x32xf32> to vector<5x32xf32>
    %597 = arith.addf %593, %596 : vector<5x32xf32>
    %598 = arith.addf %549, %597 : vector<5x32xf32>
    %cst_251 = arith.constant 5.000000e-01 : f32
    %599 = vector.broadcast %cst_251 : f32 to vector<5x5xf32>
    %600 = arith.mulf %599, %531 : vector<5x5xf32>
    %cst_252 = arith.constant 5.000000e-01 : f32
    %601 = vector.broadcast %cst_252 : f32 to vector<5x5xf32>
    %602 = arith.mulf %601, %10 : vector<5x5xf32>
    %603 = arith.addf %600, %602 : vector<5x5xf32>
    %cst_253 = arith.constant dense<0.000000e+00> : vector<5x5xf32>
    %604 = tpu.matmul %603, %388, %cst_253 {dimension_numbers = #tpu.dot_dimension_numbers<[1], [0], [0], [1], [0, 0, 1, 1], [], []>} : vector<5x5xf32>, vector<5x5xf32>, vector<5x5xf32> -> vector<5x5xf32>
    %605 = vector.extract_strided_slice %598 {offsets = [0, 0], sizes = [1, 32], strides = [1, 1]} : vector<5x32xf32> to vector<1x32xf32>
    %606 = vector.shape_cast %604 : vector<5x5xf32> to vector<1x5x5xf32>
    %607 = tpu.concatenate %308, %605 in 0 : vector<1x32xf32>, vector<1x32xf32> -> vector<2x32xf32>
    %c0_254 = arith.constant 0 : index
    %c0_255 = arith.constant 0 : index
    %608 = vector.load %arg17[%c0_254, %c0_255] : memref<1x32xf32, #tpu.memory_space<vmem>>, vector<1x32xf32>
    %c0_256 = arith.constant 0 : index
    %c0_257 = arith.constant 0 : index
    %609 = vector.load %arg18[%c0_256, %c0_257] : memref<1x32xf32, #tpu.memory_space<vmem>>, vector<1x32xf32>
    %cst_258 = arith.constant dense<0.000000e+00> : vector<2xf32>
    %610 = vector.multi_reduction <add>, %607, %cst_258 [1] : vector<2x32xf32> to vector<2xf32>
    %611 = vector.shape_cast %610 : vector<2xf32> to vector<2x1xf32>
    %cst_259 = arith.constant 3.200000e+01 : f32
    %612 = vector.broadcast %cst_259 : f32 to vector<2x1xf32>
    %613 = arith.divf %611, %612 : vector<2x1xf32>
    %614 = vector.broadcast %613 : vector<2x1xf32> to vector<2x32xf32>
    %615 = arith.subf %607, %614 : vector<2x32xf32>
    %616 = arith.mulf %615, %615 : vector<2x32xf32>
    %cst_260 = arith.constant dense<0.000000e+00> : vector<2xf32>
    %617 = vector.multi_reduction <add>, %616, %cst_260 [1] : vector<2x32xf32> to vector<2xf32>
    %618 = vector.shape_cast %617 : vector<2xf32> to vector<2x1xf32>
    %cst_261 = arith.constant 3.200000e+01 : f32
    %619 = vector.broadcast %cst_261 : f32 to vector<2x1xf32>
    %620 = arith.divf %618, %619 : vector<2x1xf32>
    %621 = vector.broadcast %613 : vector<2x1xf32> to vector<2x32xf32>
    %622 = arith.subf %607, %621 : vector<2x32xf32>
    %cst_262 = arith.constant 9.99999974E-6 : f32
    %623 = vector.broadcast %cst_262 : f32 to vector<2x1xf32>
    %624 = arith.addf %620, %623 : vector<2x1xf32>
    %625 = math.rsqrt %624 : vector<2x1xf32>
    %626 = vector.broadcast %625 : vector<2x1xf32> to vector<2x32xf32>
    %627 = arith.mulf %622, %626 : vector<2x32xf32>
    %628 = vector.broadcast %608 : vector<1x32xf32> to vector<2x32xf32>
    %629 = arith.mulf %627, %628 : vector<2x32xf32>
    %630 = vector.broadcast %609 : vector<1x32xf32> to vector<2x32xf32>
    %631 = arith.addf %629, %630 : vector<2x32xf32>
    %c0_263 = arith.constant 0 : index
    %c0_264 = arith.constant 0 : index
    %632 = vector.load %arg19[%c0_263, %c0_264] : memref<32x10xf32, #tpu.memory_space<vmem>>, vector<32x10xf32>
    %cst_265 = arith.constant dense<0.000000e+00> : vector<2x10xf32>
    %633 = tpu.matmul %631, %632, %cst_265 {dimension_numbers = #tpu.dot_dimension_numbers<[1], [0], [0], [1], [0, 0, 1, 1], [], []>} : vector<2x32xf32>, vector<32x10xf32>, vector<2x10xf32> -> vector<2x10xf32>
    %c0_266 = arith.constant 0 : index
    %c0_267 = arith.constant 0 : index
    %634 = vector.load %arg20[%c0_266, %c0_267] : memref<1x10xf32, #tpu.memory_space<vmem>>, vector<1x10xf32>
    %635 = vector.broadcast %634 : vector<1x10xf32> to vector<2x10xf32>
    %636 = arith.addf %633, %635 : vector<2x10xf32>
    %c0_268 = arith.constant 0 : index
    %c0_269 = arith.constant 0 : index
    %637 = vector.load %arg21[%c0_268, %c0_269] : memref<2x10xf32, #tpu.memory_space<vmem>>, vector<2x10xf32>
    tpu.vector_store %arg21[%c0_268, %c0_269], %636 {strides = array<i32>} : memref<2x10xf32, #tpu.memory_space<vmem>>, vector<2x10xf32>,
    %638 = tpu.concatenate %309, %606 in 0 : vector<1x5x5xf32>, vector<1x5x5xf32> -> vector<2x5x5xf32>
    %c0_270 = arith.constant 0 : index
    %c0_271 = arith.constant 0 : index
    %c0_272 = arith.constant 0 : index
    %639 = vector.load %arg22[%c0_270, %c0_271, %c0_272] : memref<2x5x5xf32, #tpu.memory_space<vmem>>, vector<2x5x5xf32>
    tpu.vector_store %arg22[%c0_270, %c0_271, %c0_272], %638 {strides = array<i32>} : memref<2x5x5xf32, #tpu.memory_space<vmem>>, vector<2x5x5xf32>,
    return
  }
}

</mosaic_0001>

<llo_original>
// kernel: vit_forward.1
$region0: #{vit_forward.1}
  #allocation0 [shape = 'u32[]', space=smem, size = 0x4, offset = 0x4, fixed_abs, tag = 'smem constant byte address 0x4 - core index']
  #allocation1 [shape = 'u32[144,128]{1,0:T(1,128)}', space=vmem, size = 0x12000, scoped, tag = 'internal scratch']
  %s0 = inlined_call_operand.vmem [shape: f32[8,256], index: 0, kind: input, shape index: {}]
  %s1 = inlined_call_operand.vmem [shape: f32[256,32], index: 1, kind: input, shape index: {}]
  %s2 = inlined_call_operand.vmem [shape: f32[1,32], index: 2, kind: input, shape index: {}]
  %s3 = inlined_call_operand.vmem [shape: f32[1,32], index: 3, kind: input, shape index: {}]
  %s4 = inlined_call_operand.vmem [shape: f32[5,32], index: 4, kind: input, shape index: {}]
  %s5 = inlined_call_operand.vmem [shape: f32[2,1,32], index: 5, kind: input, shape index: {}]
  %s6 = inlined_call_operand.vmem [shape: f32[2,1,32], index: 6, kind: input, shape index: {}]
  %s7 = inlined_call_operand.vmem [shape: f32[2,32,96], index: 7, kind: input, shape index: {}]
  %s8 = inlined_call_operand.vmem [shape: f32[2,1,96], index: 8, kind: input, shape index: {}]
  %s9 = inlined_call_operand.vmem [shape: f32[2,32,32], index: 9, kind: input, shape index: {}]
  %s10 = inlined_call_operand.vmem [shape: f32[2,1,32], index: 10, kind: input, shape index: {}]
  %s11 = inlined_call_operand.vmem [shape: f32[2,1,32], index: 11, kind: input, shape index: {}]
  %s12 = inlined_call_operand.vmem [shape: f32[2,1,32], index: 12, kind: input, shape index: {}]
  %s13 = inlined_call_operand.vmem [shape: f32[2,32,64], index: 13, kind: input, shape index: {}]
  %s14 = inlined_call_operand.vmem [shape: f32[2,1,64], index: 14, kind: input, shape index: {}]
  %s15 = inlined_call_operand.vmem [shape: f32[2,64,32], index: 15, kind: input, shape index: {}]
  %s16 = inlined_call_operand.vmem [shape: f32[2,1,32], index: 16, kind: input, shape index: {}]
  %s17 = inlined_call_operand.vmem [shape: f32[1,32], index: 17, kind: input, shape index: {}]
  %s18 = inlined_call_operand.vmem [shape: f32[1,32], index: 18, kind: input, shape index: {}]
  %s19 = inlined_call_operand.vmem [shape: f32[32,10], index: 19, kind: input, shape index: {}]
  %s20 = inlined_call_operand.vmem [shape: f32[1,10], index: 20, kind: input, shape index: {}]
  %s21 = inlined_call_operand.hbm [shape: f32[2,10], index: 21, kind: output, shape index: {0}]
  %s22 = inlined_call_operand.vmem [shape: f32[2,5,5], index: 22, kind: output, shape index: {1}]
  %23 = xla_tuple %s21, %s22
  %s24 = sld [smem:[#allocation0]]
  $region102: #{vit_forward.1} parent=0
    _
  %s26 = ssub.s32 1, %s24
  %s27 = scalar_select 0, %s26, %s24
  $region1: #{vit_forward.1} parent=0
    #allocation2 [shape = 'u8[1024]{0}', space=vmem, size = 0x400, scoped, tag = 'output window, operand 0, single buffered']
    #allocation3 [shape = 's32[1]{0}', space=sflag, size = 0x4, scoped, tag = 'scoped memory for vit_forward.1']
    %28 = vsyncpa [#allocation3], 0
    // Predicated region
    $region2: #{vit_forward.1} parent=1 // pred_check
      _
    $region3: #{vit_forward.1} parent=1 // pred_check_branch
      %30 = sbr.rel (0) target = $region5
    $region4: #{vit_forward.1} parent=1 // pred_region
      _
    $region5: #{vit_forward.1} parent=1 // pred_fallthru
      _
    // Predicated region
    $region6: #{vit_forward.1} parent=1 // pred_check
      _
    $region7: #{vit_forward.1} parent=1 // pred_check_branch
      %32 = sbr.rel (0) target = $region9
    $region8: #{vit_forward.1} parent=1 // pred_region
      _
    $region9: #{vit_forward.1} parent=1 // pred_fallthru
      _
    // Predicated region
    $region10: #{vit_forward.1} parent=1 // pred_check
      _
    $region11: #{vit_forward.1} parent=1 // pred_check_branch
      %34 = sbr.rel (0) target = $region13
    $region12: #{vit_forward.1} parent=1 // pred_region
      _
    $region13: #{vit_forward.1} parent=1 // pred_fallthru
      _
    // Predicated region
    $region14: #{vit_forward.1} parent=1 // pred_check
      _
    $region15: #{vit_forward.1} parent=1 // pred_check_branch
      %36 = sbr.rel (0) target = $region17
    $region16: #{vit_forward.1} parent=1 // pred_region
      _
    $region17: #{vit_forward.1} parent=1 // pred_fallthru
      _
    // Predicated region
    $region18: #{vit_forward.1} parent=1 // pred_check
      _
    $region19: #{vit_forward.1} parent=1 // pred_check_branch
      %38 = sbr.rel (0) target = $region21
    $region20: #{vit_forward.1} parent=1 // pred_region
      _
    $region21: #{vit_forward.1} parent=1 // pred_fallthru
      _
    // Predicated region
    $region22: #{vit_forward.1} parent=1 // pred_check
      _
    $region23: #{vit_forward.1} parent=1 // pred_check_branch
      %40 = sbr.rel (0) target = $region25
    $region24: #{vit_forward.1} parent=1 // pred_region
      _
    $region25: #{vit_forward.1} parent=1 // pred_fallthru
      _
    // Predicated region
    $region26: #{vit_forward.1} parent=1 // pred_check
      _
    $region27: #{vit_forward.1} parent=1 // pred_check_branch
      %42 = sbr.rel (0) target = $region29
    $region28: #{vit_forward.1} parent=1 // pred_region
      _
    $region29: #{vit_forward.1} parent=1 // pred_fallthru
      _
    // Predicated region
    $region30: #{vit_forward.1} parent=1 // pred_check
      _
    $region31: #{vit_forward.1} parent=1 // pred_check_branch
      %44 = sbr.rel (0) target = $region33
    $region32: #{vit_forward.1} parent=1 // pred_region
      _
    $region33: #{vit_forward.1} parent=1 // pred_fallthru
      _
    // Predicated region
    $region34: #{vit_forward.1} parent=1 // pred_check
      _
    $region35: #{vit_forward.1} parent=1 // pred_check_branch
      %46 = sbr.rel (0) target = $region37
    $region36: #{vit_forward.1} parent=1 // pred_region
      _
    $region37: #{vit_forward.1} parent=1 // pred_fallthru
      _
    // Predicated region
    $region38: #{vit_forward.1} parent=1 // pred_check
      _
    $region39: #{vit_forward.1} parent=1 // pred_check_branch
      %48 = sbr.rel (0) target = $region41
    $region40: #{vit_forward.1} parent=1 // pred_region
      _
    $region41: #{vit_forward.1} parent=1 // pred_fallthru
      _
    // Predicated region
    $region42: #{vit_forward.1} parent=1 // pred_check
      _
    $region43: #{vit_forward.1} parent=1 // pred_check_branch
      %50 = sbr.rel (0) target = $region45
    $region44: #{vit_forward.1} parent=1 // pred_region
      _
    $region45: #{vit_forward.1} parent=1 // pred_fallthru
      _
    // Predicated region
    $region46: #{vit_forward.1} parent=1 // pred_check
      _
    $region47: #{vit_forward.1} parent=1 // pred_check_branch
      %52 = sbr.rel (0) target = $region49
    $region48: #{vit_forward.1} parent=1 // pred_region
      _
    $region49: #{vit_forward.1} parent=1 // pred_fallthru
      _
    // Predicated region
    $region50: #{vit_forward.1} parent=1 // pred_check
      _
    $region51: #{vit_forward.1} parent=1 // pred_check_branch
      %54 = sbr.rel (0) target = $region53
    $region52: #{vit_forward.1} parent=1 // pred_region
      _
    $region53: #{vit_forward.1} parent=1 // pred_fallthru
      _
    // Predicated region
    $region54: #{vit_forward.1} parent=1 // pred_check
      _
    $region55: #{vit_forward.1} parent=1 // pred_check_branch
      %56 = sbr.rel (0) target = $region57
    $region56: #{vit_forward.1} parent=1 // pred_region
      _
    $region57: #{vit_forward.1} parent=1 // pred_fallthru
      _
    // Predicated region
    $region58: #{vit_forward.1} parent=1 // pred_check
      _
    $region59: #{vit_forward.1} parent=1 // pred_check_branch
      %58 = sbr.rel (0) target = $region61
    $region60: #{vit_forward.1} parent=1 // pred_region
      _
    $region61: #{vit_forward.1} parent=1 // pred_fallthru
      _
    // Predicated region
    $region62: #{vit_forward.1} parent=1 // pred_check
      _
    $region63: #{vit_forward.1} parent=1 // pred_check_branch
      %60 = sbr.rel (0) target = $region65
    $region64: #{vit_forward.1} parent=1 // pred_region
      _
    $region65: #{vit_forward.1} parent=1 // pred_fallthru
      _
    // Predicated region
    $region66: #{vit_forward.1} parent=1 // pred_check
      _
    $region67: #{vit_forward.1} parent=1 // pred_check_branch
      %62 = sbr.rel (0) target = $region69
    $region68: #{vit_forward.1} parent=1 // pred_region
      _
    $region69: #{vit_forward.1} parent=1 // pred_fallthru
      _
    // Predicated region
    $region70: #{vit_forward.1} parent=1 // pred_check
      _
    $region71: #{vit_forward.1} parent=1 // pred_check_branch
      %64 = sbr.rel (0) target = $region73
    $region72: #{vit_forward.1} parent=1 // pred_region
      _
    $region73: #{vit_forward.1} parent=1 // pred_fallthru
      _
    // Predicated region
    $region74: #{vit_forward.1} parent=1 // pred_check
      _
    $region75: #{vit_forward.1} parent=1 // pred_check_branch
      %66 = sbr.rel (0) target = $region77
    $region76: #{vit_forward.1} parent=1 // pred_region
      _
    $region77: #{vit_forward.1} parent=1 // pred_fallthru
      _
    // Predicated region
    $region78: #{vit_forward.1} parent=1 // pred_check
      _
    $region79: #{vit_forward.1} parent=1 // pred_check_branch
      %68 = sbr.rel (0) target = $region81
    $region80: #{vit_forward.1} parent=1 // pred_region
      _
    $region81: #{vit_forward.1} parent=1 // pred_fallthru
      _
    // Predicated region
    $region82: #{vit_forward.1} parent=1 // pred_check
      _
    $region83: #{vit_forward.1} parent=1 // pred_check_branch
      %70 = sbr.rel (0) target = $region85
    $region84: #{vit_forward.1} parent=1 // pred_region
      _
    $region85: #{vit_forward.1} parent=1 // pred_fallthru
      _
    %v71 = vld [vmem:[%s0] sm:$0xff]
    %v72 = vld [vmem:[%s0 + $0x8] sm:$0xff]
    %v73 = vld [vmem:[%s1] sm:$0xff]
    %v74 = vld [vmem:[%s1 + $0x8] sm:$0xff]
    %v75 = vld [vmem:[%s1 + $0x10] sm:$0xff]
    %v76 = vld [vmem:[%s1 + $0x18] sm:$0xff]
    %v77 = vld [vmem:[%s1 + $0x20] sm:$0xff]
    %v78 = vld [vmem:[%s1 + $0x28] sm:$0xff]
    %v79 = vld [vmem:[%s1 + $0x30] sm:$0xff]
    %v80 = vld [vmem:[%s1 + $0x38] sm:$0xff]
    %v81 = vld [vmem:[%s1 + $0x40] sm:$0xff]
    %v82 = vld [vmem:[%s1 + $0x48] sm:$0xff]
    %v83 = vld [vmem:[%s1 + $0x50] sm:$0xff]
    %v84 = vld [vmem:[%s1 + $0x58] sm:$0xff]
    %v85 = vld [vmem:[%s1 + $0x60] sm:$0xff]
    %v86 = vld [vmem:[%s1 + $0x68] sm:$0xff]
    %v87 = vld [vmem:[%s1 + $0x70] sm:$0xff]
    %v88 = vld [vmem:[%s1 + $0x78] sm:$0xff]
    %v89 = vld [vmem:[%s1 + $0x80] sm:$0xff]
    %v90 = vld [vmem:[%s1 + $0x88] sm:$0xff]
    %v91 = vld [vmem:[%s1 + $0x90] sm:$0xff]
    %v92 = vld [vmem:[%s1 + $0x98] sm:$0xff]
    %v93 = vld [vmem:[%s1 + $0xa0] sm:$0xff]
    %v94 = vld [vmem:[%s1 + $0xa8] sm:$0xff]
    %v95 = vld [vmem:[%s1 + $0xb0] sm:$0xff]
    %v96 = vld [vmem:[%s1 + $0xb8] sm:$0xff]
    %v97 = vld [vmem:[%s1 + $0xc0] sm:$0xff]
    %v98 = vld [vmem:[%s1 + $0xc8] sm:$0xff]
    %v99 = vld [vmem:[%s1 + $0xd0] sm:$0xff]
    %v100 = vld [vmem:[%s1 + $0xd8] sm:$0xff]
    %v101 = vld [vmem:[%s1 + $0xe0] sm:$0xff]
    %v102 = vld [vmem:[%s1 + $0xe8] sm:$0xff]
    %v103 = vld [vmem:[%s1 + $0xf0] sm:$0xff]
    %v104 = vld [vmem:[%s1 + $0xf8] sm:$0xff]
    %v105 = vld [vmem:[%s2] sm:$0x1]
    %v107 = vlaneseq
    %v108 = vshrl.u32 %v107, 7
    %v109 = vsub.s32 0, %v108
    %v110 = vrot.slane %v105, %v109
    %112 = vmatprep.subr.mxu0 0.0
    %113 = vmatpush1.msra.mxu0 %v73
    %114 = vmatprep.subr.mxu0 0.0
    %115 = vmatpush1.msra.mxu0 %v74
    %116 = vmatprep.subr.mxu0 0.0
    %117 = vmatpush1.msra.mxu0 %v75
    %118 = vmatprep.subr.mxu0 0.0
    %119 = vmatpush1.msra.mxu0 %v76
    %120 = vmatprep.subr.mxu0 0.0
    %121 = vmatpush1.msra.mxu0 %v77
    %122 = vmatprep.subr.mxu0 0.0
    %123 = vmatpush1.msra.mxu0 %v78
    %124 = vmatprep.subr.mxu0 0.0
    %125 = vmatpush1.msra.mxu0 %v79
    %126 = vmatprep.subr.mxu0 0.0
    %127 = vmatpush1.msra.mxu0 %v80
    %128 = vmatprep.subr.mxu0 0.0
    %129 = vmatpush1.msra.mxu0 %v81
    %130 = vmatprep.subr.mxu0 0.0
    %131 = vmatpush1.msra.mxu0 %v82
    %132 = vmatprep.subr.mxu0 0.0
    %133 = vmatpush1.msra.mxu0 %v83
    %134 = vmatprep.subr.mxu0 0.0
    %135 = vmatpush1.msra.mxu0 %v84
    %136 = vmatprep.subr.mxu0 0.0
    %137 = vmatpush1.msra.mxu0 %v85
    %138 = vmatprep.subr.mxu0 0.0
    %139 = vmatpush1.msra.mxu0 %v86
    %140 = vmatprep.subr.mxu0 0.0
    %141 = vmatpush1.msra.mxu0 %v87
    %142 = vmatprep.subr.mxu0 0.0
    %143 = vmatpush1.msra.mxu0 %v88
    %144 = vmatprep.subr.mxu0 0.0
    %145 = vmatpush1.msra.mxu0 %v89
    %146 = vmatprep.subr.mxu0 0.0
    %147 = vmatpush1.msra.mxu0 %v90
    %148 = vmatprep.subr.mxu0 0.0
    %149 = vmatpush1.msra.mxu0 %v91
    %150 = vmatprep.subr.mxu0 0.0
    %151 = vmatpush1.msra.mxu0 %v92
    %152 = vmatprep.subr.mxu0 0.0
    %153 = vmatpush1.msra.mxu0 %v93
    %154 = vmatprep.subr.mxu0 0.0
    %155 = vmatpush1.msra.mxu0 %v94
    %156 = vmatprep.subr.mxu0 0.0
    %157 = vmatpush1.msra.mxu0 %v95
    %158 = vmatprep.subr.mxu0 0.0
    %159 = vmatpush1.msra.mxu0 %v96
    %160 = vmatprep.subr.mxu0 0.0
    %161 = vmatpush1.msra.mxu0 %v97
    %162 = vmatprep.subr.mxu0 0.0
    %163 = vmatpush1.msra.mxu0 %v98
    %164 = vmatprep.subr.mxu0 0.0
    %165 = vmatpush1.msra.mxu0 %v99
    %166 = vmatprep.subr.mxu0 0.0
    %167 = vmatpush1.msra.mxu0 %v100
    %168 = vmatprep.subr.mxu0 0.0
    %169 = vmatpush1.msra.mxu0 %v101
    %170 = vmatprep.subr.mxu0 0.0
    %171 = vmatpush1.msra.mxu0 %v102
    %172 = vmatprep.subr.mxu0 0.0
    %173 = vmatpush1.msra.mxu0 %v103
    %174 = vmatprep.subr.mxu0 0.0
    %175 = vmatpush1.msra.mxu0 %v104
    %176 = vmatprep.mubr.f32.mxu0 %v72
    %177 = vmatmul.mubr.f32.gmra.mrb[0].mxu0 %v71
    %v178 = vpop.f32.mrb[0].mxu0
    %v179 = vadd.f32 %v110, %v178
    %v180 = vpop.f32.mrb[0].mxu0
    %181 = vdwg.mxu0
    %v182 = vlaneseq
    %v183 = vshrl.u32 %v182, 7
    %v184 = vlaneseq
    %v185 = vand.u32 %v184, 127
    %vm186 = vcmp.eq.s32.totalorder %v183, %v185
    %v187 = vsel %vm186, 1, 0
    %v188 = vcvt.s32.f32 %v187
    %v189 = vld [vmem:[%s3] sm:$0x1]
    %v190 = vld [vmem:[%s4] sm:$0x1f]
    %v192 = vrot.slane %v179, 7
    %vm194 = vcmask 1040384
    %v195 = vsel %vm194, %v189, %v192
    %v196 = vadd.f32 %v195, %v190
    %v197 = vld [vmem:[%s5] sm:$0x1]
    %v198 = vld [vmem:[%s6] sm:$0x1]
    %vm199 = vcmask 258048
    %v200 = vsel %vm199, %v196, 0.0
    %201 = vadd.xlane.f32.xlu0 %v200
    %v202 = vpop.xlane.xlu0 %201
    %v203 = vrcp.pop 32.0
    %v204 = vmul.f32 %v202, %v203
    %v205 = vsub.f32 %v196, %v204
    %v206 = vmul.f32 %v205, %v205
    %v207 = vsel %vm199, %v206, 0.0
    %208 = vadd.xlane.f32.xlu0 %v207
    %v209 = vpop.xlane.xlu0 %208
    %v210 = vmul.f32 %v209, %v203
    %v211 = vadd.f32 %v210, 1e-05
    %v212 = vrsqrt.pop %v211
    %v213 = vmul.f32 %v205, %v212
    %v215 = vlaneseq
    %v216 = vshrl.u32 %v215, 7
    %v217 = vsub.s32 0, %v216
    %v218 = vrot.slane %v197, %v217
    %v220 = vmul.f32 %v213, %v218
    %v222 = vlaneseq
    %v223 = vshrl.u32 %v222, 7
    %v224 = vsub.s32 0, %v223
    %v225 = vrot.slane %v198, %v224
    %v227 = vadd.f32 %v220, %v225
    %v228 = vld [vmem:[%s7] sm:$0xff]
    %v229 = vld [vmem:[%s7 + $0x8] sm:$0xff]
    %v230 = vld [vmem:[%s7 + $0x10] sm:$0xff]
    %v231 = vld [vmem:[%s7 + $0x18] sm:$0xff]
    %v232 = vld [vmem:[%s8] sm:$0x1]
    %v234 = vlaneseq
    %v235 = vshrl.u32 %v234, 7
    %v236 = vsub.s32 0, %v235
    %v237 = vrot.slane %v232, %v236
    %vm239 = vcmask 261120
    %v241 = vsel %vm239, %v227, 0
    %243 = vmatprep.subr.mxu0 0.0
    %244 = vmatpush1.msra.mxu0 %v228
    %245 = vmatprep.subr.mxu0 0.0
    %246 = vmatpush1.msra.mxu0 %v229
    %247 = vmatprep.subr.mxu0 0.0
    %248 = vmatpush1.msra.mxu0 %v230
    %249 = vmatprep.subr.mxu0 0.0
    %250 = vmatpush1.msra.mxu0 %v231
    %251 = vmatprep.subr.mxu0 0.0
    %252 = vmatpush1.msra.mxu0 0.0
    %253 = vmatprep.subr.mxu0 0.0
    %254 = vmatpush1.msra.mxu0 0.0
    %255 = vmatprep.subr.mxu0 0.0
    %256 = vmatpush1.msra.mxu0 0.0
    %257 = vmatprep.subr.mxu0 0.0
    %258 = vmatpush1.msra.mxu0 0.0
    %259 = vmatprep.subr.mxu0 0.0
    %260 = vmatpush1.msra.mxu0 0.0
    %261 = vmatprep.subr.mxu0 0.0
    %262 = vmatpush1.msra.mxu0 0.0
    %263 = vmatprep.subr.mxu0 0.0
    %264 = vmatpush1.msra.mxu0 0.0
    %265 = vmatprep.subr.mxu0 0.0
    %266 = vmatpush1.msra.mxu0 0.0
    %267 = vmatprep.subr.mxu0 0.0
    %268 = vmatpush1.msra.mxu0 0.0
    %269 = vmatprep.subr.mxu0 0.0
    %270 = vmatpush1.msra.mxu0 0.0
    %271 = vmatprep.subr.mxu0 0.0
    %272 = vmatpush1.msra.mxu0 0.0
    %273 = vmatprep.subr.mxu0 0.0
    %274 = vmatpush1.msra.mxu0 0.0
    %275 = vmatprep.subr.mxu0 0.0
    %276 = vmatpush1.msra.mxu0 0.0
    %277 = vmatprep.subr.mxu0 0.0
    %278 = vmatpush1.msra.mxu0 0.0
    %279 = vmatprep.subr.mxu0 0.0
    %280 = vmatpush1.msra.mxu0 0.0
    %281 = vmatprep.subr.mxu0 0.0
    %282 = vmatpush1.msra.mxu0 0.0
    %283 = vmatprep.subr.mxu0 0.0
    %284 = vmatpush1.msra.mxu0 0.0
    %285 = vmatprep.subr.mxu0 0.0
    %286 = vmatpush1.msra.mxu0 0.0
    %287 = vmatprep.subr.mxu0 0.0
    %288 = vmatpush1.msra.mxu0 0.0
    %289 = vmatprep.subr.mxu0 0.0
    %290 = vmatpush1.msra.mxu0 0.0
    %291 = vmatprep.subr.mxu0 0.0
    %292 = vmatpush1.msra.mxu0 0.0
    %293 = vmatprep.subr.mxu0 0.0
    %294 = vmatpush1.msra.mxu0 0.0
    %295 = vmatprep.subr.mxu0 0.0
    %296 = vmatpush1.msra.mxu0 0.0
    %297 = vmatprep.subr.mxu0 0.0
    %298 = vmatpush1.msra.mxu0 0.0
    %299 = vmatprep.subr.mxu0 0.0
    %300 = vmatpush1.msra.mxu0 0.0
    %301 = vmatprep.subr.mxu0 0.0
    %302 = vmatpush1.msra.mxu0 0.0
    %303 = vmatprep.subr.mxu0 0.0
    %304 = vmatpush1.msra.mxu0 0.0
    %305 = vmatprep.subr.mxu0 0.0
    %306 = vmatpush1.msra.mxu0 0.0
    %307 = vmatprep.mubr.f32.mxu0 0.0
    %308 = vmatmul.mubr.f32.gmra.mrb[0].mxu0 %v241
    %v309 = vpop.f32.mrb[0].mxu0
    %v310 = vadd.f32 %v237, %v309
    %v311 = vpop.f32.mrb[0].mxu0
    %312 = vdwg.mxu0
    %314 = vrot.lane.b32.xlu0 %v310, 120
    %v315 = vpop.permute.xlu0 %314
    %316 = vrot.lane.b32.xlu0 %v310, 112
    %v317 = vpop.permute.xlu0 %316
    %318 = vrot.lane.b32.xlu0 %v310, 104
    %v319 = vpop.permute.xlu0 %318
    %320 = vrot.lane.b32.xlu0 %v310, 96
    %v321 = vpop.permute.xlu0 %320
    %vm322 = vcmask 64512
    %v323 = vsel %vm322, %v310, 0
    %v325 = vsel %vm322, %v321, 0
    %327 = vmatprep.subr.mxu0 0.0
    %328 = vmatpush1.xpose.msra.mxu0 %v325
    %329 = vmatprep.subr.mxu0 0.0
    %330 = vmatpush1.xpose.msra.mxu0 0.0
    %331 = vmatprep.subr.mxu0 0.0
    %332 = vmatpush1.xpose.msra.mxu0 0.0
    %333 = vmatprep.subr.mxu0 0.0
    %334 = vmatpush1.xpose.msra.mxu0 0.0
    %335 = vmatprep.subr.mxu0 0.0
    %336 = vmatpush1.xpose.msra.mxu0 0.0
    %337 = vmatprep.subr.mxu0 0.0
    %338 = vmatpush1.xpose.msra.mxu0 0.0
    %339 = vmatprep.subr.mxu0 0.0
    %340 = vmatpush1.xpose.msra.mxu0 0.0
    %341 = vmatprep.subr.mxu0 0.0
    %342 = vmatpush1.xpose.msra.mxu0 0.0
    %343 = vmatprep.subr.mxu0 0.0
    %344 = vmatpush1.xpose.msra.mxu0 0.0
    %345 = vmatprep.subr.mxu0 0.0
    %346 = vmatpush1.xpose.msra.mxu0 0.0
    %347 = vmatprep.subr.mxu0 0.0
    %348 = vmatpush1.xpose.msra.mxu0 0.0
    %349 = vmatprep.subr.mxu0 0.0
    %350 = vmatpush1.xpose.msra.mxu0 0.0
    %351 = vmatprep.subr.mxu0 0.0
    %352 = vmatpush1.xpose.msra.mxu0 0.0
    %353 = vmatprep.subr.mxu0 0.0
    %354 = vmatpush1.xpose.msra.mxu0 0.0
    %355 = vmatprep.subr.mxu0 0.0
    %356 = vmatpush1.xpose.msra.mxu0 0.0
    %357 = vmatprep.subr.mxu0 0.0
    %358 = vmatpush1.xpose.msra.mxu0 0.0
    %359 = vmatprep.subr.mxu0 0.0
    %360 = vmatpush1.xpose.msra.mxu0 0.0
    %361 = vmatprep.subr.mxu0 0.0
    %362 = vmatpush1.xpose.msra.mxu0 0.0
    %363 = vmatprep.subr.mxu0 0.0
    %364 = vmatpush1.xpose.msra.mxu0 0.0
    %365 = vmatprep.subr.mxu0 0.0
    %366 = vmatpush1.xpose.msra.mxu0 0.0
    %367 = vmatprep.subr.mxu0 0.0
    %368 = vmatpush1.xpose.msra.mxu0 0.0
    %369 = vmatprep.subr.mxu0 0.0
    %370 = vmatpush1.xpose.msra.mxu0 0.0
    %371 = vmatprep.subr.mxu0 0.0
    %372 = vmatpush1.xpose.msra.mxu0 0.0
    %373 = vmatprep.subr.mxu0 0.0
    %374 = vmatpush1.xpose.msra.mxu0 0.0
    %375 = vmatprep.subr.mxu0 0.0
    %376 = vmatpush1.xpose.msra.mxu0 0.0
    %377 = vmatprep.subr.mxu0 0.0
    %378 = vmatpush1.xpose.msra.mxu0 0.0
    %379 = vmatprep.subr.mxu0 0.0
    %380 = vmatpush1.xpose.msra.mxu0 0.0
    %381 = vmatprep.subr.mxu0 0.0
    %382 = vmatpush1.xpose.msra.mxu0 0.0
    %383 = vmatprep.subr.mxu0 0.0
    %384 = vmatpush1.xpose.msra.mxu0 0.0
    %385 = vmatprep.subr.mxu0 0.0
    %386 = vmatpush1.xpose.msra.mxu0 0.0
    %387 = vmatprep.subr.mxu0 0.0
    %388 = vmatpush1.xpose.msra.mxu0 0.0
    %389 = vmatprep.subr.mxu0 0.0
    %390 = vmatpush1.xpose.msra.mxu0 0.0
    %391 = vmatprep.mubr.f32.mxu0 0.0
    %392 = vmatmul.mubr.f32.gmra.mrb[0].mxu0 %v323
    %v393 = vpop.f32.mrb[0].mxu0
    %v394 = vadd.f32 0.0, %v393
    %v395 = vpop.f32.mrb[0].mxu0
    %396 = vdwg.mxu0
    %397 = vrot.lane.b32.xlu0 %v315, 96
    %v398 = vpop.permute.xlu0 %397
    %v399 = vsel %vm322, %v315, 0
    %v401 = vsel %vm322, %v398, 0
    %403 = vmatprep.subr.mxu0 0.0
    %404 = vmatpush1.xpose.msra.mxu0 %v401
    %405 = vmatprep.subr.mxu0 0.0
    %406 = vmatpush1.xpose.msra.mxu0 0.0
    %407 = vmatprep.subr.mxu0 0.0
    %408 = vmatpush1.xpose.msra.mxu0 0.0
    %409 = vmatprep.subr.mxu0 0.0
    %410 = vmatpush1.xpose.msra.mxu0 0.0
    %411 = vmatprep.subr.mxu0 0.0
    %412 = vmatpush1.xpose.msra.mxu0 0.0
    %413 = vmatprep.subr.mxu0 0.0
    %414 = vmatpush1.xpose.msra.mxu0 0.0
    %415 = vmatprep.subr.mxu0 0.0
    %416 = vmatpush1.xpose.msra.mxu0 0.0
    %417 = vmatprep.subr.mxu0 0.0
    %418 = vmatpush1.xpose.msra.mxu0 0.0
    %419 = vmatprep.subr.mxu0 0.0
    %420 = vmatpush1.xpose.msra.mxu0 0.0
    %421 = vmatprep.subr.mxu0 0.0
    %422 = vmatpush1.xpose.msra.mxu0 0.0
    %423 = vmatprep.subr.mxu0 0.0
    %424 = vmatpush1.xpose.msra.mxu0 0.0
    %425 = vmatprep.subr.mxu0 0.0
    %426 = vmatpush1.xpose.msra.mxu0 0.0
    %427 = vmatprep.subr.mxu0 0.0
    %428 = vmatpush1.xpose.msra.mxu0 0.0
    %429 = vmatprep.subr.mxu0 0.0
    %430 = vmatpush1.xpose.msra.mxu0 0.0
    %431 = vmatprep.subr.mxu0 0.0
    %432 = vmatpush1.xpose.msra.mxu0 0.0
    %433 = vmatprep.subr.mxu0 0.0
    %434 = vmatpush1.xpose.msra.mxu0 0.0
    %435 = vmatprep.subr.mxu0 0.0
    %436 = vmatpush1.xpose.msra.mxu0 0.0
    %437 = vmatprep.subr.mxu0 0.0
    %438 = vmatpush1.xpose.msra.mxu0 0.0
    %439 = vmatprep.subr.mxu0 0.0
    %440 = vmatpush1.xpose.msra.mxu0 0.0
    %441 = vmatprep.subr.mxu0 0.0
    %442 = vmatpush1.xpose.msra.mxu0 0.0
    %443 = vmatprep.subr.mxu0 0.0
    %444 = vmatpush1.xpose.msra.mxu0 0.0
    %445 = vmatprep.subr.mxu0 0.0
    %446 = vmatpush1.xpose.msra.mxu0 0.0
    %447 = vmatprep.subr.mxu0 0.0
    %448 = vmatpush1.xpose.msra.mxu0 0.0
    %449 = vmatprep.subr.mxu0 0.0
    %450 = vmatpush1.xpose.msra.mxu0 0.0
    %451 = vmatprep.subr.mxu0 0.0
    %452 = vmatpush1.xpose.msra.mxu0 0.0
    %453 = vmatprep.subr.mxu0 0.0
    %454 = vmatpush1.xpose.msra.mxu0 0.0
    %455 = vmatprep.subr.mxu0 0.0
    %456 = vmatpush1.xpose.msra.mxu0 0.0
    %457 = vmatprep.subr.mxu0 0.0
    %458 = vmatpush1.xpose.msra.mxu0 0.0
    %459 = vmatprep.subr.mxu0 0.0
    %460 = vmatpush1.xpose.msra.mxu0 0.0
    %461 = vmatprep.subr.mxu0 0.0
    %462 = vmatpush1.xpose.msra.mxu0 0.0
    %463 = vmatprep.subr.mxu0 0.0
    %464 = vmatpush1.xpose.msra.mxu0 0.0
    %465 = vmatprep.subr.mxu0 0.0
    %466 = vmatpush1.xpose.msra.mxu0 0.0
    %467 = vmatprep.mubr.f32.mxu0 0.0
    %468 = vmatmul.mubr.f32.gmra.mrb[0].mxu0 %v399
    %v469 = vpop.f32.mrb[0].mxu0
    %v470 = vadd.f32 0.0, %v469
    %v471 = vpop.f32.mrb[0].mxu0
    %472 = vdwg.mxu0
    %473 = vrot.lane.b32.xlu0 %v317, 96
    %v474 = vpop.permute.xlu0 %473
    %v475 = vsel %vm322, %v317, 0
    %v477 = vsel %vm322, %v474, 0
    %479 = vmatprep.subr.mxu0 0.0
    %480 = vmatpush1.xpose.msra.mxu0 %v477
    %481 = vmatprep.subr.mxu0 0.0
    %482 = vmatpush1.xpose.msra.mxu0 0.0
    %483 = vmatprep.subr.mxu0 0.0
    %484 = vmatpush1.xpose.msra.mxu0 0.0
    %485 = vmatprep.subr.mxu0 0.0
    %486 = vmatpush1.xpose.msra.mxu0 0.0
    %487 = vmatprep.subr.mxu0 0.0
    %488 = vmatpush1.xpose.msra.mxu0 0.0
    %489 = vmatprep.subr.mxu0 0.0
    %490 = vmatpush1.xpose.msra.mxu0 0.0
    %491 = vmatprep.subr.mxu0 0.0
    %492 = vmatpush1.xpose.msra.mxu0 0.0
    %493 = vmatprep.subr.mxu0 0.0
    %494 = vmatpush1.xpose.msra.mxu0 0.0
    %495 = vmatprep.subr.mxu0 0.0
    %496 = vmatpush1.xpose.msra.mxu0 0.0
    %497 = vmatprep.subr.mxu0 0.0
    %498 = vmatpush1.xpose.msra.mxu0 0.0
    %499 = vmatprep.subr.mxu0 0.0
    %500 = vmatpush1.xpose.msra.mxu0 0.0
    %501 = vmatprep.subr.mxu0 0.0
    %502 = vmatpush1.xpose.msra.mxu0 0.0
    %503 = vmatprep.subr.mxu0 0.0
    %504 = vmatpush1.xpose.msra.mxu0 0.0
    %505 = vmatprep.subr.mxu0 0.0
    %506 = vmatpush1.xpose.msra.mxu0 0.0
    %507 = vmatprep.subr.mxu0 0.0
    %508 = vmatpush1.xpose.msra.mxu0 0.0
    %509 = vmatprep.subr.mxu0 0.0
    %510 = vmatpush1.xpose.msra.mxu0 0.0
    %511 = vmatprep.subr.mxu0 0.0
    %512 = vmatpush1.xpose.msra.mxu0 0.0
    %513 = vmatprep.subr.mxu0 0.0
    %514 = vmatpush1.xpose.msra.mxu0 0.0
    %515 = vmatprep.subr.mxu0 0.0
    %516 = vmatpush1.xpose.msra.mxu0 0.0
    %517 = vmatprep.subr.mxu0 0.0
    %518 = vmatpush1.xpose.msra.mxu0 0.0
    %519 = vmatprep.subr.mxu0 0.0
    %520 = vmatpush1.xpose.msra.mxu0 0.0
    %521 = vmatprep.subr.mxu0 0.0
    %522 = vmatpush1.xpose.msra.mxu0 0.0
    %523 = vmatprep.subr.mxu0 0.0
    %524 = vmatpush1.xpose.msra.mxu0 0.0
    %525 = vmatprep.subr.mxu0 0.0
    %526 = vmatpush1.xpose.msra.mxu0 0.0
    %527 = vmatprep.subr.mxu0 0.0
    %528 = vmatpush1.xpose.msra.mxu0 0.0
    %529 = vmatprep.subr.mxu0 0.0
    %530 = vmatpush1.xpose.msra.mxu0 0.0
    %531 = vmatprep.subr.mxu0 0.0
    %532 = vmatpush1.xpose.msra.mxu0 0.0
    %533 = vmatprep.subr.mxu0 0.0
    %534 = vmatpush1.xpose.msra.mxu0 0.0
    %535 = vmatprep.subr.mxu0 0.0
    %536 = vmatpush1.xpose.msra.mxu0 0.0
    %537 = vmatprep.subr.mxu0 0.0
    %538 = vmatpush1.xpose.msra.mxu0 0.0
    %539 = vmatprep.subr.mxu0 0.0
    %540 = vmatpush1.xpose.msra.mxu0 0.0
    %541 = vmatprep.subr.mxu0 0.0
    %542 = vmatpush1.xpose.msra.mxu0 0.0
    %543 = vmatprep.mubr.f32.mxu0 0.0
    %544 = vmatmul.mubr.f32.gmra.mrb[0].mxu0 %v475
    %v545 = vpop.f32.mrb[0].mxu0
    %v546 = vadd.f32 0.0, %v545
    %v547 = vpop.f32.mrb[0].mxu0
    %548 = vdwg.mxu0
    %549 = vrot.lane.b32.xlu0 %v319, 96
    %v550 = vpop.permute.xlu0 %549
    %v551 = vsel %vm322, %v319, 0
    %v553 = vsel %vm322, %v550, 0
    %555 = vmatprep.subr.mxu0 0.0
    %556 = vmatpush1.xpose.msra.mxu0 %v553
    %557 = vmatprep.subr.mxu0 0.0
    %558 = vmatpush1.xpose.msra.mxu0 0.0
    %559 = vmatprep.subr.mxu0 0.0
    %560 = vmatpush1.xpose.msra.mxu0 0.0
    %561 = vmatprep.subr.mxu0 0.0
    %562 = vmatpush1.xpose.msra.mxu0 0.0
    %563 = vmatprep.subr.mxu0 0.0
    %564 = vmatpush1.xpose.msra.mxu0 0.0
    %565 = vmatprep.subr.mxu0 0.0
    %566 = vmatpush1.xpose.msra.mxu0 0.0
    %567 = vmatprep.subr.mxu0 0.0
    %568 = vmatpush1.xpose.msra.mxu0 0.0
    %569 = vmatprep.subr.mxu0 0.0
    %570 = vmatpush1.xpose.msra.mxu0 0.0
    %571 = vmatprep.subr.mxu0 0.0
    %572 = vmatpush1.xpose.msra.mxu0 0.0
    %573 = vmatprep.subr.mxu0 0.0
    %574 = vmatpush1.xpose.msra.mxu0 0.0
    %575 = vmatprep.subr.mxu0 0.0
    %576 = vmatpush1.xpose.msra.mxu0 0.0
    %577 = vmatprep.subr.mxu0 0.0
    %578 = vmatpush1.xpose.msra.mxu0 0.0
    %579 = vmatprep.subr.mxu0 0.0
    %580 = vmatpush1.xpose.msra.mxu0 0.0
    %581 = vmatprep.subr.mxu0 0.0
    %582 = vmatpush1.xpose.msra.mxu0 0.0
    %583 = vmatprep.subr.mxu0 0.0
    %584 = vmatpush1.xpose.msra.mxu0 0.0
    %585 = vmatprep.subr.mxu0 0.0
    %586 = vmatpush1.xpose.msra.mxu0 0.0
    %587 = vmatprep.subr.mxu0 0.0
    %588 = vmatpush1.xpose.msra.mxu0 0.0
    %589 = vmatprep.subr.mxu0 0.0
    %590 = vmatpush1.xpose.msra.mxu0 0.0
    %591 = vmatprep.subr.mxu0 0.0
    %592 = vmatpush1.xpose.msra.mxu0 0.0
    %593 = vmatprep.subr.mxu0 0.0
    %594 = vmatpush1.xpose.msra.mxu0 0.0
    %595 = vmatprep.subr.mxu0 0.0
    %596 = vmatpush1.xpose.msra.mxu0 0.0
    %597 = vmatprep.subr.mxu0 0.0
    %598 = vmatpush1.xpose.msra.mxu0 0.0
    %599 = vmatprep.subr.mxu0 0.0
    %600 = vmatpush1.xpose.msra.mxu0 0.0
    %601 = vmatprep.subr.mxu0 0.0
    %602 = vmatpush1.xpose.msra.mxu0 0.0
    %603 = vmatprep.subr.mxu0 0.0
    %604 = vmatpush1.xpose.msra.mxu0 0.0
    %605 = vmatprep.subr.mxu0 0.0
    %606 = vmatpush1.xpose.msra.mxu0 0.0
    %607 = vmatprep.subr.mxu0 0.0
    %608 = vmatpush1.xpose.msra.mxu0 0.0
    %609 = vmatprep.subr.mxu0 0.0
    %610 = vmatpush1.xpose.msra.mxu0 0.0
    %611 = vmatprep.subr.mxu0 0.0
    %612 = vmatpush1.xpose.msra.mxu0 0.0
    %613 = vmatprep.subr.mxu0 0.0
    %614 = vmatpush1.xpose.msra.mxu0 0.0
    %615 = vmatprep.subr.mxu0 0.0
    %616 = vmatpush1.xpose.msra.mxu0 0.0
    %617 = vmatprep.subr.mxu0 0.0
    %618 = vmatpush1.xpose.msra.mxu0 0.0
    %619 = vmatprep.mubr.f32.mxu0 0.0
    %620 = vmatmul.mubr.f32.gmra.mrb[0].mxu0 %v551
    %v621 = vpop.f32.mrb[0].mxu0
    %v622 = vadd.f32 0.0, %v621
    %v623 = vpop.f32.mrb[0].mxu0
    %624 = vdwg.mxu0
    %v625 = vmul.f32 %v394, 0.35355338
    %v626 = vmul.f32 %v470, 0.35355338
    %v627 = vmul.f32 %v546, 0.35355338
    %v628 = vmul.f32 %v622, 0.35355338
    %vm629 = vcmask 36864
    %v630 = vsel %vm629, %v625, -inf
    %631 = vmax.xlane.f32.xlu0 %v630
    %v632 = vpop.xlane.xlu0 %631
    %v633 = vsel %vm629, %v626, -inf
    %634 = vmax.xlane.f32.xlu0 %v633
    %v635 = vpop.xlane.xlu0 %634
    %v636 = vsel %vm629, %v627, -inf
    %637 = vmax.xlane.f32.xlu0 %v636
    %v638 = vpop.xlane.xlu0 %637
    %v639 = vsel %vm629, %v628, -inf
    %640 = vmax.xlane.f32.xlu0 %v639
    %v641 = vpop.xlane.xlu0 %640
    %v642 = vsub.f32 %v625, %v632
    %v643 = vsub.f32 %v626, %v635
    %v644 = vsub.f32 %v627, %v638
    %v645 = vsub.f32 %v628, %v641
    %v646 = vmul.f32 %v642, 1.442695
    %v647 = vpow.pop %v646
    %v648 = vmul.f32 %v643, 1.442695
    %v649 = vpow.pop %v648
    %v650 = vmul.f32 %v644, 1.442695
    %v651 = vpow.pop %v650
    %v652 = vmul.f32 %v645, 1.442695
    %v653 = vpow.pop %v652
    %v654 = vsel %vm629, %v647, 0.0
    %655 = vadd.xlane.f32.xlu0 %v654
    %v656 = vpop.xlane.xlu0 %655
    %v657 = vsel %vm629, %v649, 0.0
    %658 = vadd.xlane.f32.xlu0 %v657
    %v659 = vpop.xlane.xlu0 %658
    %v660 = vsel %vm629, %v651, 0.0
    %661 = vadd.xlane.f32.xlu0 %v660
    %v662 = vpop.xlane.xlu0 %661
    %v663 = vsel %vm629, %v653, 0.0
    %664 = vadd.xlane.f32.xlu0 %v663
    %v665 = vpop.xlane.xlu0 %664
    %v666 = vrcp.pop %v656
    %v667 = vrcp.pop %v659
    %v668 = vrcp.pop %v662
    %v669 = vrcp.pop %v665
    %v670 = vmul.f32 %v647, %v666
    %v671 = vmul.f32 %v649, %v667
    %v672 = vmul.f32 %v651, %v668
    %v673 = vmul.f32 %v653, %v669
    %v674 = vsel %vm629, %v670, 0.0
    %v675 = vsel %vm629, %v671, 0.0
    %v676 = vadd.f32 %v674, %v675
    %v677 = vsel %vm629, %v672, 0.0
    %v678 = vadd.f32 %v676, %v677
    %v679 = vsel %vm629, %v673, 0.0
    %v680 = vadd.f32 %v678, %v679
    %v681 = vrcp.pop 4.0
    %v682 = vmul.f32 %v680, %v681
    %683 = vrot.lane.b32.xlu0 %v310, 64
    %v684 = vpop.permute.xlu0 %683
    %vm685 = vcmask 39936
    %v687 = vsel %vm685, %v670, 0
    %vm689 = vcmask 1044480
    %v690 = vsel %vm689, %v684, 0
    %692 = vmatprep.subr.mxu0 0.0
    %693 = vmatpush1.msra.mxu0 %v690
    %694 = vmatprep.subr.mxu0 0.0
    %695 = vmatpush1.msra.mxu0 0.0
    %696 = vmatprep.subr.mxu0 0.0
    %697 = vmatpush1.msra.mxu0 0.0
    %698 = vmatprep.subr.mxu0 0.0
    %699 = vmatpush1.msra.mxu0 0.0
    %700 = vmatprep.subr.mxu0 0.0
    %701 = vmatpush1.msra.mxu0 0.0
    %702 = vmatprep.subr.mxu0 0.0
    %703 = vmatpush1.msra.mxu0 0.0
    %704 = vmatprep.subr.mxu0 0.0
    %705 = vmatpush1.msra.mxu0 0.0
    %706 = vmatprep.subr.mxu0 0.0
    %707 = vmatpush1.msra.mxu0 0.0
    %708 = vmatprep.subr.mxu0 0.0
    %709 = vmatpush1.msra.mxu0 0.0
    %710 = vmatprep.subr.mxu0 0.0
    %711 = vmatpush1.msra.mxu0 0.0
    %712 = vmatprep.subr.mxu0 0.0
    %713 = vmatpush1.msra.mxu0 0.0
    %714 = vmatprep.subr.mxu0 0.0
    %715 = vmatpush1.msra.mxu0 0.0
    %716 = vmatprep.subr.mxu0 0.0
    %717 = vmatpush1.msra.mxu0 0.0
    %718 = vmatprep.subr.mxu0 0.0
    %719 = vmatpush1.msra.mxu0 0.0
    %720 = vmatprep.subr.mxu0 0.0
    %721 = vmatpush1.msra.mxu0 0.0
    %722 = vmatprep.subr.mxu0 0.0
    %723 = vmatpush1.msra.mxu0 0.0
    %724 = vmatprep.subr.mxu0 0.0
    %725 = vmatpush1.msra.mxu0 0.0
    %726 = vmatprep.subr.mxu0 0.0
    %727 = vmatpush1.msra.mxu0 0.0
    %728 = vmatprep.subr.mxu0 0.0
    %729 = vmatpush1.msra.mxu0 0.0
    %730 = vmatprep.subr.mxu0 0.0
    %731 = vmatpush1.msra.mxu0 0.0
    %732 = vmatprep.subr.mxu0 0.0
    %733 = vmatpush1.msra.mxu0 0.0
    %734 = vmatprep.subr.mxu0 0.0
    %735 = vmatpush1.msra.mxu0 0.0
    %736 = vmatprep.subr.mxu0 0.0
    %737 = vmatpush1.msra.mxu0 0.0
    %738 = vmatprep.subr.mxu0 0.0
    %739 = vmatpush1.msra.mxu0 0.0
    %740 = vmatprep.subr.mxu0 0.0
    %741 = vmatpush1.msra.mxu0 0.0
    %742 = vmatprep.subr.mxu0 0.0
    %743 = vmatpush1.msra.mxu0 0.0
    %744 = vmatprep.subr.mxu0 0.0
    %745 = vmatpush1.msra.mxu0 0.0
    %746 = vmatprep.subr.mxu0 0.0
    %747 = vmatpush1.msra.mxu0 0.0
    %748 = vmatprep.subr.mxu0 0.0
    %749 = vmatpush1.msra.mxu0 0.0
    %750 = vmatprep.subr.mxu0 0.0
    %751 = vmatpush1.msra.mxu0 0.0
    %752 = vmatprep.subr.mxu0 0.0
    %753 = vmatpush1.msra.mxu0 0.0
    %754 = vmatprep.subr.mxu0 0.0
    %755 = vmatpush1.msra.mxu0 0.0
    %756 = vmatprep.mubr.f32.mxu0 0.0
    %757 = vmatmul.mubr.f32.gmra.mrb[0].mxu0 %v687
    %v758 = vpop.f32.mrb[0].mxu0
    %v759 = vadd.f32 0.0, %v758
    %v760 = vpop.f32.mrb[0].mxu0
    %761 = vdwg.mxu0
    %762 = vrot.lane.b32.xlu0 %v315, 64
    %v763 = vpop.permute.xlu0 %762
    %v765 = vsel %vm685, %v671, 0
    %v767 = vsel %vm689, %v763, 0
    %769 = vmatprep.subr.mxu0 0.0
    %770 = vmatpush1.msra.mxu0 %v767
    %771 = vmatprep.subr.mxu0 0.0
    %772 = vmatpush1.msra.mxu0 0.0
    %773 = vmatprep.subr.mxu0 0.0
    %774 = vmatpush1.msra.mxu0 0.0
    %775 = vmatprep.subr.mxu0 0.0
    %776 = vmatpush1.msra.mxu0 0.0
    %777 = vmatprep.subr.mxu0 0.0
    %778 = vmatpush1.msra.mxu0 0.0
    %779 = vmatprep.subr.mxu0 0.0
    %780 = vmatpush1.msra.mxu0 0.0
    %781 = vmatprep.subr.mxu0 0.0
    %782 = vmatpush1.msra.mxu0 0.0
    %783 = vmatprep.subr.mxu0 0.0
    %784 = vmatpush1.msra.mxu0 0.0
    %785 = vmatprep.subr.mxu0 0.0
    %786 = vmatpush1.msra.mxu0 0.0
    %787 = vmatprep.subr.mxu0 0.0
    %788 = vmatpush1.msra.mxu0 0.0
    %789 = vmatprep.subr.mxu0 0.0
    %790 = vmatpush1.msra.mxu0 0.0
    %791 = vmatprep.subr.mxu0 0.0
    %792 = vmatpush1.msra.mxu0 0.0
    %793 = vmatprep.subr.mxu0 0.0
    %794 = vmatpush1.msra.mxu0 0.0
    %795 = vmatprep.subr.mxu0 0.0
    %796 = vmatpush1.msra.mxu0 0.0
    %797 = vmatprep.subr.mxu0 0.0
    %798 = vmatpush1.msra.mxu0 0.0
    %799 = vmatprep.subr.mxu0 0.0
    %800 = vmatpush1.msra.mxu0 0.0
    %801 = vmatprep.subr.mxu0 0.0
    %802 = vmatpush1.msra.mxu0 0.0
    %803 = vmatprep.subr.mxu0 0.0
    %804 = vmatpush1.msra.mxu0 0.0
    %805 = vmatprep.subr.mxu0 0.0
    %806 = vmatpush1.msra.mxu0 0.0
    %807 = vmatprep.subr.mxu0 0.0
    %808 = vmatpush1.msra.mxu0 0.0
    %809 = vmatprep.subr.mxu0 0.0
    %810 = vmatpush1.msra.mxu0 0.0
    %811 = vmatprep.subr.mxu0 0.0
    %812 = vmatpush1.msra.mxu0 0.0
    %813 = vmatprep.subr.mxu0 0.0
    %814 = vmatpush1.msra.mxu0 0.0
    %815 = vmatprep.subr.mxu0 0.0
    %816 = vmatpush1.msra.mxu0 0.0
    %817 = vmatprep.subr.mxu0 0.0
    %818 = vmatpush1.msra.mxu0 0.0
    %819 = vmatprep.subr.mxu0 0.0
    %820 = vmatpush1.msra.mxu0 0.0
    %821 = vmatprep.subr.mxu0 0.0
    %822 = vmatpush1.msra.mxu0 0.0
    %823 = vmatprep.subr.mxu0 0.0
    %824 = vmatpush1.msra.mxu0 0.0
    %825 = vmatprep.subr.mxu0 0.0
    %826 = vmatpush1.msra.mxu0 0.0
    %827 = vmatprep.subr.mxu0 0.0
    %828 = vmatpush1.msra.mxu0 0.0
    %829 = vmatprep.subr.mxu0 0.0
    %830 = vmatpush1.msra.mxu0 0.0
    %831 = vmatprep.subr.mxu0 0.0
    %832 = vmatpush1.msra.mxu0 0.0
    %833 = vmatprep.mubr.f32.mxu0 0.0
    %834 = vmatmul.mubr.f32.gmra.mrb[0].mxu0 %v765
    %v835 = vpop.f32.mrb[0].mxu0
    %v836 = vadd.f32 0.0, %v835
    %v837 = vpop.f32.mrb[0].mxu0
    %838 = vdwg.mxu0
    %839 = vrot.lane.b32.xlu0 %v317, 64
    %v840 = vpop.permute.xlu0 %839
    %v842 = vsel %vm685, %v672, 0
    %v844 = vsel %vm689, %v840, 0
    %846 = vmatprep.subr.mxu0 0.0
    %847 = vmatpush1.msra.mxu0 %v844
    %848 = vmatprep.subr.mxu0 0.0
    %849 = vmatpush1.msra.mxu0 0.0
    %850 = vmatprep.subr.mxu0 0.0
    %851 = vmatpush1.msra.mxu0 0.0
    %852 = vmatprep.subr.mxu0 0.0
    %853 = vmatpush1.msra.mxu0 0.0
    %854 = vmatprep.subr.mxu0 0.0
    %855 = vmatpush1.msra.mxu0 0.0
    %856 = vmatprep.subr.mxu0 0.0
    %857 = vmatpush1.msra.mxu0 0.0
    %858 = vmatprep.subr.mxu0 0.0
    %859 = vmatpush1.msra.mxu0 0.0
    %860 = vmatprep.subr.mxu0 0.0
    %861 = vmatpush1.msra.mxu0 0.0
    %862 = vmatprep.subr.mxu0 0.0
    %863 = vmatpush1.msra.mxu0 0.0
    %864 = vmatprep.subr.mxu0 0.0
    %865 = vmatpush1.msra.mxu0 0.0
    %866 = vmatprep.subr.mxu0 0.0
    %867 = vmatpush1.msra.mxu0 0.0
    %868 = vmatprep.subr.mxu0 0.0
    %869 = vmatpush1.msra.mxu0 0.0
    %870 = vmatprep.subr.mxu0 0.0
    %871 = vmatpush1.msra.mxu0 0.0
    %872 = vmatprep.subr.mxu0 0.0
    %873 = vmatpush1.msra.mxu0 0.0
    %874 = vmatprep.subr.mxu0 0.0
    %875 = vmatpush1.msra.mxu0 0.0
    %876 = vmatprep.subr.mxu0 0.0
    %877 = vmatpush1.msra.mxu0 0.0
    %878 = vmatprep.subr.mxu0 0.0
    %879 = vmatpush1.msra.mxu0 0.0
    %880 = vmatprep.subr.mxu0 0.0
    %881 = vmatpush1.msra.mxu0 0.0
    %882 = vmatprep.subr.mxu0 0.0
    %883 = vmatpush1.msra.mxu0 0.0
    %884 = vmatprep.subr.mxu0 0.0
    %885 = vmatpush1.msra.mxu0 0.0
    %886 = vmatprep.subr.mxu0 0.0
    %887 = vmatpush1.msra.mxu0 0.0
    %888 = vmatprep.subr.mxu0 0.0
    %889 = vmatpush1.msra.mxu0 0.0
    %890 = vmatprep.subr.mxu0 0.0
    %891 = vmatpush1.msra.mxu0 0.0
    %892 = vmatprep.subr.mxu0 0.0
    %893 = vmatpush1.msra.mxu0 0.0
    %894 = vmatprep.subr.mxu0 0.0
    %895 = vmatpush1.msra.mxu0 0.0
    %896 = vmatprep.subr.mxu0 0.0
    %897 = vmatpush1.msra.mxu0 0.0
    %898 = vmatprep.subr.mxu0 0.0
    %899 = vmatpush1.msra.mxu0 0.0
    %900 = vmatprep.subr.mxu0 0.0
    %901 = vmatpush1.msra.mxu0 0.0
    %902 = vmatprep.subr.mxu0 0.0
    %903 = vmatpush1.msra.mxu0 0.0
    %904 = vmatprep.subr.mxu0 0.0
    %905 = vmatpush1.msra.mxu0 0.0
    %906 = vmatprep.subr.mxu0 0.0
    %907 = vmatpush1.msra.mxu0 0.0
    %908 = vmatprep.subr.mxu0 0.0
    %909 = vmatpush1.msra.mxu0 0.0
    %910 = vmatprep.mubr.f32.mxu0 0.0
    %911 = vmatmul.mubr.f32.gmra.mrb[0].mxu0 %v842
    %v912 = vpop.f32.mrb[0].mxu0
    %v913 = vadd.f32 0.0, %v912
    %v914 = vpop.f32.mrb[0].mxu0
    %915 = vdwg.mxu0
    %916 = vrot.lane.b32.xlu0 %v319, 64
    %v917 = vpop.permute.xlu0 %916
    %v919 = vsel %vm685, %v673, 0
    %v921 = vsel %vm689, %v917, 0
    %923 = vmatprep.subr.mxu0 0.0
    %924 = vmatpush1.msra.mxu0 %v921
    %925 = vmatprep.subr.mxu0 0.0
    %926 = vmatpush1.msra.mxu0 0.0
    %927 = vmatprep.subr.mxu0 0.0
    %928 = vmatpush1.msra.mxu0 0.0
    %929 = vmatprep.subr.mxu0 0.0
    %930 = vmatpush1.msra.mxu0 0.0
    %931 = vmatprep.subr.mxu0 0.0
    %932 = vmatpush1.msra.mxu0 0.0
    %933 = vmatprep.subr.mxu0 0.0
    %934 = vmatpush1.msra.mxu0 0.0
    %935 = vmatprep.subr.mxu0 0.0
    %936 = vmatpush1.msra.mxu0 0.0
    %937 = vmatprep.subr.mxu0 0.0
    %938 = vmatpush1.msra.mxu0 0.0
    %939 = vmatprep.subr.mxu0 0.0
    %940 = vmatpush1.msra.mxu0 0.0
    %941 = vmatprep.subr.mxu0 0.0
    %942 = vmatpush1.msra.mxu0 0.0
    %943 = vmatprep.subr.mxu0 0.0
    %944 = vmatpush1.msra.mxu0 0.0
    %945 = vmatprep.subr.mxu0 0.0
    %946 = vmatpush1.msra.mxu0 0.0
    %947 = vmatprep.subr.mxu0 0.0
    %948 = vmatpush1.msra.mxu0 0.0
    %949 = vmatprep.subr.mxu0 0.0
    %950 = vmatpush1.msra.mxu0 0.0
    %951 = vmatprep.subr.mxu0 0.0
    %952 = vmatpush1.msra.mxu0 0.0
    %953 = vmatprep.subr.mxu0 0.0
    %954 = vmatpush1.msra.mxu0 0.0
    %955 = vmatprep.subr.mxu0 0.0
    %956 = vmatpush1.msra.mxu0 0.0
    %957 = vmatprep.subr.mxu0 0.0
    %958 = vmatpush1.msra.mxu0 0.0
    %959 = vmatprep.subr.mxu0 0.0
    %960 = vmatpush1.msra.mxu0 0.0
    %961 = vmatprep.subr.mxu0 0.0
    %962 = vmatpush1.msra.mxu0 0.0
    %963 = vmatprep.subr.mxu0 0.0
    %964 = vmatpush1.msra.mxu0 0.0
    %965 = vmatprep.subr.mxu0 0.0
    %966 = vmatpush1.msra.mxu0 0.0
    %967 = vmatprep.subr.mxu0 0.0
    %968 = vmatpush1.msra.mxu0 0.0
    %969 = vmatprep.subr.mxu0 0.0
    %970 = vmatpush1.msra.mxu0 0.0
    %971 = vmatprep.subr.mxu0 0.0
    %972 = vmatpush1.msra.mxu0 0.0
    %973 = vmatprep.subr.mxu0 0.0
    %974 = vmatpush1.msra.mxu0 0.0
    %975 = vmatprep.subr.mxu0 0.0
    %976 = vmatpush1.msra.mxu0 0.0
    %977 = vmatprep.subr.mxu0 0.0
    %978 = vmatpush1.msra.mxu0 0.0
    %979 = vmatprep.subr.mxu0 0.0
    %980 = vmatpush1.msra.mxu0 0.0
    %981 = vmatprep.subr.mxu0 0.0
    %982 = vmatpush1.msra.mxu0 0.0
    %983 = vmatprep.subr.mxu0 0.0
    %984 = vmatpush1.msra.mxu0 0.0
    %985 = vmatprep.subr.mxu0 0.0
    %986 = vmatpush1.msra.mxu0 0.0
    %987 = vmatprep.mubr.f32.mxu0 0.0
    %988 = vmatmul.mubr.f32.gmra.mrb[0].mxu0 %v919
    %v989 = vpop.f32.mrb[0].mxu0
    %v990 = vadd.f32 0.0, %v989
    %v991 = vpop.f32.mrb[0].mxu0
    %992 = vdwg.mxu0
    %994 = vrot.lane.b32.xlu0 %v836, 8
    %v995 = vpop.permute.xlu0 %994
    %998 = vrot.lane.b32.xlu0 %v913, 16
    %v999 = vpop.permute.xlu0 %998
    %1002 = vrot.lane.b32.xlu0 %v990, 24
    %v1003 = vpop.permute.xlu0 %1002
    %v1005 = vsel %vm322, %v759, %v995
    %vm1006 = vcmask 130048
    %v1007 = vsel %vm1006, %v1005, %v999
    %vm1008 = vcmask 195584
    %v1009 = vsel %vm1008, %v1007, %v1003
    %v1010 = vld [vmem:[%s9] sm:$0xff]
    %v1011 = vld [vmem:[%s9 + $0x8] sm:$0xff]
    %v1012 = vld [vmem:[%s9 + $0x10] sm:$0xff]
    %v1013 = vld [vmem:[%s9 + $0x18] sm:$0xff]
    %v1014 = vld [vmem:[%s10] sm:$0x1]
    %v1016 = vlaneseq
    %v1017 = vshrl.u32 %v1016, 7
    %v1018 = vsub.s32 0, %v1017
    %v1019 = vrot.slane %v1014, %v1018
    %v1022 = vsel %vm239, %v1009, 0
    %1024 = vmatprep.subr.mxu0 0.0
    %1025 = vmatpush1.msra.mxu0 %v1010
    %1026 = vmatprep.subr.mxu0 0.0
    %1027 = vmatpush1.msra.mxu0 %v1011
    %1028 = vmatprep.subr.mxu0 0.0
    %1029 = vmatpush1.msra.mxu0 %v1012
    %1030 = vmatprep.subr.mxu0 0.0
    %1031 = vmatpush1.msra.mxu0 %v1013
    %1032 = vmatprep.subr.mxu0 0.0
    %1033 = vmatpush1.msra.mxu0 0.0
    %1034 = vmatprep.subr.mxu0 0.0
    %1035 = vmatpush1.msra.mxu0 0.0
    %1036 = vmatprep.subr.mxu0 0.0
    %1037 = vmatpush1.msra.mxu0 0.0
    %1038 = vmatprep.subr.mxu0 0.0
    %1039 = vmatpush1.msra.mxu0 0.0
    %1040 = vmatprep.subr.mxu0 0.0
    %1041 = vmatpush1.msra.mxu0 0.0
    %1042 = vmatprep.subr.mxu0 0.0
    %1043 = vmatpush1.msra.mxu0 0.0
    %1044 = vmatprep.subr.mxu0 0.0
    %1045 = vmatpush1.msra.mxu0 0.0
    %1046 = vmatprep.subr.mxu0 0.0
    %1047 = vmatpush1.msra.mxu0 0.0
    %1048 = vmatprep.subr.mxu0 0.0
    %1049 = vmatpush1.msra.mxu0 0.0
    %1050 = vmatprep.subr.mxu0 0.0
    %1051 = vmatpush1.msra.mxu0 0.0
    %1052 = vmatprep.subr.mxu0 0.0
    %1053 = vmatpush1.msra.mxu0 0.0
    %1054 = vmatprep.subr.mxu0 0.0
    %1055 = vmatpush1.msra.mxu0 0.0
    %1056 = vmatprep.subr.mxu0 0.0
    %1057 = vmatpush1.msra.mxu0 0.0
    %1058 = vmatprep.subr.mxu0 0.0
    %1059 = vmatpush1.msra.mxu0 0.0
    %1060 = vmatprep.subr.mxu0 0.0
    %1061 = vmatpush1.msra.mxu0 0.0
    %1062 = vmatprep.subr.mxu0 0.0
    %1063 = vmatpush1.msra.mxu0 0.0
    %1064 = vmatprep.subr.mxu0 0.0
    %1065 = vmatpush1.msra.mxu0 0.0
    %1066 = vmatprep.subr.mxu0 0.0
    %1067 = vmatpush1.msra.mxu0 0.0
    %1068 = vmatprep.subr.mxu0 0.0
    %1069 = vmatpush1.msra.mxu0 0.0
    %1070 = vmatprep.subr.mxu0 0.0
    %1071 = vmatpush1.msra.mxu0 0.0
    %1072 = vmatprep.subr.mxu0 0.0
    %1073 = vmatpush1.msra.mxu0 0.0
    %1074 = vmatprep.subr.mxu0 0.0
    %1075 = vmatpush1.msra.mxu0 0.0
    %1076 = vmatprep.subr.mxu0 0.0
    %1077 = vmatpush1.msra.mxu0 0.0
    %1078 = vmatprep.subr.mxu0 0.0
    %1079 = vmatpush1.msra.mxu0 0.0
    %1080 = vmatprep.subr.mxu0 0.0
    %1081 = vmatpush1.msra.mxu0 0.0
    %1082 = vmatprep.subr.mxu0 0.0
    %1083 = vmatpush1.msra.mxu0 0.0
    %1084 = vmatprep.subr.mxu0 0.0
    %1085 = vmatpush1.msra.mxu0 0.0
    %1086 = vmatprep.subr.mxu0 0.0
    %1087 = vmatpush1.msra.mxu0 0.0
    %1088 = vmatprep.mubr.f32.mxu0 0.0
    %1089 = vmatmul.mubr.f32.gmra.mrb[0].mxu0 %v1022
    %v1090 = vpop.f32.mrb[0].mxu0
    %v1091 = vadd.f32 %v1019, %v1090
    %v1092 = vpop.f32.mrb[0].mxu0
    %1093 = vdwg.mxu0
    %v1094 = vadd.f32 %v196, %v1091
    %v1095 = vld [vmem:[%s11] sm:$0x1]
    %v1096 = vld [vmem:[%s12] sm:$0x1]
    %v1097 = vsel %vm199, %v1094, 0.0
    %1098 = vadd.xlane.f32.xlu0 %v1097
    %v1099 = vpop.xlane.xlu0 %1098
    %v1100 = vmul.f32 %v1099, %v203
    %v1101 = vsub.f32 %v1094, %v1100
    %v1102 = vmul.f32 %v1101, %v1101
    %v1103 = vsel %vm199, %v1102, 0.0
    %1104 = vadd.xlane.f32.xlu0 %v1103
    %v1105 = vpop.xlane.xlu0 %1104
    %v1106 = vmul.f32 %v1105, %v203
    %v1107 = vadd.f32 %v1106, 1e-05
    %v1108 = vrsqrt.pop %v1107
    %v1109 = vmul.f32 %v1101, %v1108
    %v1111 = vlaneseq
    %v1112 = vshrl.u32 %v1111, 7
    %v1113 = vsub.s32 0, %v1112
    %v1114 = vrot.slane %v1095, %v1113
    %v1116 = vmul.f32 %v1109, %v1114
    %v1118 = vlaneseq
    %v1119 = vshrl.u32 %v1118, 7
    %v1120 = vsub.s32 0, %v1119
    %v1121 = vrot.slane %v1096, %v1120
    %v1123 = vadd.f32 %v1116, %v1121
    %v1124 = vld [vmem:[%s13] sm:$0xff]
    %v1125 = vld [vmem:[%s13 + $0x8] sm:$0xff]
    %v1126 = vld [vmem:[%s13 + $0x10] sm:$0xff]
    %v1127 = vld [vmem:[%s13 + $0x18] sm:$0xff]
    %v1128 = vld [vmem:[%s14] sm:$0x1]
    %v1130 = vlaneseq
    %v1131 = vshrl.u32 %v1130, 7
    %v1132 = vsub.s32 0, %v1131
    %v1133 = vrot.slane %v1128, %v1132
    %v1136 = vsel %vm239, %v1123, 0
    %1138 = vmatprep.subr.mxu0 0.0
    %1139 = vmatpush1.msra.mxu0 %v1124
    %1140 = vmatprep.subr.mxu0 0.0
    %1141 = vmatpush1.msra.mxu0 %v1125
    %1142 = vmatprep.subr.mxu0 0.0
    %1143 = vmatpush1.msra.mxu0 %v1126
    %1144 = vmatprep.subr.mxu0 0.0
    %1145 = vmatpush1.msra.mxu0 %v1127
    %1146 = vmatprep.subr.mxu0 0.0
    %1147 = vmatpush1.msra.mxu0 0.0
    %1148 = vmatprep.subr.mxu0 0.0
    %1149 = vmatpush1.msra.mxu0 0.0
    %1150 = vmatprep.subr.mxu0 0.0
    %1151 = vmatpush1.msra.mxu0 0.0
    %1152 = vmatprep.subr.mxu0 0.0
    %1153 = vmatpush1.msra.mxu0 0.0
    %1154 = vmatprep.subr.mxu0 0.0
    %1155 = vmatpush1.msra.mxu0 0.0
    %1156 = vmatprep.subr.mxu0 0.0
    %1157 = vmatpush1.msra.mxu0 0.0
    %1158 = vmatprep.subr.mxu0 0.0
    %1159 = vmatpush1.msra.mxu0 0.0
    %1160 = vmatprep.subr.mxu0 0.0
    %1161 = vmatpush1.msra.mxu0 0.0
    %1162 = vmatprep.subr.mxu0 0.0
    %1163 = vmatpush1.msra.mxu0 0.0
    %1164 = vmatprep.subr.mxu0 0.0
    %1165 = vmatpush1.msra.mxu0 0.0
    %1166 = vmatprep.subr.mxu0 0.0
    %1167 = vmatpush1.msra.mxu0 0.0
    %1168 = vmatprep.subr.mxu0 0.0
    %1169 = vmatpush1.msra.mxu0 0.0
    %1170 = vmatprep.subr.mxu0 0.0
    %1171 = vmatpush1.msra.mxu0 0.0
    %1172 = vmatprep.subr.mxu0 0.0
    %1173 = vmatpush1.msra.mxu0 0.0
    %1174 = vmatprep.subr.mxu0 0.0
    %1175 = vmatpush1.msra.mxu0 0.0
    %1176 = vmatprep.subr.mxu0 0.0
    %1177 = vmatpush1.msra.mxu0 0.0
    %1178 = vmatprep.subr.mxu0 0.0
    %1179 = vmatpush1.msra.mxu0 0.0
    %1180 = vmatprep.subr.mxu0 0.0
    %1181 = vmatpush1.msra.mxu0 0.0
    %1182 = vmatprep.subr.mxu0 0.0
    %1183 = vmatpush1.msra.mxu0 0.0
    %1184 = vmatprep.subr.mxu0 0.0
    %1185 = vmatpush1.msra.mxu0 0.0
    %1186 = vmatprep.subr.mxu0 0.0
    %1187 = vmatpush1.msra.mxu0 0.0
    %1188 = vmatprep.subr.mxu0 0.0
    %1189 = vmatpush1.msra.mxu0 0.0
    %1190 = vmatprep.subr.mxu0 0.0
    %1191 = vmatpush1.msra.mxu0 0.0
    %1192 = vmatprep.subr.mxu0 0.0
    %1193 = vmatpush1.msra.mxu0 0.0
    %1194 = vmatprep.subr.mxu0 0.0
    %1195 = vmatpush1.msra.mxu0 0.0
    %1196 = vmatprep.subr.mxu0 0.0
    %1197 = vmatpush1.msra.mxu0 0.0
    %1198 = vmatprep.subr.mxu0 0.0
    %1199 = vmatpush1.msra.mxu0 0.0
    %1200 = vmatprep.subr.mxu0 0.0
    %1201 = vmatpush1.msra.mxu0 0.0
    %1202 = vmatprep.mubr.f32.mxu0 0.0
    %1203 = vmatmul.mubr.f32.gmra.mrb[0].mxu0 %v1136
    %v1204 = vpop.f32.mrb[0].mxu0
    %v1205 = vadd.f32 %v1133, %v1204
    %v1206 = vpop.f32.mrb[0].mxu0
    %1207 = vdwg.mxu0
    %v1208 = vmul.f32 %v1205, 0.5
    %v1209 = vmul.f32 %v1205, 0.70710677
    %v1210 = verf.f32.pop %v1209
    %v1211 = vadd.f32 %v1210, 1.0
    %v1212 = vmul.f32 %v1208, %v1211
    %v1213 = vld [vmem:[%s15] sm:$0xff]
    %v1214 = vld [vmem:[%s15 + $0x8] sm:$0xff]
    %v1215 = vld [vmem:[%s15 + $0x10] sm:$0xff]
    %v1216 = vld [vmem:[%s15 + $0x18] sm:$0xff]
    %v1217 = vld [vmem:[%s15 + $0x20] sm:$0xff]
    %v1218 = vld [vmem:[%s15 + $0x28] sm:$0xff]
    %v1219 = vld [vmem:[%s15 + $0x30] sm:$0xff]
    %v1220 = vld [vmem:[%s15 + $0x38] sm:$0xff]
    %v1221 = vld [vmem:[%s16] sm:$0x1]
    %v1223 = vlaneseq
    %v1224 = vshrl.u32 %v1223, 7
    %v1225 = vsub.s32 0, %v1224
    %v1226 = vrot.slane %v1221, %v1225
    %vm1228 = vcmask 523264
    %v1230 = vsel %vm1228, %v1212, 0
    %1232 = vmatprep.subr.mxu0 0.0
    %1233 = vmatpush1.msra.mxu0 %v1213
    %1234 = vmatprep.subr.mxu0 0.0
    %1235 = vmatpush1.msra.mxu0 %v1214
    %1236 = vmatprep.subr.mxu0 0.0
    %1237 = vmatpush1.msra.mxu0 %v1215
    %1238 = vmatprep.subr.mxu0 0.0
    %1239 = vmatpush1.msra.mxu0 %v1216
    %1240 = vmatprep.subr.mxu0 0.0
    %1241 = vmatpush1.msra.mxu0 %v1217
    %1242 = vmatprep.subr.mxu0 0.0
    %1243 = vmatpush1.msra.mxu0 %v1218
    %1244 = vmatprep.subr.mxu0 0.0
    %1245 = vmatpush1.msra.mxu0 %v1219
    %1246 = vmatprep.subr.mxu0 0.0
    %1247 = vmatpush1.msra.mxu0 %v1220
    %1248 = vmatprep.subr.mxu0 0.0
    %1249 = vmatpush1.msra.mxu0 0.0
    %1250 = vmatprep.subr.mxu0 0.0
    %1251 = vmatpush1.msra.mxu0 0.0
    %1252 = vmatprep.subr.mxu0 0.0
    %1253 = vmatpush1.msra.mxu0 0.0
    %1254 = vmatprep.subr.mxu0 0.0
    %1255 = vmatpush1.msra.mxu0 0.0
    %1256 = vmatprep.subr.mxu0 0.0
    %1257 = vmatpush1.msra.mxu0 0.0
    %1258 = vmatprep.subr.mxu0 0.0
    %1259 = vmatpush1.msra.mxu0 0.0
    %1260 = vmatprep.subr.mxu0 0.0
    %1261 = vmatpush1.msra.mxu0 0.0
    %1262 = vmatprep.subr.mxu0 0.0
    %1263 = vmatpush1.msra.mxu0 0.0
    %1264 = vmatprep.subr.mxu0 0.0
    %1265 = vmatpush1.msra.mxu0 0.0
    %1266 = vmatprep.subr.mxu0 0.0
    %1267 = vmatpush1.msra.mxu0 0.0
    %1268 = vmatprep.subr.mxu0 0.0
    %1269 = vmatpush1.msra.mxu0 0.0
    %1270 = vmatprep.subr.mxu0 0.0
    %1271 = vmatpush1.msra.mxu0 0.0
    %1272 = vmatprep.subr.mxu0 0.0
    %1273 = vmatpush1.msra.mxu0 0.0
    %1274 = vmatprep.subr.mxu0 0.0
    %1275 = vmatpush1.msra.mxu0 0.0
    %1276 = vmatprep.subr.mxu0 0.0
    %1277 = vmatpush1.msra.mxu0 0.0
    %1278 = vmatprep.subr.mxu0 0.0
    %1279 = vmatpush1.msra.mxu0 0.0
    %1280 = vmatprep.subr.mxu0 0.0
    %1281 = vmatpush1.msra.mxu0 0.0
    %1282 = vmatprep.subr.mxu0 0.0
    %1283 = vmatpush1.msra.mxu0 0.0
    %1284 = vmatprep.subr.mxu0 0.0
    %1285 = vmatpush1.msra.mxu0 0.0
    %1286 = vmatprep.subr.mxu0 0.0
    %1287 = vmatpush1.msra.mxu0 0.0
    %1288 = vmatprep.subr.mxu0 0.0
    %1289 = vmatpush1.msra.mxu0 0.0
    %1290 = vmatprep.subr.mxu0 0.0
    %1291 = vmatpush1.msra.mxu0 0.0
    %1292 = vmatprep.subr.mxu0 0.0
    %1293 = vmatpush1.msra.mxu0 0.0
    %1294 = vmatprep.subr.mxu0 0.0
    %1295 = vmatpush1.msra.mxu0 0.0
    %1296 = vmatprep.mubr.f32.mxu0 0.0
    %1297 = vmatmul.mubr.f32.gmra.mrb[0].mxu0 %v1230
    %v1298 = vpop.f32.mrb[0].mxu0
    %v1299 = vadd.f32 %v1226, %v1298
    %v1300 = vpop.f32.mrb[0].mxu0
    %1301 = vdwg.mxu0
    %v1302 = vadd.f32 %v1094, %v1299
    %s1303 = scalar_lea.vmem %s5, 1
    %v1304 = vld [vmem:[%s1303] sm:$0x1]
    %s1305 = scalar_lea.vmem %s6, 1
    %v1306 = vld [vmem:[%s1305] sm:$0x1]
    %v1307 = vsel %vm199, %v1302, 0.0
    %1308 = vadd.xlane.f32.xlu0 %v1307
    %v1309 = vpop.xlane.xlu0 %1308
    %v1310 = vmul.f32 %v1309, %v203
    %v1311 = vsub.f32 %v1302, %v1310
    %v1312 = vmul.f32 %v1311, %v1311
    %v1313 = vsel %vm199, %v1312, 0.0
    %1314 = vadd.xlane.f32.xlu0 %v1313
    %v1315 = vpop.xlane.xlu0 %1314
    %v1316 = vmul.f32 %v1315, %v203
    %v1317 = vadd.f32 %v1316, 1e-05
    %v1318 = vrsqrt.pop %v1317
    %v1319 = vmul.f32 %v1311, %v1318
    %v1321 = vlaneseq
    %v1322 = vshrl.u32 %v1321, 7
    %v1323 = vsub.s32 0, %v1322
    %v1324 = vrot.slane %v1304, %v1323
    %v1326 = vmul.f32 %v1319, %v1324
    %v1328 = vlaneseq
    %v1329 = vshrl.u32 %v1328, 7
    %v1330 = vsub.s32 0, %v1329
    %v1331 = vrot.slane %v1306, %v1330
    %v1333 = vadd.f32 %v1326, %v1331
    %s1334 = scalar_lea.vmem %s7, 32
    %v1335 = vld [vmem:[%s1334] sm:$0xff]
    %v1336 = vld [vmem:[%s1334 + $0x8] sm:$0xff]
    %v1337 = vld [vmem:[%s1334 + $0x10] sm:$0xff]
    %v1338 = vld [vmem:[%s1334 + $0x18] sm:$0xff]
    %s1339 = scalar_lea.vmem %s8, 1
    %v1340 = vld [vmem:[%s1339] sm:$0x1]
    %v1342 = vlaneseq
    %v1343 = vshrl.u32 %v1342, 7
    %v1344 = vsub.s32 0, %v1343
    %v1345 = vrot.slane %v1340, %v1344
    %v1348 = vsel %vm239, %v1333, 0
    %1350 = vmatprep.subr.mxu0 0.0
    %1351 = vmatpush1.msra.mxu0 %v1335
    %1352 = vmatprep.subr.mxu0 0.0
    %1353 = vmatpush1.msra.mxu0 %v1336
    %1354 = vmatprep.subr.mxu0 0.0
    %1355 = vmatpush1.msra.mxu0 %v1337
    %1356 = vmatprep.subr.mxu0 0.0
    %1357 = vmatpush1.msra.mxu0 %v1338
    %1358 = vmatprep.subr.mxu0 0.0
    %1359 = vmatpush1.msra.mxu0 0.0
    %1360 = vmatprep.subr.mxu0 0.0
    %1361 = vmatpush1.msra.mxu0 0.0
    %1362 = vmatprep.subr.mxu0 0.0
    %1363 = vmatpush1.msra.mxu0 0.0
    %1364 = vmatprep.subr.mxu0 0.0
    %1365 = vmatpush1.msra.mxu0 0.0
    %1366 = vmatprep.subr.mxu0 0.0
    %1367 = vmatpush1.msra.mxu0 0.0
    %1368 = vmatprep.subr.mxu0 0.0
    %1369 = vmatpush1.msra.mxu0 0.0
    %1370 = vmatprep.subr.mxu0 0.0
    %1371 = vmatpush1.msra.mxu0 0.0
    %1372 = vmatprep.subr.mxu0 0.0
    %1373 = vmatpush1.msra.mxu0 0.0
    %1374 = vmatprep.subr.mxu0 0.0
    %1375 = vmatpush1.msra.mxu0 0.0
    %1376 = vmatprep.subr.mxu0 0.0
    %1377 = vmatpush1.msra.mxu0 0.0
    %1378 = vmatprep.subr.mxu0 0.0
    %1379 = vmatpush1.msra.mxu0 0.0
    %1380 = vmatprep.subr.mxu0 0.0
    %1381 = vmatpush1.msra.mxu0 0.0
    %1382 = vmatprep.subr.mxu0 0.0
    %1383 = vmatpush1.msra.mxu0 0.0
    %1384 = vmatprep.subr.mxu0 0.0
    %1385 = vmatpush1.msra.mxu0 0.0
    %1386 = vmatprep.subr.mxu0 0.0
    %1387 = vmatpush1.msra.mxu0 0.0
    %1388 = vmatprep.subr.mxu0 0.0
    %1389 = vmatpush1.msra.mxu0 0.0
    %1390 = vmatprep.subr.mxu0 0.0
    %1391 = vmatpush1.msra.mxu0 0.0
    %1392 = vmatprep.subr.mxu0 0.0
    %1393 = vmatpush1.msra.mxu0 0.0
    %1394 = vmatprep.subr.mxu0 0.0
    %1395 = vmatpush1.msra.mxu0 0.0
    %1396 = vmatprep.subr.mxu0 0.0
    %1397 = vmatpush1.msra.mxu0 0.0
    %1398 = vmatprep.subr.mxu0 0.0
    %1399 = vmatpush1.msra.mxu0 0.0
    %1400 = vmatprep.subr.mxu0 0.0
    %1401 = vmatpush1.msra.mxu0 0.0
    %1402 = vmatprep.subr.mxu0 0.0
    %1403 = vmatpush1.msra.mxu0 0.0
    %1404 = vmatprep.subr.mxu0 0.0
    %1405 = vmatpush1.msra.mxu0 0.0
    %1406 = vmatprep.subr.mxu0 0.0
    %1407 = vmatpush1.msra.mxu0 0.0
    %1408 = vmatprep.subr.mxu0 0.0
    %1409 = vmatpush1.msra.mxu0 0.0
    %1410 = vmatprep.subr.mxu0 0.0
    %1411 = vmatpush1.msra.mxu0 0.0
    %1412 = vmatprep.subr.mxu0 0.0
    %1413 = vmatpush1.msra.mxu0 0.0
    %1414 = vmatprep.mubr.f32.mxu0 0.0
    %1415 = vmatmul.mubr.f32.gmra.mrb[0].mxu0 %v1348
    %v1416 = vpop.f32.mrb[0].mxu0
    %v1417 = vadd.f32 %v1345, %v1416
    %v1418 = vpop.f32.mrb[0].mxu0
    %1419 = vdwg.mxu0
    %1421 = vrot.lane.b32.xlu0 %v1417, 120
    %v1422 = vpop.permute.xlu0 %1421
    %1423 = vrot.lane.b32.xlu0 %v1417, 112
    %v1424 = vpop.permute.xlu0 %1423
    %1425 = vrot.lane.b32.xlu0 %v1417, 104
    %v1426 = vpop.permute.xlu0 %1425
    %1427 = vrot.lane.b32.xlu0 %v1417, 96
    %v1428 = vpop.permute.xlu0 %1427
    %v1429 = vsel %vm322, %v1417, 0
    %v1431 = vsel %vm322, %v1428, 0
    %1433 = vmatprep.subr.mxu0 0.0
    %1434 = vmatpush1.xpose.msra.mxu0 %v1431
    %1435 = vmatprep.subr.mxu0 0.0
    %1436 = vmatpush1.xpose.msra.mxu0 0.0
    %1437 = vmatprep.subr.mxu0 0.0
    %1438 = vmatpush1.xpose.msra.mxu0 0.0
    %1439 = vmatprep.subr.mxu0 0.0
    %1440 = vmatpush1.xpose.msra.mxu0 0.0
    %1441 = vmatprep.subr.mxu0 0.0
    %1442 = vmatpush1.xpose.msra.mxu0 0.0
    %1443 = vmatprep.subr.mxu0 0.0
    %1444 = vmatpush1.xpose.msra.mxu0 0.0
    %1445 = vmatprep.subr.mxu0 0.0
    %1446 = vmatpush1.xpose.msra.mxu0 0.0
    %1447 = vmatprep.subr.mxu0 0.0
    %1448 = vmatpush1.xpose.msra.mxu0 0.0
    %1449 = vmatprep.subr.mxu0 0.0
    %1450 = vmatpush1.xpose.msra.mxu0 0.0
    %1451 = vmatprep.subr.mxu0 0.0
    %1452 = vmatpush1.xpose.msra.mxu0 0.0
    %1453 = vmatprep.subr.mxu0 0.0
    %1454 = vmatpush1.xpose.msra.mxu0 0.0
    %1455 = vmatprep.subr.mxu0 0.0
    %1456 = vmatpush1.xpose.msra.mxu0 0.0
    %1457 = vmatprep.subr.mxu0 0.0
    %1458 = vmatpush1.xpose.msra.mxu0 0.0
    %1459 = vmatprep.subr.mxu0 0.0
    %1460 = vmatpush1.xpose.msra.mxu0 0.0
    %1461 = vmatprep.subr.mxu0 0.0
    %1462 = vmatpush1.xpose.msra.mxu0 0.0
    %1463 = vmatprep.subr.mxu0 0.0
    %1464 = vmatpush1.xpose.msra.mxu0 0.0
    %1465 = vmatprep.subr.mxu0 0.0
    %1466 = vmatpush1.xpose.msra.mxu0 0.0
    %1467 = vmatprep.subr.mxu0 0.0
    %1468 = vmatpush1.xpose.msra.mxu0 0.0
    %1469 = vmatprep.subr.mxu0 0.0
    %1470 = vmatpush1.xpose.msra.mxu0 0.0
    %1471 = vmatprep.subr.mxu0 0.0
    %1472 = vmatpush1.xpose.msra.mxu0 0.0
    %1473 = vmatprep.subr.mxu0 0.0
    %1474 = vmatpush1.xpose.msra.mxu0 0.0
    %1475 = vmatprep.subr.mxu0 0.0
    %1476 = vmatpush1.xpose.msra.mxu0 0.0
    %1477 = vmatprep.subr.mxu0 0.0
    %1478 = vmatpush1.xpose.msra.mxu0 0.0
    %1479 = vmatprep.subr.mxu0 0.0
    %1480 = vmatpush1.xpose.msra.mxu0 0.0
    %1481 = vmatprep.subr.mxu0 0.0
    %1482 = vmatpush1.xpose.msra.mxu0 0.0
    %1483 = vmatprep.subr.mxu0 0.0
    %1484 = vmatpush1.xpose.msra.mxu0 0.0
    %1485 = vmatprep.subr.mxu0 0.0
    %1486 = vmatpush1.xpose.msra.mxu0 0.0
    %1487 = vmatprep.subr.mxu0 0.0
    %1488 = vmatpush1.xpose.msra.mxu0 0.0
    %1489 = vmatprep.subr.mxu0 0.0
    %1490 = vmatpush1.xpose.msra.mxu0 0.0
    %1491 = vmatprep.subr.mxu0 0.0
    %1492 = vmatpush1.xpose.msra.mxu0 0.0
    %1493 = vmatprep.subr.mxu0 0.0
    %1494 = vmatpush1.xpose.msra.mxu0 0.0
    %1495 = vmatprep.subr.mxu0 0.0
    %1496 = vmatpush1.xpose.msra.mxu0 0.0
    %1497 = vmatprep.mubr.f32.mxu0 0.0
    %1498 = vmatmul.mubr.f32.gmra.mrb[0].mxu0 %v1429
    %v1499 = vpop.f32.mrb[0].mxu0
    %v1500 = vadd.f32 0.0, %v1499
    %v1501 = vpop.f32.mrb[0].mxu0
    %1502 = vdwg.mxu0
    %1503 = vrot.lane.b32.xlu0 %v1422, 96
    %v1504 = vpop.permute.xlu0 %1503
    %v1505 = vsel %vm322, %v1422, 0
    %v1507 = vsel %vm322, %v1504, 0
    %1509 = vmatprep.subr.mxu0 0.0
    %1510 = vmatpush1.xpose.msra.mxu0 %v1507
    %1511 = vmatprep.subr.mxu0 0.0
    %1512 = vmatpush1.xpose.msra.mxu0 0.0
    %1513 = vmatprep.subr.mxu0 0.0
    %1514 = vmatpush1.xpose.msra.mxu0 0.0
    %1515 = vmatprep.subr.mxu0 0.0
    %1516 = vmatpush1.xpose.msra.mxu0 0.0
    %1517 = vmatprep.subr.mxu0 0.0
    %1518 = vmatpush1.xpose.msra.mxu0 0.0
    %1519 = vmatprep.subr.mxu0 0.0
    %1520 = vmatpush1.xpose.msra.mxu0 0.0
    %1521 = vmatprep.subr.mxu0 0.0
    %1522 = vmatpush1.xpose.msra.mxu0 0.0
    %1523 = vmatprep.subr.mxu0 0.0
    %1524 = vmatpush1.xpose.msra.mxu0 0.0
    %1525 = vmatprep.subr.mxu0 0.0
    %1526 = vmatpush1.xpose.msra.mxu0 0.0
    %1527 = vmatprep.subr.mxu0 0.0
    %1528 = vmatpush1.xpose.msra.mxu0 0.0
    %1529 = vmatprep.subr.mxu0 0.0
    %1530 = vmatpush1.xpose.msra.mxu0 0.0
    %1531 = vmatprep.subr.mxu0 0.0
    %1532 = vmatpush1.xpose.msra.mxu0 0.0
    %1533 = vmatprep.subr.mxu0 0.0
    %1534 = vmatpush1.xpose.msra.mxu0 0.0
    %1535 = vmatprep.subr.mxu0 0.0
    %1536 = vmatpush1.xpose.msra.mxu0 0.0
    %1537 = vmatprep.subr.mxu0 0.0
    %1538 = vmatpush1.xpose.msra.mxu0 0.0
    %1539 = vmatprep.subr.mxu0 0.0
    %1540 = vmatpush1.xpose.msra.mxu0 0.0
    %1541 = vmatprep.subr.mxu0 0.0
    %1542 = vmatpush1.xpose.msra.mxu0 0.0
    %1543 = vmatprep.subr.mxu0 0.0
    %1544 = vmatpush1.xpose.msra.mxu0 0.0
    %1545 = vmatprep.subr.mxu0 0.0
    %1546 = vmatpush1.xpose.msra.mxu0 0.0
    %1547 = vmatprep.subr.mxu0 0.0
    %1548 = vmatpush1.xpose.msra.mxu0 0.0
    %1549 = vmatprep.subr.mxu0 0.0
    %1550 = vmatpush1.xpose.msra.mxu0 0.0
    %1551 = vmatprep.subr.mxu0 0.0
    %1552 = vmatpush1.xpose.msra.mxu0 0.0
    %1553 = vmatprep.subr.mxu0 0.0
    %1554 = vmatpush1.xpose.msra.mxu0 0.0
    %1555 = vmatprep.subr.mxu0 0.0
    %1556 = vmatpush1.xpose.msra.mxu0 0.0
    %1557 = vmatprep.subr.mxu0 0.0
    %1558 = vmatpush1.xpose.msra.mxu0 0.0
    %1559 = vmatprep.subr.mxu0 0.0
    %1560 = vmatpush1.xpose.msra.mxu0 0.0
    %1561 = vmatprep.subr.mxu0 0.0
    %1562 = vmatpush1.xpose.msra.mxu0 0.0
    %1563 = vmatprep.subr.mxu0 0.0
    %1564 = vmatpush1.xpose.msra.mxu0 0.0
    %1565 = vmatprep.subr.mxu0 0.0
    %1566 = vmatpush1.xpose.msra.mxu0 0.0
    %1567 = vmatprep.subr.mxu0 0.0
    %1568 = vmatpush1.xpose.msra.mxu0 0.0
    %1569 = vmatprep.subr.mxu0 0.0
    %1570 = vmatpush1.xpose.msra.mxu0 0.0
    %1571 = vmatprep.subr.mxu0 0.0
    %1572 = vmatpush1.xpose.msra.mxu0 0.0
    %1573 = vmatprep.mubr.f32.mxu0 0.0
    %1574 = vmatmul.mubr.f32.gmra.mrb[0].mxu0 %v1505
    %v1575 = vpop.f32.mrb[0].mxu0
    %v1576 = vadd.f32 0.0, %v1575
    %v1577 = vpop.f32.mrb[0].mxu0
    %1578 = vdwg.mxu0
    %1579 = vrot.lane.b32.xlu0 %v1424, 96
    %v1580 = vpop.permute.xlu0 %1579
    %v1581 = vsel %vm322, %v1424, 0
    %v1583 = vsel %vm322, %v1580, 0
    %1585 = vmatprep.subr.mxu0 0.0
    %1586 = vmatpush1.xpose.msra.mxu0 %v1583
    %1587 = vmatprep.subr.mxu0 0.0
    %1588 = vmatpush1.xpose.msra.mxu0 0.0
    %1589 = vmatprep.subr.mxu0 0.0
    %1590 = vmatpush1.xpose.msra.mxu0 0.0
    %1591 = vmatprep.subr.mxu0 0.0
    %1592 = vmatpush1.xpose.msra.mxu0 0.0
    %1593 = vmatprep.subr.mxu0 0.0
    %1594 = vmatpush1.xpose.msra.mxu0 0.0
    %1595 = vmatprep.subr.mxu0 0.0
    %1596 = vmatpush1.xpose.msra.mxu0 0.0
    %1597 = vmatprep.subr.mxu0 0.0
    %1598 = vmatpush1.xpose.msra.mxu0 0.0
    %1599 = vmatprep.subr.mxu0 0.0
    %1600 = vmatpush1.xpose.msra.mxu0 0.0
    %1601 = vmatprep.subr.mxu0 0.0
    %1602 = vmatpush1.xpose.msra.mxu0 0.0
    %1603 = vmatprep.subr.mxu0 0.0
    %1604 = vmatpush1.xpose.msra.mxu0 0.0
    %1605 = vmatprep.subr.mxu0 0.0
    %1606 = vmatpush1.xpose.msra.mxu0 0.0
    %1607 = vmatprep.subr.mxu0 0.0
    %1608 = vmatpush1.xpose.msra.mxu0 0.0
    %1609 = vmatprep.subr.mxu0 0.0
    %1610 = vmatpush1.xpose.msra.mxu0 0.0
    %1611 = vmatprep.subr.mxu0 0.0
    %1612 = vmatpush1.xpose.msra.mxu0 0.0
    %1613 = vmatprep.subr.mxu0 0.0
    %1614 = vmatpush1.xpose.msra.mxu0 0.0
    %1615 = vmatprep.subr.mxu0 0.0
    %1616 = vmatpush1.xpose.msra.mxu0 0.0
    %1617 = vmatprep.subr.mxu0 0.0
    %1618 = vmatpush1.xpose.msra.mxu0 0.0
    %1619 = vmatprep.subr.mxu0 0.0
    %1620 = vmatpush1.xpose.msra.mxu0 0.0
    %1621 = vmatprep.subr.mxu0 0.0
    %1622 = vmatpush1.xpose.msra.mxu0 0.0
    %1623 = vmatprep.subr.mxu0 0.0
    %1624 = vmatpush1.xpose.msra.mxu0 0.0
    %1625 = vmatprep.subr.mxu0 0.0
    %1626 = vmatpush1.xpose.msra.mxu0 0.0
    %1627 = vmatprep.subr.mxu0 0.0
    %1628 = vmatpush1.xpose.msra.mxu0 0.0
    %1629 = vmatprep.subr.mxu0 0.0
    %1630 = vmatpush1.xpose.msra.mxu0 0.0
    %1631 = vmatprep.subr.mxu0 0.0
    %1632 = vmatpush1.xpose.msra.mxu0 0.0
    %1633 = vmatprep.subr.mxu0 0.0
    %1634 = vmatpush1.xpose.msra.mxu0 0.0
    %1635 = vmatprep.subr.mxu0 0.0
    %1636 = vmatpush1.xpose.msra.mxu0 0.0
    %1637 = vmatprep.subr.mxu0 0.0
    %1638 = vmatpush1.xpose.msra.mxu0 0.0
    %1639 = vmatprep.subr.mxu0 0.0
    %1640 = vmatpush1.xpose.msra.mxu0 0.0
    %1641 = vmatprep.subr.mxu0 0.0
    %1642 = vmatpush1.xpose.msra.mxu0 0.0
    %1643 = vmatprep.subr.mxu0 0.0
    %1644 = vmatpush1.xpose.msra.mxu0 0.0
    %1645 = vmatprep.subr.mxu0 0.0
    %1646 = vmatpush1.xpose.msra.mxu0 0.0
    %1647 = vmatprep.subr.mxu0 0.0
    %1648 = vmatpush1.xpose.msra.mxu0 0.0
    %1649 = vmatprep.mubr.f32.mxu0 0.0
    %1650 = vmatmul.mubr.f32.gmra.mrb[0].mxu0 %v1581
    %v1651 = vpop.f32.mrb[0].mxu0
    %v1652 = vadd.f32 0.0, %v1651
    %v1653 = vpop.f32.mrb[0].mxu0
    %1654 = vdwg.mxu0
    %1655 = vrot.lane.b32.xlu0 %v1426, 96
    %v1656 = vpop.permute.xlu0 %1655
    %v1657 = vsel %vm322, %v1426, 0
    %v1659 = vsel %vm322, %v1656, 0
    %1661 = vmatprep.subr.mxu0 0.0
    %1662 = vmatpush1.xpose.msra.mxu0 %v1659
    %1663 = vmatprep.subr.mxu0 0.0
    %1664 = vmatpush1.xpose.msra.mxu0 0.0
    %1665 = vmatprep.subr.mxu0 0.0
    %1666 = vmatpush1.xpose.msra.mxu0 0.0
    %1667 = vmatprep.subr.mxu0 0.0
    %1668 = vmatpush1.xpose.msra.mxu0 0.0
    %1669 = vmatprep.subr.mxu0 0.0
    %1670 = vmatpush1.xpose.msra.mxu0 0.0
    %1671 = vmatprep.subr.mxu0 0.0
    %1672 = vmatpush1.xpose.msra.mxu0 0.0
    %1673 = vmatprep.subr.mxu0 0.0
    %1674 = vmatpush1.xpose.msra.mxu0 0.0
    %1675 = vmatprep.subr.mxu0 0.0
    %1676 = vmatpush1.xpose.msra.mxu0 0.0
    %1677 = vmatprep.subr.mxu0 0.0
    %1678 = vmatpush1.xpose.msra.mxu0 0.0
    %1679 = vmatprep.subr.mxu0 0.0
    %1680 = vmatpush1.xpose.msra.mxu0 0.0
    %1681 = vmatprep.subr.mxu0 0.0
    %1682 = vmatpush1.xpose.msra.mxu0 0.0
    %1683 = vmatprep.subr.mxu0 0.0
    %1684 = vmatpush1.xpose.msra.mxu0 0.0
    %1685 = vmatprep.subr.mxu0 0.0
    %1686 = vmatpush1.xpose.msra.mxu0 0.0
    %1687 = vmatprep.subr.mxu0 0.0
    %1688 = vmatpush1.xpose.msra.mxu0 0.0
    %1689 = vmatprep.subr.mxu0 0.0
    %1690 = vmatpush1.xpose.msra.mxu0 0.0
    %1691 = vmatprep.subr.mxu0 0.0
    %1692 = vmatpush1.xpose.msra.mxu0 0.0
    %1693 = vmatprep.subr.mxu0 0.0
    %1694 = vmatpush1.xpose.msra.mxu0 0.0
    %1695 = vmatprep.subr.mxu0 0.0
    %1696 = vmatpush1.xpose.msra.mxu0 0.0
    %1697 = vmatprep.subr.mxu0 0.0
    %1698 = vmatpush1.xpose.msra.mxu0 0.0
    %1699 = vmatprep.subr.mxu0 0.0
    %1700 = vmatpush1.xpose.msra.mxu0 0.0
    %1701 = vmatprep.subr.mxu0 0.0
    %1702 = vmatpush1.xpose.msra.mxu0 0.0
    %1703 = vmatprep.subr.mxu0 0.0
    %1704 = vmatpush1.xpose.msra.mxu0 0.0
    %1705 = vmatprep.subr.mxu0 0.0
    %1706 = vmatpush1.xpose.msra.mxu0 0.0
    %1707 = vmatprep.subr.mxu0 0.0
    %1708 = vmatpush1.xpose.msra.mxu0 0.0
    %1709 = vmatprep.subr.mxu0 0.0
    %1710 = vmatpush1.xpose.msra.mxu0 0.0
    %1711 = vmatprep.subr.mxu0 0.0
    %1712 = vmatpush1.xpose.msra.mxu0 0.0
    %1713 = vmatprep.subr.mxu0 0.0
    %1714 = vmatpush1.xpose.msra.mxu0 0.0
    %1715 = vmatprep.subr.mxu0 0.0
    %1716 = vmatpush1.xpose.msra.mxu0 0.0
    %1717 = vmatprep.subr.mxu0 0.0
    %1718 = vmatpush1.xpose.msra.mxu0 0.0
    %1719 = vmatprep.subr.mxu0 0.0
    %1720 = vmatpush1.xpose.msra.mxu0 0.0
    %1721 = vmatprep.subr.mxu0 0.0
    %1722 = vmatpush1.xpose.msra.mxu0 0.0
    %1723 = vmatprep.subr.mxu0 0.0
    %1724 = vmatpush1.xpose.msra.mxu0 0.0
    %1725 = vmatprep.mubr.f32.mxu0 0.0
    %1726 = vmatmul.mubr.f32.gmra.mrb[0].mxu0 %v1657
    %v1727 = vpop.f32.mrb[0].mxu0
    %v1728 = vadd.f32 0.0, %v1727
    %v1729 = vpop.f32.mrb[0].mxu0
    %1730 = vdwg.mxu0
    %v1731 = vmul.f32 %v1500, 0.35355338
    %v1732 = vmul.f32 %v1576, 0.35355338
    %v1733 = vmul.f32 %v1652, 0.35355338
    %v1734 = vmul.f32 %v1728, 0.35355338
    %v1735 = vsel %vm629, %v1731, -inf
    %1736 = vmax.xlane.f32.xlu0 %v1735
    %v1737 = vpop.xlane.xlu0 %1736
    %v1738 = vsel %vm629, %v1732, -inf
    %1739 = vmax.xlane.f32.xlu0 %v1738
    %v1740 = vpop.xlane.xlu0 %1739
    %v1741 = vsel %vm629, %v1733, -inf
    %1742 = vmax.xlane.f32.xlu0 %v1741
    %v1743 = vpop.xlane.xlu0 %1742
    %v1744 = vsel %vm629, %v1734, -inf
    %1745 = vmax.xlane.f32.xlu0 %v1744
    %v1746 = vpop.xlane.xlu0 %1745
    %v1747 = vsub.f32 %v1731, %v1737
    %v1748 = vsub.f32 %v1732, %v1740
    %v1749 = vsub.f32 %v1733, %v1743
    %v1750 = vsub.f32 %v1734, %v1746
    %v1751 = vmul.f32 %v1747, 1.442695
    %v1752 = vpow.pop %v1751
    %v1753 = vmul.f32 %v1748, 1.442695
    %v1754 = vpow.pop %v1753
    %v1755 = vmul.f32 %v1749, 1.442695
    %v1756 = vpow.pop %v1755
    %v1757 = vmul.f32 %v1750, 1.442695
    %v1758 = vpow.pop %v1757
    %v1759 = vsel %vm629, %v1752, 0.0
    %1760 = vadd.xlane.f32.xlu0 %v1759
    %v1761 = vpop.xlane.xlu0 %1760
    %v1762 = vsel %vm629, %v1754, 0.0
    %1763 = vadd.xlane.f32.xlu0 %v1762
    %v1764 = vpop.xlane.xlu0 %1763
    %v1765 = vsel %vm629, %v1756, 0.0
    %1766 = vadd.xlane.f32.xlu0 %v1765
    %v1767 = vpop.xlane.xlu0 %1766
    %v1768 = vsel %vm629, %v1758, 0.0
    %1769 = vadd.xlane.f32.xlu0 %v1768
    %v1770 = vpop.xlane.xlu0 %1769
    %v1771 = vrcp.pop %v1761
    %v1772 = vrcp.pop %v1764
    %v1773 = vrcp.pop %v1767
    %v1774 = vrcp.pop %v1770
    %v1775 = vmul.f32 %v1752, %v1771
    %v1776 = vmul.f32 %v1754, %v1772
    %v1777 = vmul.f32 %v1756, %v1773
    %v1778 = vmul.f32 %v1758, %v1774
    %v1779 = vsel %vm629, %v1775, 0.0
    %v1780 = vsel %vm629, %v1776, 0.0
    %v1781 = vadd.f32 %v1779, %v1780
    %v1782 = vsel %vm629, %v1777, 0.0
    %v1783 = vadd.f32 %v1781, %v1782
    %v1784 = vsel %vm629, %v1778, 0.0
    %v1785 = vadd.f32 %v1783, %v1784
    %v1786 = vmul.f32 %v1785, %v681
    %1787 = vrot.lane.b32.xlu0 %v1417, 64
    %v1788 = vpop.permute.xlu0 %1787
    %v1790 = vsel %vm685, %v1775, 0
    %v1792 = vsel %vm689, %v1788, 0
    %1794 = vmatprep.subr.mxu0 0.0
    %1795 = vmatpush1.msra.mxu0 %v1792
    %1796 = vmatprep.subr.mxu0 0.0
    %1797 = vmatpush1.msra.mxu0 0.0
    %1798 = vmatprep.subr.mxu0 0.0
    %1799 = vmatpush1.msra.mxu0 0.0
    %1800 = vmatprep.subr.mxu0 0.0
    %1801 = vmatpush1.msra.mxu0 0.0
    %1802 = vmatprep.subr.mxu0 0.0
    %1803 = vmatpush1.msra.mxu0 0.0
    %1804 = vmatprep.subr.mxu0 0.0
    %1805 = vmatpush1.msra.mxu0 0.0
    %1806 = vmatprep.subr.mxu0 0.0
    %1807 = vmatpush1.msra.mxu0 0.0
    %1808 = vmatprep.subr.mxu0 0.0
    %1809 = vmatpush1.msra.mxu0 0.0
    %1810 = vmatprep.subr.mxu0 0.0
    %1811 = vmatpush1.msra.mxu0 0.0
    %1812 = vmatprep.subr.mxu0 0.0
    %1813 = vmatpush1.msra.mxu0 0.0
    %1814 = vmatprep.subr.mxu0 0.0
    %1815 = vmatpush1.msra.mxu0 0.0
    %1816 = vmatprep.subr.mxu0 0.0
    %1817 = vmatpush1.msra.mxu0 0.0
    %1818 = vmatprep.subr.mxu0 0.0
    %1819 = vmatpush1.msra.mxu0 0.0
    %1820 = vmatprep.subr.mxu0 0.0
    %1821 = vmatpush1.msra.mxu0 0.0
    %1822 = vmatprep.subr.mxu0 0.0
    %1823 = vmatpush1.msra.mxu0 0.0
    %1824 = vmatprep.subr.mxu0 0.0
    %1825 = vmatpush1.msra.mxu0 0.0
    %1826 = vmatprep.subr.mxu0 0.0
    %1827 = vmatpush1.msra.mxu0 0.0
    %1828 = vmatprep.subr.mxu0 0.0
    %1829 = vmatpush1.msra.mxu0 0.0
    %1830 = vmatprep.subr.mxu0 0.0
    %1831 = vmatpush1.msra.mxu0 0.0
    %1832 = vmatprep.subr.mxu0 0.0
    %1833 = vmatpush1.msra.mxu0 0.0
    %1834 = vmatprep.subr.mxu0 0.0
    %1835 = vmatpush1.msra.mxu0 0.0
    %1836 = vmatprep.subr.mxu0 0.0
    %1837 = vmatpush1.msra.mxu0 0.0
    %1838 = vmatprep.subr.mxu0 0.0
    %1839 = vmatpush1.msra.mxu0 0.0
    %1840 = vmatprep.subr.mxu0 0.0
    %1841 = vmatpush1.msra.mxu0 0.0
    %1842 = vmatprep.subr.mxu0 0.0
    %1843 = vmatpush1.msra.mxu0 0.0
    %1844 = vmatprep.subr.mxu0 0.0
    %1845 = vmatpush1.msra.mxu0 0.0
    %1846 = vmatprep.subr.mxu0 0.0
    %1847 = vmatpush1.msra.mxu0 0.0
    %1848 = vmatprep.subr.mxu0 0.0
    %1849 = vmatpush1.msra.mxu0 0.0
    %1850 = vmatprep.subr.mxu0 0.0
    %1851 = vmatpush1.msra.mxu0 0.0
    %1852 = vmatprep.subr.mxu0 0.0
    %1853 = vmatpush1.msra.mxu0 0.0
    %1854 = vmatprep.subr.mxu0 0.0
    %1855 = vmatpush1.msra.mxu0 0.0
    %1856 = vmatprep.subr.mxu0 0.0
    %1857 = vmatpush1.msra.mxu0 0.0
    %1858 = vmatprep.mubr.f32.mxu0 0.0
    %1859 = vmatmul.mubr.f32.gmra.mrb[0].mxu0 %v1790
    %v1860 = vpop.f32.mrb[0].mxu0
    %v1861 = vadd.f32 0.0, %v1860
    %v1862 = vpop.f32.mrb[0].mxu0
    %1863 = vdwg.mxu0
    %1864 = vrot.lane.b32.xlu0 %v1422, 64
    %v1865 = vpop.permute.xlu0 %1864
    %v1867 = vsel %vm685, %v1776, 0
    %v1869 = vsel %vm689, %v1865, 0
    %1871 = vmatprep.subr.mxu0 0.0
    %1872 = vmatpush1.msra.mxu0 %v1869
    %1873 = vmatprep.subr.mxu0 0.0
    %1874 = vmatpush1.msra.mxu0 0.0
    %1875 = vmatprep.subr.mxu0 0.0
    %1876 = vmatpush1.msra.mxu0 0.0
    %1877 = vmatprep.subr.mxu0 0.0
    %1878 = vmatpush1.msra.mxu0 0.0
    %1879 = vmatprep.subr.mxu0 0.0
    %1880 = vmatpush1.msra.mxu0 0.0
    %1881 = vmatprep.subr.mxu0 0.0
    %1882 = vmatpush1.msra.mxu0 0.0
    %1883 = vmatprep.subr.mxu0 0.0
    %1884 = vmatpush1.msra.mxu0 0.0
    %1885 = vmatprep.subr.mxu0 0.0
    %1886 = vmatpush1.msra.mxu0 0.0
    %1887 = vmatprep.subr.mxu0 0.0
    %1888 = vmatpush1.msra.mxu0 0.0
    %1889 = vmatprep.subr.mxu0 0.0
    %1890 = vmatpush1.msra.mxu0 0.0
    %1891 = vmatprep.subr.mxu0 0.0
    %1892 = vmatpush1.msra.mxu0 0.0
    %1893 = vmatprep.subr.mxu0 0.0
    %1894 = vmatpush1.msra.mxu0 0.0
    %1895 = vmatprep.subr.mxu0 0.0
    %1896 = vmatpush1.msra.mxu0 0.0
    %1897 = vmatprep.subr.mxu0 0.0
    %1898 = vmatpush1.msra.mxu0 0.0
    %1899 = vmatprep.subr.mxu0 0.0
    %1900 = vmatpush1.msra.mxu0 0.0
    %1901 = vmatprep.subr.mxu0 0.0
    %1902 = vmatpush1.msra.mxu0 0.0
    %1903 = vmatprep.subr.mxu0 0.0
    %1904 = vmatpush1.msra.mxu0 0.0
    %1905 = vmatprep.subr.mxu0 0.0
    %1906 = vmatpush1.msra.mxu0 0.0
    %1907 = vmatprep.subr.mxu0 0.0
    %1908 = vmatpush1.msra.mxu0 0.0
    %1909 = vmatprep.subr.mxu0 0.0
    %1910 = vmatpush1.msra.mxu0 0.0
    %1911 = vmatprep.subr.mxu0 0.0
    %1912 = vmatpush1.msra.mxu0 0.0
    %1913 = vmatprep.subr.mxu0 0.0
    %1914 = vmatpush1.msra.mxu0 0.0
    %1915 = vmatprep.subr.mxu0 0.0
    %1916 = vmatpush1.msra.mxu0 0.0
    %1917 = vmatprep.subr.mxu0 0.0
    %1918 = vmatpush1.msra.mxu0 0.0
    %1919 = vmatprep.subr.mxu0 0.0
    %1920 = vmatpush1.msra.mxu0 0.0
    %1921 = vmatprep.subr.mxu0 0.0
    %1922 = vmatpush1.msra.mxu0 0.0
    %1923 = vmatprep.subr.mxu0 0.0
    %1924 = vmatpush1.msra.mxu0 0.0
    %1925 = vmatprep.subr.mxu0 0.0
    %1926 = vmatpush1.msra.mxu0 0.0
    %1927 = vmatprep.subr.mxu0 0.0
    %1928 = vmatpush1.msra.mxu0 0.0
    %1929 = vmatprep.subr.mxu0 0.0
    %1930 = vmatpush1.msra.mxu0 0.0
    %1931 = vmatprep.subr.mxu0 0.0
    %1932 = vmatpush1.msra.mxu0 0.0
    %1933 = vmatprep.subr.mxu0 0.0
    %1934 = vmatpush1.msra.mxu0 0.0
    %1935 = vmatprep.mubr.f32.mxu0 0.0
    %1936 = vmatmul.mubr.f32.gmra.mrb[0].mxu0 %v1867
    %v1937 = vpop.f32.mrb[0].mxu0
    %v1938 = vadd.f32 0.0, %v1937
    %v1939 = vpop.f32.mrb[0].mxu0
    %1940 = vdwg.mxu0
    %1941 = vrot.lane.b32.xlu0 %v1424, 64
    %v1942 = vpop.permute.xlu0 %1941
    %v1944 = vsel %vm685, %v1777, 0
    %v1946 = vsel %vm689, %v1942, 0
    %1948 = vmatprep.subr.mxu0 0.0
    %1949 = vmatpush1.msra.mxu0 %v1946
    %1950 = vmatprep.subr.mxu0 0.0
    %1951 = vmatpush1.msra.mxu0 0.0
    %1952 = vmatprep.subr.mxu0 0.0
    %1953 = vmatpush1.msra.mxu0 0.0
    %1954 = vmatprep.subr.mxu0 0.0
    %1955 = vmatpush1.msra.mxu0 0.0
    %1956 = vmatprep.subr.mxu0 0.0
    %1957 = vmatpush1.msra.mxu0 0.0
    %1958 = vmatprep.subr.mxu0 0.0
    %1959 = vmatpush1.msra.mxu0 0.0
    %1960 = vmatprep.subr.mxu0 0.0
    %1961 = vmatpush1.msra.mxu0 0.0
    %1962 = vmatprep.subr.mxu0 0.0
    %1963 = vmatpush1.msra.mxu0 0.0
    %1964 = vmatprep.subr.mxu0 0.0
    %1965 = vmatpush1.msra.mxu0 0.0
    %1966 = vmatprep.subr.mxu0 0.0
    %1967 = vmatpush1.msra.mxu0 0.0
    %1968 = vmatprep.subr.mxu0 0.0
    %1969 = vmatpush1.msra.mxu0 0.0
    %1970 = vmatprep.subr.mxu0 0.0
    %1971 = vmatpush1.msra.mxu0 0.0
    %1972 = vmatprep.subr.mxu0 0.0
    %1973 = vmatpush1.msra.mxu0 0.0
    %1974 = vmatprep.subr.mxu0 0.0
    %1975 = vmatpush1.msra.mxu0 0.0
    %1976 = vmatprep.subr.mxu0 0.0
    %1977 = vmatpush1.msra.mxu0 0.0
    %1978 = vmatprep.subr.mxu0 0.0
    %1979 = vmatpush1.msra.mxu0 0.0
    %1980 = vmatprep.subr.mxu0 0.0
    %1981 = vmatpush1.msra.mxu0 0.0
    %1982 = vmatprep.subr.mxu0 0.0
    %1983 = vmatpush1.msra.mxu0 0.0
    %1984 = vmatprep.subr.mxu0 0.0
    %1985 = vmatpush1.msra.mxu0 0.0
    %1986 = vmatprep.subr.mxu0 0.0
    %1987 = vmatpush1.msra.mxu0 0.0
    %1988 = vmatprep.subr.mxu0 0.0
    %1989 = vmatpush1.msra.mxu0 0.0
    %1990 = vmatprep.subr.mxu0 0.0
    %1991 = vmatpush1.msra.mxu0 0.0
    %1992 = vmatprep.subr.mxu0 0.0
    %1993 = vmatpush1.msra.mxu0 0.0
    %1994 = vmatprep.subr.mxu0 0.0
    %1995 = vmatpush1.msra.mxu0 0.0
    %1996 = vmatprep.subr.mxu0 0.0
    %1997 = vmatpush1.msra.mxu0 0.0
    %1998 = vmatprep.subr.mxu0 0.0
    %1999 = vmatpush1.msra.mxu0 0.0
    %2000 = vmatprep.subr.mxu0 0.0
    %2001 = vmatpush1.msra.mxu0 0.0
    %2002 = vmatprep.subr.mxu0 0.0
    %2003 = vmatpush1.msra.mxu0 0.0
    %2004 = vmatprep.subr.mxu0 0.0
    %2005 = vmatpush1.msra.mxu0 0.0
    %2006 = vmatprep.subr.mxu0 0.0
    %2007 = vmatpush1.msra.mxu0 0.0
    %2008 = vmatprep.subr.mxu0 0.0
    %2009 = vmatpush1.msra.mxu0 0.0
    %2010 = vmatprep.subr.mxu0 0.0
    %2011 = vmatpush1.msra.mxu0 0.0
    %2012 = vmatprep.mubr.f32.mxu0 0.0
    %2013 = vmatmul.mubr.f32.gmra.mrb[0].mxu0 %v1944
    %v2014 = vpop.f32.mrb[0].mxu0
    %v2015 = vadd.f32 0.0, %v2014
    %v2016 = vpop.f32.mrb[0].mxu0
    %2017 = vdwg.mxu0
    %2018 = vrot.lane.b32.xlu0 %v1426, 64
    %v2019 = vpop.permute.xlu0 %2018
    %v2021 = vsel %vm685, %v1778, 0
    %v2023 = vsel %vm689, %v2019, 0
    %2025 = vmatprep.subr.mxu0 0.0
    %2026 = vmatpush1.msra.mxu0 %v2023
    %2027 = vmatprep.subr.mxu0 0.0
    %2028 = vmatpush1.msra.mxu0 0.0
    %2029 = vmatprep.subr.mxu0 0.0
    %2030 = vmatpush1.msra.mxu0 0.0
    %2031 = vmatprep.subr.mxu0 0.0
    %2032 = vmatpush1.msra.mxu0 0.0
    %2033 = vmatprep.subr.mxu0 0.0
    %2034 = vmatpush1.msra.mxu0 0.0
    %2035 = vmatprep.subr.mxu0 0.0
    %2036 = vmatpush1.msra.mxu0 0.0
    %2037 = vmatprep.subr.mxu0 0.0
    %2038 = vmatpush1.msra.mxu0 0.0
    %2039 = vmatprep.subr.mxu0 0.0
    %2040 = vmatpush1.msra.mxu0 0.0
    %2041 = vmatprep.subr.mxu0 0.0
    %2042 = vmatpush1.msra.mxu0 0.0
    %2043 = vmatprep.subr.mxu0 0.0
    %2044 = vmatpush1.msra.mxu0 0.0
    %2045 = vmatprep.subr.mxu0 0.0
    %2046 = vmatpush1.msra.mxu0 0.0
    %2047 = vmatprep.subr.mxu0 0.0
    %2048 = vmatpush1.msra.mxu0 0.0
    %2049 = vmatprep.subr.mxu0 0.0
    %2050 = vmatpush1.msra.mxu0 0.0
    %2051 = vmatprep.subr.mxu0 0.0
    %2052 = vmatpush1.msra.mxu0 0.0
    %2053 = vmatprep.subr.mxu0 0.0
    %2054 = vmatpush1.msra.mxu0 0.0
    %2055 = vmatprep.subr.mxu0 0.0
    %2056 = vmatpush1.msra.mxu0 0.0
    %2057 = vmatprep.subr.mxu0 0.0
    %2058 = vmatpush1.msra.mxu0 0.0
    %2059 = vmatprep.subr.mxu0 0.0
    %2060 = vmatpush1.msra.mxu0 0.0
    %2061 = vmatprep.subr.mxu0 0.0
    %2062 = vmatpush1.msra.mxu0 0.0
    %2063 = vmatprep.subr.mxu0 0.0
    %2064 = vmatpush1.msra.mxu0 0.0
    %2065 = vmatprep.subr.mxu0 0.0
    %2066 = vmatpush1.msra.mxu0 0.0
    %2067 = vmatprep.subr.mxu0 0.0
    %2068 = vmatpush1.msra.mxu0 0.0
    %2069 = vmatprep.subr.mxu0 0.0
    %2070 = vmatpush1.msra.mxu0 0.0
    %2071 = vmatprep.subr.mxu0 0.0
    %2072 = vmatpush1.msra.mxu0 0.0
    %2073 = vmatprep.subr.mxu0 0.0
    %2074 = vmatpush1.msra.mxu0 0.0
    %2075 = vmatprep.subr.mxu0 0.0
    %2076 = vmatpush1.msra.mxu0 0.0
    %2077 = vmatprep.subr.mxu0 0.0
    %2078 = vmatpush1.msra.mxu0 0.0
    %2079 = vmatprep.subr.mxu0 0.0
    %2080 = vmatpush1.msra.mxu0 0.0
    %2081 = vmatprep.subr.mxu0 0.0
    %2082 = vmatpush1.msra.mxu0 0.0
    %2083 = vmatprep.subr.mxu0 0.0
    %2084 = vmatpush1.msra.mxu0 0.0
    %2085 = vmatprep.subr.mxu0 0.0
    %2086 = vmatpush1.msra.mxu0 0.0
    %2087 = vmatprep.subr.mxu0 0.0
    %2088 = vmatpush1.msra.mxu0 0.0
    %2089 = vmatprep.mubr.f32.mxu0 0.0
    %2090 = vmatmul.mubr.f32.gmra.mrb[0].mxu0 %v2021
    %v2091 = vpop.f32.mrb[0].mxu0
    %v2092 = vadd.f32 0.0, %v2091
    %v2093 = vpop.f32.mrb[0].mxu0
    %2094 = vdwg.mxu0
    %2096 = vrot.lane.b32.xlu0 %v1938, 8
    %v2097 = vpop.permute.xlu0 %2096
    %2100 = vrot.lane.b32.xlu0 %v2015, 16
    %v2101 = vpop.permute.xlu0 %2100
    %2104 = vrot.lane.b32.xlu0 %v2092, 24
    %v2105 = vpop.permute.xlu0 %2104
    %v2107 = vsel %vm322, %v1861, %v2097
    %v2108 = vsel %vm1006, %v2107, %v2101
    %v2109 = vsel %vm1008, %v2108, %v2105
    %s2110 = scalar_lea.vmem %s9, 32
    %v2111 = vld [vmem:[%s2110] sm:$0xff]
    %v2112 = vld [vmem:[%s2110 + $0x8] sm:$0xff]
    %v2113 = vld [vmem:[%s2110 + $0x10] sm:$0xff]
    %v2114 = vld [vmem:[%s2110 + $0x18] sm:$0xff]
    %s2115 = scalar_lea.vmem %s10, 1
    %v2116 = vld [vmem:[%s2115] sm:$0x1]
    %v2118 = vlaneseq
    %v2119 = vshrl.u32 %v2118, 7
    %v2120 = vsub.s32 0, %v2119
    %v2121 = vrot.slane %v2116, %v2120
    %v2124 = vsel %vm239, %v2109, 0
    %2126 = vmatprep.subr.mxu0 0.0
    %2127 = vmatpush1.msra.mxu0 %v2111
    %2128 = vmatprep.subr.mxu0 0.0
    %2129 = vmatpush1.msra.mxu0 %v2112
    %2130 = vmatprep.subr.mxu0 0.0
    %2131 = vmatpush1.msra.mxu0 %v2113
    %2132 = vmatprep.subr.mxu0 0.0
    %2133 = vmatpush1.msra.mxu0 %v2114
    %2134 = vmatprep.subr.mxu0 0.0
    %2135 = vmatpush1.msra.mxu0 0.0
    %2136 = vmatprep.subr.mxu0 0.0
    %2137 = vmatpush1.msra.mxu0 0.0
    %2138 = vmatprep.subr.mxu0 0.0
    %2139 = vmatpush1.msra.mxu0 0.0
    %2140 = vmatprep.subr.mxu0 0.0
    %2141 = vmatpush1.msra.mxu0 0.0
    %2142 = vmatprep.subr.mxu0 0.0
    %2143 = vmatpush1.msra.mxu0 0.0
    %2144 = vmatprep.subr.mxu0 0.0
    %2145 = vmatpush1.msra.mxu0 0.0
    %2146 = vmatprep.subr.mxu0 0.0
    %2147 = vmatpush1.msra.mxu0 0.0
    %2148 = vmatprep.subr.mxu0 0.0
    %2149 = vmatpush1.msra.mxu0 0.0
    %2150 = vmatprep.subr.mxu0 0.0
    %2151 = vmatpush1.msra.mxu0 0.0
    %2152 = vmatprep.subr.mxu0 0.0
    %2153 = vmatpush1.msra.mxu0 0.0
    %2154 = vmatprep.subr.mxu0 0.0
    %2155 = vmatpush1.msra.mxu0 0.0
    %2156 = vmatprep.subr.mxu0 0.0
    %2157 = vmatpush1.msra.mxu0 0.0
    %2158 = vmatprep.subr.mxu0 0.0
    %2159 = vmatpush1.msra.mxu0 0.0
    %2160 = vmatprep.subr.mxu0 0.0
    %2161 = vmatpush1.msra.mxu0 0.0
    %2162 = vmatprep.subr.mxu0 0.0
    %2163 = vmatpush1.msra.mxu0 0.0
    %2164 = vmatprep.subr.mxu0 0.0
    %2165 = vmatpush1.msra.mxu0 0.0
    %2166 = vmatprep.subr.mxu0 0.0
    %2167 = vmatpush1.msra.mxu0 0.0
    %2168 = vmatprep.subr.mxu0 0.0
    %2169 = vmatpush1.msra.mxu0 0.0
    %2170 = vmatprep.subr.mxu0 0.0
    %2171 = vmatpush1.msra.mxu0 0.0
    %2172 = vmatprep.subr.mxu0 0.0
    %2173 = vmatpush1.msra.mxu0 0.0
    %2174 = vmatprep.subr.mxu0 0.0
    %2175 = vmatpush1.msra.mxu0 0.0
    %2176 = vmatprep.subr.mxu0 0.0
    %2177 = vmatpush1.msra.mxu0 0.0
    %2178 = vmatprep.subr.mxu0 0.0
    %2179 = vmatpush1.msra.mxu0 0.0
    %2180 = vmatprep.subr.mxu0 0.0
    %2181 = vmatpush1.msra.mxu0 0.0
    %2182 = vmatprep.subr.mxu0 0.0
    %2183 = vmatpush1.msra.mxu0 0.0
    %2184 = vmatprep.subr.mxu0 0.0
    %2185 = vmatpush1.msra.mxu0 0.0
    %2186 = vmatprep.subr.mxu0 0.0
    %2187 = vmatpush1.msra.mxu0 0.0
    %2188 = vmatprep.subr.mxu0 0.0
    %2189 = vmatpush1.msra.mxu0 0.0
    %2190 = vmatprep.mubr.f32.mxu0 0.0
    %2191 = vmatmul.mubr.f32.gmra.mrb[0].mxu0 %v2124
    %v2192 = vpop.f32.mrb[0].mxu0
    %v2193 = vadd.f32 %v2121, %v2192
    %v2194 = vpop.f32.mrb[0].mxu0
    %2195 = vdwg.mxu0
    %v2196 = vadd.f32 %v1302, %v2193
    %s2197 = scalar_lea.vmem %s11, 1
    %v2198 = vld [vmem:[%s2197] sm:$0x1]
    %s2199 = scalar_lea.vmem %s12, 1
    %v2200 = vld [vmem:[%s2199] sm:$0x1]
    %v2201 = vsel %vm199, %v2196, 0.0
    %2202 = vadd.xlane.f32.xlu0 %v2201
    %v2203 = vpop.xlane.xlu0 %2202
    %v2204 = vmul.f32 %v2203, %v203
    %v2205 = vsub.f32 %v2196, %v2204
    %v2206 = vmul.f32 %v2205, %v2205
    %v2207 = vsel %vm199, %v2206, 0.0
    %2208 = vadd.xlane.f32.xlu0 %v2207
    %v2209 = vpop.xlane.xlu0 %2208
    %v2210 = vmul.f32 %v2209, %v203
    %v2211 = vadd.f32 %v2210, 1e-05
    %v2212 = vrsqrt.pop %v2211
    %v2213 = vmul.f32 %v2205, %v2212
    %v2215 = vlaneseq
    %v2216 = vshrl.u32 %v2215, 7
    %v2217 = vsub.s32 0, %v2216
    %v2218 = vrot.slane %v2198, %v2217
    %v2220 = vmul.f32 %v2213, %v2218
    %v2222 = vlaneseq
    %v2223 = vshrl.u32 %v2222, 7
    %v2224 = vsub.s32 0, %v2223
    %v2225 = vrot.slane %v2200, %v2224
    %v2227 = vadd.f32 %v2220, %v2225
    %s2228 = scalar_lea.vmem %s13, 32
    %v2229 = vld [vmem:[%s2228] sm:$0xff]
    %v2230 = vld [vmem:[%s2228 + $0x8] sm:$0xff]
    %v2231 = vld [vmem:[%s2228 + $0x10] sm:$0xff]
    %v2232 = vld [vmem:[%s2228 + $0x18] sm:$0xff]
    %s2233 = scalar_lea.vmem %s14, 1
    %v2234 = vld [vmem:[%s2233] sm:$0x1]
    %v2236 = vlaneseq
    %v2237 = vshrl.u32 %v2236, 7
    %v2238 = vsub.s32 0, %v2237
    %v2239 = vrot.slane %v2234, %v2238
    %v2242 = vsel %vm239, %v2227, 0
    %2244 = vmatprep.subr.mxu0 0.0
    %2245 = vmatpush1.msra.mxu0 %v2229
    %2246 = vmatprep.subr.mxu0 0.0
    %2247 = vmatpush1.msra.mxu0 %v2230
    %2248 = vmatprep.subr.mxu0 0.0
    %2249 = vmatpush1.msra.mxu0 %v2231
    %2250 = vmatprep.subr.mxu0 0.0
    %2251 = vmatpush1.msra.mxu0 %v2232
    %2252 = vmatprep.subr.mxu0 0.0
    %2253 = vmatpush1.msra.mxu0 0.0
    %2254 = vmatprep.subr.mxu0 0.0
    %2255 = vmatpush1.msra.mxu0 0.0
    %2256 = vmatprep.subr.mxu0 0.0
    %2257 = vmatpush1.msra.mxu0 0.0
    %2258 = vmatprep.subr.mxu0 0.0
    %2259 = vmatpush1.msra.mxu0 0.0
    %2260 = vmatprep.subr.mxu0 0.0
    %2261 = vmatpush1.msra.mxu0 0.0
    %2262 = vmatprep.subr.mxu0 0.0
    %2263 = vmatpush1.msra.mxu0 0.0
    %2264 = vmatprep.subr.mxu0 0.0
    %2265 = vmatpush1.msra.mxu0 0.0
    %2266 = vmatprep.subr.mxu0 0.0
    %2267 = vmatpush1.msra.mxu0 0.0
    %2268 = vmatprep.subr.mxu0 0.0
    %2269 = vmatpush1.msra.mxu0 0.0
    %2270 = vmatprep.subr.mxu0 0.0
    %2271 = vmatpush1.msra.mxu0 0.0
    %2272 = vmatprep.subr.mxu0 0.0
    %2273 = vmatpush1.msra.mxu0 0.0
    %2274 = vmatprep.subr.mxu0 0.0
    %2275 = vmatpush1.msra.mxu0 0.0
    %2276 = vmatprep.subr.mxu0 0.0
    %2277 = vmatpush1.msra.mxu0 0.0
    %2278 = vmatprep.subr.mxu0 0.0
    %2279 = vmatpush1.msra.mxu0 0.0
    %2280 = vmatprep.subr.mxu0 0.0
    %2281 = vmatpush1.msra.mxu0 0.0
    %2282 = vmatprep.subr.mxu0 0.0
    %2283 = vmatpush1.msra.mxu0 0.0
    %2284 = vmatprep.subr.mxu0 0.0
    %2285 = vmatpush1.msra.mxu0 0.0
    %2286 = vmatprep.subr.mxu0 0.0
    %2287 = vmatpush1.msra.mxu0 0.0
    %2288 = vmatprep.subr.mxu0 0.0
    %2289 = vmatpush1.msra.mxu0 0.0
    %2290 = vmatprep.subr.mxu0 0.0
    %2291 = vmatpush1.msra.mxu0 0.0
    %2292 = vmatprep.subr.mxu0 0.0
    %2293 = vmatpush1.msra.mxu0 0.0
    %2294 = vmatprep.subr.mxu0 0.0
    %2295 = vmatpush1.msra.mxu0 0.0
    %2296 = vmatprep.subr.mxu0 0.0
    %2297 = vmatpush1.msra.mxu0 0.0
    %2298 = vmatprep.subr.mxu0 0.0
    %2299 = vmatpush1.msra.mxu0 0.0
    %2300 = vmatprep.subr.mxu0 0.0
    %2301 = vmatpush1.msra.mxu0 0.0
    %2302 = vmatprep.subr.mxu0 0.0
    %2303 = vmatpush1.msra.mxu0 0.0
    %2304 = vmatprep.subr.mxu0 0.0
    %2305 = vmatpush1.msra.mxu0 0.0
    %2306 = vmatprep.subr.mxu0 0.0
    %2307 = vmatpush1.msra.mxu0 0.0
    %2308 = vmatprep.mubr.f32.mxu0 0.0
    %2309 = vmatmul.mubr.f32.gmra.mrb[0].mxu0 %v2242
    %v2310 = vpop.f32.mrb[0].mxu0
    %v2311 = vadd.f32 %v2239, %v2310
    %v2312 = vpop.f32.mrb[0].mxu0
    %2313 = vdwg.mxu0
    %v2314 = vmul.f32 %v2311, 0.5
    %v2315 = vmul.f32 %v2311, 0.70710677
    %v2316 = verf.f32.pop %v2315
    %v2317 = vadd.f32 %v2316, 1.0
    %v2318 = vmul.f32 %v2314, %v2317
    %s2319 = scalar_lea.vmem %s15, 64
    %v2320 = vld [vmem:[%s2319] sm:$0xff]
    %v2321 = vld [vmem:[%s2319 + $0x8] sm:$0xff]
    %v2322 = vld [vmem:[%s2319 + $0x10] sm:$0xff]
    %v2323 = vld [vmem:[%s2319 + $0x18] sm:$0xff]
    %v2324 = vld [vmem:[%s2319 + $0x20] sm:$0xff]
    %v2325 = vld [vmem:[%s2319 + $0x28] sm:$0xff]
    %v2326 = vld [vmem:[%s2319 + $0x30] sm:$0xff]
    %v2327 = vld [vmem:[%s2319 + $0x38] sm:$0xff]
    %s2328 = scalar_lea.vmem %s16, 1
    %v2329 = vld [vmem:[%s2328] sm:$0x1]
    %v2331 = vlaneseq
    %v2332 = vshrl.u32 %v2331, 7
    %v2333 = vsub.s32 0, %v2332
    %v2334 = vrot.slane %v2329, %v2333
    %v2337 = vsel %vm1228, %v2318, 0
    %2339 = vmatprep.subr.mxu0 0.0
    %2340 = vmatpush1.msra.mxu0 %v2320
    %2341 = vmatprep.subr.mxu0 0.0
    %2342 = vmatpush1.msra.mxu0 %v2321
    %2343 = vmatprep.subr.mxu0 0.0
    %2344 = vmatpush1.msra.mxu0 %v2322
    %2345 = vmatprep.subr.mxu0 0.0
    %2346 = vmatpush1.msra.mxu0 %v2323
    %2347 = vmatprep.subr.mxu0 0.0
    %2348 = vmatpush1.msra.mxu0 %v2324
    %2349 = vmatprep.subr.mxu0 0.0
    %2350 = vmatpush1.msra.mxu0 %v2325
    %2351 = vmatprep.subr.mxu0 0.0
    %2352 = vmatpush1.msra.mxu0 %v2326
    %2353 = vmatprep.subr.mxu0 0.0
    %2354 = vmatpush1.msra.mxu0 %v2327
    %2355 = vmatprep.subr.mxu0 0.0
    %2356 = vmatpush1.msra.mxu0 0.0
    %2357 = vmatprep.subr.mxu0 0.0
    %2358 = vmatpush1.msra.mxu0 0.0
    %2359 = vmatprep.subr.mxu0 0.0
    %2360 = vmatpush1.msra.mxu0 0.0
    %2361 = vmatprep.subr.mxu0 0.0
    %2362 = vmatpush1.msra.mxu0 0.0
    %2363 = vmatprep.subr.mxu0 0.0
    %2364 = vmatpush1.msra.mxu0 0.0
    %2365 = vmatprep.subr.mxu0 0.0
    %2366 = vmatpush1.msra.mxu0 0.0
    %2367 = vmatprep.subr.mxu0 0.0
    %2368 = vmatpush1.msra.mxu0 0.0
    %2369 = vmatprep.subr.mxu0 0.0
    %2370 = vmatpush1.msra.mxu0 0.0
    %2371 = vmatprep.subr.mxu0 0.0
    %2372 = vmatpush1.msra.mxu0 0.0
    %2373 = vmatprep.subr.mxu0 0.0
    %2374 = vmatpush1.msra.mxu0 0.0
    %2375 = vmatprep.subr.mxu0 0.0
    %2376 = vmatpush1.msra.mxu0 0.0
    %2377 = vmatprep.subr.mxu0 0.0
    %2378 = vmatpush1.msra.mxu0 0.0
    %2379 = vmatprep.subr.mxu0 0.0
    %2380 = vmatpush1.msra.mxu0 0.0
    %2381 = vmatprep.subr.mxu0 0.0
    %2382 = vmatpush1.msra.mxu0 0.0
    %2383 = vmatprep.subr.mxu0 0.0
    %2384 = vmatpush1.msra.mxu0 0.0
    %2385 = vmatprep.subr.mxu0 0.0
    %2386 = vmatpush1.msra.mxu0 0.0
    %2387 = vmatprep.subr.mxu0 0.0
    %2388 = vmatpush1.msra.mxu0 0.0
    %2389 = vmatprep.subr.mxu0 0.0
    %2390 = vmatpush1.msra.mxu0 0.0
    %2391 = vmatprep.subr.mxu0 0.0
    %2392 = vmatpush1.msra.mxu0 0.0
    %2393 = vmatprep.subr.mxu0 0.0
    %2394 = vmatpush1.msra.mxu0 0.0
    %2395 = vmatprep.subr.mxu0 0.0
    %2396 = vmatpush1.msra.mxu0 0.0
    %2397 = vmatprep.subr.mxu0 0.0
    %2398 = vmatpush1.msra.mxu0 0.0
    %2399 = vmatprep.subr.mxu0 0.0
    %2400 = vmatpush1.msra.mxu0 0.0
    %2401 = vmatprep.subr.mxu0 0.0
    %2402 = vmatpush1.msra.mxu0 0.0
    %2403 = vmatprep.mubr.f32.mxu0 0.0
    %2404 = vmatmul.mubr.f32.gmra.mrb[0].mxu0 %v2337
    %v2405 = vpop.f32.mrb[0].mxu0
    %v2406 = vadd.f32 %v2334, %v2405
    %v2407 = vpop.f32.mrb[0].mxu0
    %2408 = vdwg.mxu0
    %v2409 = vadd.f32 %v2196, %v2406
    %v2410 = vmul.f32 %v1786, 0.5
    %v2411 = vmul.f32 %v188, 0.5
    %v2412 = vadd.f32 %v2410, %v2411
    %v2414 = vsel %vm685, %v2412, 0
    %v2417 = vsel %vm689, %v682, 0
    %2419 = vmatprep.subr.mxu0 0.0
    %2420 = vmatpush1.msra.mxu0 %v2417
    %2421 = vmatprep.subr.mxu0 0.0
    %2422 = vmatpush1.msra.mxu0 0.0
    %2423 = vmatprep.subr.mxu0 0.0
    %2424 = vmatpush1.msra.mxu0 0.0
    %2425 = vmatprep.subr.mxu0 0.0
    %2426 = vmatpush1.msra.mxu0 0.0
    %2427 = vmatprep.subr.mxu0 0.0
    %2428 = vmatpush1.msra.mxu0 0.0
    %2429 = vmatprep.subr.mxu0 0.0
    %2430 = vmatpush1.msra.mxu0 0.0
    %2431 = vmatprep.subr.mxu0 0.0
    %2432 = vmatpush1.msra.mxu0 0.0
    %2433 = vmatprep.subr.mxu0 0.0
    %2434 = vmatpush1.msra.mxu0 0.0
    %2435 = vmatprep.subr.mxu0 0.0
    %2436 = vmatpush1.msra.mxu0 0.0
    %2437 = vmatprep.subr.mxu0 0.0
    %2438 = vmatpush1.msra.mxu0 0.0
    %2439 = vmatprep.subr.mxu0 0.0
    %2440 = vmatpush1.msra.mxu0 0.0
    %2441 = vmatprep.subr.mxu0 0.0
    %2442 = vmatpush1.msra.mxu0 0.0
    %2443 = vmatprep.subr.mxu0 0.0
    %2444 = vmatpush1.msra.mxu0 0.0
    %2445 = vmatprep.subr.mxu0 0.0
    %2446 = vmatpush1.msra.mxu0 0.0
    %2447 = vmatprep.subr.mxu0 0.0
    %2448 = vmatpush1.msra.mxu0 0.0
    %2449 = vmatprep.subr.mxu0 0.0
    %2450 = vmatpush1.msra.mxu0 0.0
    %2451 = vmatprep.subr.mxu0 0.0
    %2452 = vmatpush1.msra.mxu0 0.0
    %2453 = vmatprep.subr.mxu0 0.0
    %2454 = vmatpush1.msra.mxu0 0.0
    %2455 = vmatprep.subr.mxu0 0.0
    %2456 = vmatpush1.msra.mxu0 0.0
    %2457 = vmatprep.subr.mxu0 0.0
    %2458 = vmatpush1.msra.mxu0 0.0
    %2459 = vmatprep.subr.mxu0 0.0
    %2460 = vmatpush1.msra.mxu0 0.0
    %2461 = vmatprep.subr.mxu0 0.0
    %2462 = vmatpush1.msra.mxu0 0.0
    %2463 = vmatprep.subr.mxu0 0.0
    %2464 = vmatpush1.msra.mxu0 0.0
    %2465 = vmatprep.subr.mxu0 0.0
    %2466 = vmatpush1.msra.mxu0 0.0
    %2467 = vmatprep.subr.mxu0 0.0
    %2468 = vmatpush1.msra.mxu0 0.0
    %2469 = vmatprep.subr.mxu0 0.0
    %2470 = vmatpush1.msra.mxu0 0.0
    %2471 = vmatprep.subr.mxu0 0.0
    %2472 = vmatpush1.msra.mxu0 0.0
    %2473 = vmatprep.subr.mxu0 0.0
    %2474 = vmatpush1.msra.mxu0 0.0
    %2475 = vmatprep.subr.mxu0 0.0
    %2476 = vmatpush1.msra.mxu0 0.0
    %2477 = vmatprep.subr.mxu0 0.0
    %2478 = vmatpush1.msra.mxu0 0.0
    %2479 = vmatprep.subr.mxu0 0.0
    %2480 = vmatpush1.msra.mxu0 0.0
    %2481 = vmatprep.subr.mxu0 0.0
    %2482 = vmatpush1.msra.mxu0 0.0
    %2483 = vmatprep.mubr.f32.mxu0 0.0
    %2484 = vmatmul.mubr.f32.gmra.mrb[0].mxu0 %v2414
    %v2485 = vpop.f32.mrb[0].mxu0
    %v2486 = vadd.f32 0.0, %v2485
    %v2487 = vpop.f32.mrb[0].mxu0
    %2488 = vdwg.mxu0
    %v2489 = vrot.slane %v179, 3
    %v2491 = vsel %vm194, %v189, %v2489
    %v2492 = vadd.f32 %v2491, %v190
    %v2493 = vld [vmem:[%s5] sm:$0x1]
    %v2494 = vld [vmem:[%s6] sm:$0x1]
    %v2495 = vsel %vm199, %v2492, 0.0
    %2496 = vadd.xlane.f32.xlu0 %v2495
    %v2497 = vpop.xlane.xlu0 %2496
    %v2498 = vmul.f32 %v2497, %v203
    %v2499 = vsub.f32 %v2492, %v2498
    %v2500 = vmul.f32 %v2499, %v2499
    %v2501 = vsel %vm199, %v2500, 0.0
    %2502 = vadd.xlane.f32.xlu0 %v2501
    %v2503 = vpop.xlane.xlu0 %2502
    %v2504 = vmul.f32 %v2503, %v203
    %v2505 = vadd.f32 %v2504, 1e-05
    %v2506 = vrsqrt.pop %v2505
    %v2507 = vmul.f32 %v2499, %v2506
    %v2509 = vlaneseq
    %v2510 = vshrl.u32 %v2509, 7
    %v2511 = vsub.s32 0, %v2510
    %v2512 = vrot.slane %v2493, %v2511
    %v2514 = vmul.f32 %v2507, %v2512
    %v2516 = vlaneseq
    %v2517 = vshrl.u32 %v2516, 7
    %v2518 = vsub.s32 0, %v2517
    %v2519 = vrot.slane %v2494, %v2518
    %v2521 = vadd.f32 %v2514, %v2519
    %v2522 = vld [vmem:[%s7] sm:$0xff]
    %v2523 = vld [vmem:[%s7 + $0x8] sm:$0xff]
    %v2524 = vld [vmem:[%s7 + $0x10] sm:$0xff]
    %v2525 = vld [vmem:[%s7 + $0x18] sm:$0xff]
    %v2526 = vld [vmem:[%s8] sm:$0x1]
    %v2528 = vlaneseq
    %v2529 = vshrl.u32 %v2528, 7
    %v2530 = vsub.s32 0, %v2529
    %v2531 = vrot.slane %v2526, %v2530
    %v2534 = vsel %vm239, %v2521, 0
    %2536 = vmatprep.subr.mxu0 0.0
    %2537 = vmatpush1.msra.mxu0 %v2522
    %2538 = vmatprep.subr.mxu0 0.0
    %2539 = vmatpush1.msra.mxu0 %v2523
    %2540 = vmatprep.subr.mxu0 0.0
    %2541 = vmatpush1.msra.mxu0 %v2524
    %2542 = vmatprep.subr.mxu0 0.0
    %2543 = vmatpush1.msra.mxu0 %v2525
    %2544 = vmatprep.subr.mxu0 0.0
    %2545 = vmatpush1.msra.mxu0 0.0
    %2546 = vmatprep.subr.mxu0 0.0
    %2547 = vmatpush1.msra.mxu0 0.0
    %2548 = vmatprep.subr.mxu0 0.0
    %2549 = vmatpush1.msra.mxu0 0.0
    %2550 = vmatprep.subr.mxu0 0.0
    %2551 = vmatpush1.msra.mxu0 0.0
    %2552 = vmatprep.subr.mxu0 0.0
    %2553 = vmatpush1.msra.mxu0 0.0
    %2554 = vmatprep.subr.mxu0 0.0
    %2555 = vmatpush1.msra.mxu0 0.0
    %2556 = vmatprep.subr.mxu0 0.0
    %2557 = vmatpush1.msra.mxu0 0.0
    %2558 = vmatprep.subr.mxu0 0.0
    %2559 = vmatpush1.msra.mxu0 0.0
    %2560 = vmatprep.subr.mxu0 0.0
    %2561 = vmatpush1.msra.mxu0 0.0
    %2562 = vmatprep.subr.mxu0 0.0
    %2563 = vmatpush1.msra.mxu0 0.0
    %2564 = vmatprep.subr.mxu0 0.0
    %2565 = vmatpush1.msra.mxu0 0.0
    %2566 = vmatprep.subr.mxu0 0.0
    %2567 = vmatpush1.msra.mxu0 0.0
    %2568 = vmatprep.subr.mxu0 0.0
    %2569 = vmatpush1.msra.mxu0 0.0
    %2570 = vmatprep.subr.mxu0 0.0
    %2571 = vmatpush1.msra.mxu0 0.0
    %2572 = vmatprep.subr.mxu0 0.0
    %2573 = vmatpush1.msra.mxu0 0.0
    %2574 = vmatprep.subr.mxu0 0.0
    %2575 = vmatpush1.msra.mxu0 0.0
    %2576 = vmatprep.subr.mxu0 0.0
    %2577 = vmatpush1.msra.mxu0 0.0
    %2578 = vmatprep.subr.mxu0 0.0
    %2579 = vmatpush1.msra.mxu0 0.0
    %2580 = vmatprep.subr.mxu0 0.0
    %2581 = vmatpush1.msra.mxu0 0.0
    %2582 = vmatprep.subr.mxu0 0.0
    %2583 = vmatpush1.msra.mxu0 0.0
    %2584 = vmatprep.subr.mxu0 0.0
    %2585 = vmatpush1.msra.mxu0 0.0
    %2586 = vmatprep.subr.mxu0 0.0
    %2587 = vmatpush1.msra.mxu0 0.0
    %2588 = vmatprep.subr.mxu0 0.0
    %2589 = vmatpush1.msra.mxu0 0.0
    %2590 = vmatprep.subr.mxu0 0.0
    %2591 = vmatpush1.msra.mxu0 0.0
    %2592 = vmatprep.subr.mxu0 0.0
    %2593 = vmatpush1.msra.mxu0 0.0
    %2594 = vmatprep.subr.mxu0 0.0
    %2595 = vmatpush1.msra.mxu0 0.0
    %2596 = vmatprep.subr.mxu0 0.0
    %2597 = vmatpush1.msra.mxu0 0.0
    %2598 = vmatprep.subr.mxu0 0.0
    %2599 = vmatpush1.msra.mxu0 0.0
    %2600 = vmatprep.mubr.f32.mxu0 0.0
    %2601 = vmatmul.mubr.f32.gmra.mrb[0].mxu0 %v2534
    %v2602 = vpop.f32.mrb[0].mxu0
    %v2603 = vadd.f32 %v2531, %v2602
    %v2604 = vpop.f32.mrb[0].mxu0
    %2605 = vdwg.mxu0
    %2607 = vrot.lane.b32.xlu0 %v2603, 120
    %v2608 = vpop.permute.xlu0 %2607
    %2609 = vrot.lane.b32.xlu0 %v2603, 112
    %v2610 = vpop.permute.xlu0 %2609
    %2611 = vrot.lane.b32.xlu0 %v2603, 104
    %v2612 = vpop.permute.xlu0 %2611
    %2613 = vrot.lane.b32.xlu0 %v2603, 96
    %v2614 = vpop.permute.xlu0 %2613
    %v2615 = vsel %vm322, %v2603, 0
    %v2617 = vsel %vm322, %v2614, 0
    %2619 = vmatprep.subr.mxu0 0.0
    %2620 = vmatpush1.xpose.msra.mxu0 %v2617
    %2621 = vmatprep.subr.mxu0 0.0
    %2622 = vmatpush1.xpose.msra.mxu0 0.0
    %2623 = vmatprep.subr.mxu0 0.0
    %2624 = vmatpush1.xpose.msra.mxu0 0.0
    %2625 = vmatprep.subr.mxu0 0.0
    %2626 = vmatpush1.xpose.msra.mxu0 0.0
    %2627 = vmatprep.subr.mxu0 0.0
    %2628 = vmatpush1.xpose.msra.mxu0 0.0
    %2629 = vmatprep.subr.mxu0 0.0
    %2630 = vmatpush1.xpose.msra.mxu0 0.0
    %2631 = vmatprep.subr.mxu0 0.0
    %2632 = vmatpush1.xpose.msra.mxu0 0.0
    %2633 = vmatprep.subr.mxu0 0.0
    %2634 = vmatpush1.xpose.msra.mxu0 0.0
    %2635 = vmatprep.subr.mxu0 0.0
    %2636 = vmatpush1.xpose.msra.mxu0 0.0
    %2637 = vmatprep.subr.mxu0 0.0
    %2638 = vmatpush1.xpose.msra.mxu0 0.0
    %2639 = vmatprep.subr.mxu0 0.0
    %2640 = vmatpush1.xpose.msra.mxu0 0.0
    %2641 = vmatprep.subr.mxu0 0.0
    %2642 = vmatpush1.xpose.msra.mxu0 0.0
    %2643 = vmatprep.subr.mxu0 0.0
    %2644 = vmatpush1.xpose.msra.mxu0 0.0
    %2645 = vmatprep.subr.mxu0 0.0
    %2646 = vmatpush1.xpose.msra.mxu0 0.0
    %2647 = vmatprep.subr.mxu0 0.0
    %2648 = vmatpush1.xpose.msra.mxu0 0.0
    %2649 = vmatprep.subr.mxu0 0.0
    %2650 = vmatpush1.xpose.msra.mxu0 0.0
    %2651 = vmatprep.subr.mxu0 0.0
    %2652 = vmatpush1.xpose.msra.mxu0 0.0
    %2653 = vmatprep.subr.mxu0 0.0
    %2654 = vmatpush1.xpose.msra.mxu0 0.0
    %2655 = vmatprep.subr.mxu0 0.0
    %2656 = vmatpush1.xpose.msra.mxu0 0.0
    %2657 = vmatprep.subr.mxu0 0.0
    %2658 = vmatpush1.xpose.msra.mxu0 0.0
    %2659 = vmatprep.subr.mxu0 0.0
    %2660 = vmatpush1.xpose.msra.mxu0 0.0
    %2661 = vmatprep.subr.mxu0 0.0
    %2662 = vmatpush1.xpose.msra.mxu0 0.0
    %2663 = vmatprep.subr.mxu0 0.0
    %2664 = vmatpush1.xpose.msra.mxu0 0.0
    %2665 = vmatprep.subr.mxu0 0.0
    %2666 = vmatpush1.xpose.msra.mxu0 0.0
    %2667 = vmatprep.subr.mxu0 0.0
    %2668 = vmatpush1.xpose.msra.mxu0 0.0
    %2669 = vmatprep.subr.mxu0 0.0
    %2670 = vmatpush1.xpose.msra.mxu0 0.0
    %2671 = vmatprep.subr.mxu0 0.0
    %2672 = vmatpush1.xpose.msra.mxu0 0.0
    %2673 = vmatprep.subr.mxu0 0.0
    %2674 = vmatpush1.xpose.msra.mxu0 0.0
    %2675 = vmatprep.subr.mxu0 0.0
    %2676 = vmatpush1.xpose.msra.mxu0 0.0
    %2677 = vmatprep.subr.mxu0 0.0
    %2678 = vmatpush1.xpose.msra.mxu0 0.0
    %2679 = vmatprep.subr.mxu0 0.0
    %2680 = vmatpush1.xpose.msra.mxu0 0.0
    %2681 = vmatprep.subr.mxu0 0.0
    %2682 = vmatpush1.xpose.msra.mxu0 0.0
    %2683 = vmatprep.mubr.f32.mxu0 0.0
    %2684 = vmatmul.mubr.f32.gmra.mrb[0].mxu0 %v2615
    %v2685 = vpop.f32.mrb[0].mxu0
    %v2686 = vadd.f32 0.0, %v2685
    %v2687 = vpop.f32.mrb[0].mxu0
    %2688 = vdwg.mxu0
    %2689 = vrot.lane.b32.xlu0 %v2608, 96
    %v2690 = vpop.permute.xlu0 %2689
    %v2691 = vsel %vm322, %v2608, 0
    %v2693 = vsel %vm322, %v2690, 0
    %2695 = vmatprep.subr.mxu0 0.0
    %2696 = vmatpush1.xpose.msra.mxu0 %v2693
    %2697 = vmatprep.subr.mxu0 0.0
    %2698 = vmatpush1.xpose.msra.mxu0 0.0
    %2699 = vmatprep.subr.mxu0 0.0
    %2700 = vmatpush1.xpose.msra.mxu0 0.0
    %2701 = vmatprep.subr.mxu0 0.0
    %2702 = vmatpush1.xpose.msra.mxu0 0.0
    %2703 = vmatprep.subr.mxu0 0.0
    %2704 = vmatpush1.xpose.msra.mxu0 0.0
    %2705 = vmatprep.subr.mxu0 0.0
    %2706 = vmatpush1.xpose.msra.mxu0 0.0
    %2707 = vmatprep.subr.mxu0 0.0
    %2708 = vmatpush1.xpose.msra.mxu0 0.0
    %2709 = vmatprep.subr.mxu0 0.0
    %2710 = vmatpush1.xpose.msra.mxu0 0.0
    %2711 = vmatprep.subr.mxu0 0.0
    %2712 = vmatpush1.xpose.msra.mxu0 0.0
    %2713 = vmatprep.subr.mxu0 0.0
    %2714 = vmatpush1.xpose.msra.mxu0 0.0
    %2715 = vmatprep.subr.mxu0 0.0
    %2716 = vmatpush1.xpose.msra.mxu0 0.0
    %2717 = vmatprep.subr.mxu0 0.0
    %2718 = vmatpush1.xpose.msra.mxu0 0.0
    %2719 = vmatprep.subr.mxu0 0.0
    %2720 = vmatpush1.xpose.msra.mxu0 0.0
    %2721 = vmatprep.subr.mxu0 0.0
    %2722 = vmatpush1.xpose.msra.mxu0 0.0
    %2723 = vmatprep.subr.mxu0 0.0
    %2724 = vmatpush1.xpose.msra.mxu0 0.0
    %2725 = vmatprep.subr.mxu0 0.0
    %2726 = vmatpush1.xpose.msra.mxu0 0.0
    %2727 = vmatprep.subr.mxu0 0.0
    %2728 = vmatpush1.xpose.msra.mxu0 0.0
    %2729 = vmatprep.subr.mxu0 0.0
    %2730 = vmatpush1.xpose.msra.mxu0 0.0
    %2731 = vmatprep.subr.mxu0 0.0
    %2732 = vmatpush1.xpose.msra.mxu0 0.0
    %2733 = vmatprep.subr.mxu0 0.0
    %2734 = vmatpush1.xpose.msra.mxu0 0.0
    %2735 = vmatprep.subr.mxu0 0.0
    %2736 = vmatpush1.xpose.msra.mxu0 0.0
    %2737 = vmatprep.subr.mxu0 0.0
    %2738 = vmatpush1.xpose.msra.mxu0 0.0
    %2739 = vmatprep.subr.mxu0 0.0
    %2740 = vmatpush1.xpose.msra.mxu0 0.0
    %2741 = vmatprep.subr.mxu0 0.0
    %2742 = vmatpush1.xpose.msra.mxu0 0.0
    %2743 = vmatprep.subr.mxu0 0.0
    %2744 = vmatpush1.xpose.msra.mxu0 0.0
    %2745 = vmatprep.subr.mxu0 0.0
    %2746 = vmatpush1.xpose.msra.mxu0 0.0
    %2747 = vmatprep.subr.mxu0 0.0
    %2748 = vmatpush1.xpose.msra.mxu0 0.0
    %2749 = vmatprep.subr.mxu0 0.0
    %2750 = vmatpush1.xpose.msra.mxu0 0.0
    %2751 = vmatprep.subr.mxu0 0.0
    %2752 = vmatpush1.xpose.msra.mxu0 0.0
    %2753 = vmatprep.subr.mxu0 0.0
    %2754 = vmatpush1.xpose.msra.mxu0 0.0
    %2755 = vmatprep.subr.mxu0 0.0
    %2756 = vmatpush1.xpose.msra.mxu0 0.0
    %2757 = vmatprep.subr.mxu0 0.0
    %2758 = vmatpush1.xpose.msra.mxu0 0.0
    %2759 = vmatprep.mubr.f32.mxu0 0.0
    %2760 = vmatmul.mubr.f32.gmra.mrb[0].mxu0 %v2691
    %v2761 = vpop.f32.mrb[0].mxu0
    %v2762 = vadd.f32 0.0, %v2761
    %v2763 = vpop.f32.mrb[0].mxu0
    %2764 = vdwg.mxu0
    %2765 = vrot.lane.b32.xlu0 %v2610, 96
    %v2766 = vpop.permute.xlu0 %2765
    %v2767 = vsel %vm322, %v2610, 0
    %v2769 = vsel %vm322, %v2766, 0
    %2771 = vmatprep.subr.mxu0 0.0
    %2772 = vmatpush1.xpose.msra.mxu0 %v2769
    %2773 = vmatprep.subr.mxu0 0.0
    %2774 = vmatpush1.xpose.msra.mxu0 0.0
    %2775 = vmatprep.subr.mxu0 0.0
    %2776 = vmatpush1.xpose.msra.mxu0 0.0
    %2777 = vmatprep.subr.mxu0 0.0
    %2778 = vmatpush1.xpose.msra.mxu0 0.0
    %2779 = vmatprep.subr.mxu0 0.0
    %2780 = vmatpush1.xpose.msra.mxu0 0.0
    %2781 = vmatprep.subr.mxu0 0.0
    %2782 = vmatpush1.xpose.msra.mxu0 0.0
    %2783 = vmatprep.subr.mxu0 0.0
    %2784 = vmatpush1.xpose.msra.mxu0 0.0
    %2785 = vmatprep.subr.mxu0 0.0
    %2786 = vmatpush1.xpose.msra.mxu0 0.0
    %2787 = vmatprep.subr.mxu0 0.0
    %2788 = vmatpush1.xpose.msra.mxu0 0.0
    %2789 = vmatprep.subr.mxu0 0.0
    %2790 = vmatpush1.xpose.msra.mxu0 0.0
    %2791 = vmatprep.subr.mxu0 0.0
    %2792 = vmatpush1.xpose.msra.mxu0 0.0
    %2793 = vmatprep.subr.mxu0 0.0
    %2794 = vmatpush1.xpose.msra.mxu0 0.0
    %2795 = vmatprep.subr.mxu0 0.0
    %2796 = vmatpush1.xpose.msra.mxu0 0.0
    %2797 = vmatprep.subr.mxu0 0.0
    %2798 = vmatpush1.xpose.msra.mxu0 0.0
    %2799 = vmatprep.subr.mxu0 0.0
    %2800 = vmatpush1.xpose.msra.mxu0 0.0
    %2801 = vmatprep.subr.mxu0 0.0
    %2802 = vmatpush1.xpose.msra.mxu0 0.0
    %2803 = vmatprep.subr.mxu0 0.0
    %2804 = vmatpush1.xpose.msra.mxu0 0.0
    %2805 = vmatprep.subr.mxu0 0.0
    %2806 = vmatpush1.xpose.msra.mxu0 0.0
    %2807 = vmatprep.subr.mxu0 0.0
    %2808 = vmatpush1.xpose.msra.mxu0 0.0
    %2809 = vmatprep.subr.mxu0 0.0
    %2810 = vmatpush1.xpose.msra.mxu0 0.0
    %2811 = vmatprep.subr.mxu0 0.0
    %2812 = vmatpush1.xpose.msra.mxu0 0.0
    %2813 = vmatprep.subr.mxu0 0.0
    %2814 = vmatpush1.xpose.msra.mxu0 0.0
    %2815 = vmatprep.subr.mxu0 0.0
    %2816 = vmatpush1.xpose.msra.mxu0 0.0
    %2817 = vmatprep.subr.mxu0 0.0
    %2818 = vmatpush1.xpose.msra.mxu0 0.0
    %2819 = vmatprep.subr.mxu0 0.0
    %2820 = vmatpush1.xpose.msra.mxu0 0.0
    %2821 = vmatprep.subr.mxu0 0.0
    %2822 = vmatpush1.xpose.msra.mxu0 0.0
    %2823 = vmatprep.subr.mxu0 0.0
    %2824 = vmatpush1.xpose.msra.mxu0 0.0
    %2825 = vmatprep.subr.mxu0 0.0
    %2826 = vmatpush1.xpose.msra.mxu0 0.0
    %2827 = vmatprep.subr.mxu0 0.0
    %2828 = vmatpush1.xpose.msra.mxu0 0.0
    %2829 = vmatprep.subr.mxu0 0.0
    %2830 = vmatpush1.xpose.msra.mxu0 0.0
    %2831 = vmatprep.subr.mxu0 0.0
    %2832 = vmatpush1.xpose.msra.mxu0 0.0
    %2833 = vmatprep.subr.mxu0 0.0
    %2834 = vmatpush1.xpose.msra.mxu0 0.0
    %2835 = vmatprep.mubr.f32.mxu0 0.0
    %2836 = vmatmul.mubr.f32.gmra.mrb[0].mxu0 %v2767
    %v2837 = vpop.f32.mrb[0].mxu0
    %v2838 = vadd.f32 0.0, %v2837
    %v2839 = vpop.f32.mrb[0].mxu0
    %2840 = vdwg.mxu0
    %2841 = vrot.lane.b32.xlu0 %v2612, 96
    %v2842 = vpop.permute.xlu0 %2841
    %v2843 = vsel %vm322, %v2612, 0
    %v2845 = vsel %vm322, %v2842, 0
    %2847 = vmatprep.subr.mxu0 0.0
    %2848 = vmatpush1.xpose.msra.mxu0 %v2845
    %2849 = vmatprep.subr.mxu0 0.0
    %2850 = vmatpush1.xpose.msra.mxu0 0.0
    %2851 = vmatprep.subr.mxu0 0.0
    %2852 = vmatpush1.xpose.msra.mxu0 0.0
    %2853 = vmatprep.subr.mxu0 0.0
    %2854 = vmatpush1.xpose.msra.mxu0 0.0
    %2855 = vmatprep.subr.mxu0 0.0
    %2856 = vmatpush1.xpose.msra.mxu0 0.0
    %2857 = vmatprep.subr.mxu0 0.0
    %2858 = vmatpush1.xpose.msra.mxu0 0.0
    %2859 = vmatprep.subr.mxu0 0.0
    %2860 = vmatpush1.xpose.msra.mxu0 0.0
    %2861 = vmatprep.subr.mxu0 0.0
    %2862 = vmatpush1.xpose.msra.mxu0 0.0
    %2863 = vmatprep.subr.mxu0 0.0
    %2864 = vmatpush1.xpose.msra.mxu0 0.0
    %2865 = vmatprep.subr.mxu0 0.0
    %2866 = vmatpush1.xpose.msra.mxu0 0.0
    %2867 = vmatprep.subr.mxu0 0.0
    %2868 = vmatpush1.xpose.msra.mxu0 0.0
    %2869 = vmatprep.subr.mxu0 0.0
    %2870 = vmatpush1.xpose.msra.mxu0 0.0
    %2871 = vmatprep.subr.mxu0 0.0
    %2872 = vmatpush1.xpose.msra.mxu0 0.0
    %2873 = vmatprep.subr.mxu0 0.0
    %2874 = vmatpush1.xpose.msra.mxu0 0.0
    %2875 = vmatprep.subr.mxu0 0.0
    %2876 = vmatpush1.xpose.msra.mxu0 0.0
    %2877 = vmatprep.subr.mxu0 0.0
    %2878 = vmatpush1.xpose.msra.mxu0 0.0
    %2879 = vmatprep.subr.mxu0 0.0
    %2880 = vmatpush1.xpose.msra.mxu0 0.0
    %2881 = vmatprep.subr.mxu0 0.0
    %2882 = vmatpush1.xpose.msra.mxu0 0.0
    %2883 = vmatprep.subr.mxu0 0.0
    %2884 = vmatpush1.xpose.msra.mxu0 0.0
    %2885 = vmatprep.subr.mxu0 0.0
    %2886 = vmatpush1.xpose.msra.mxu0 0.0
    %2887 = vmatprep.subr.mxu0 0.0
    %2888 = vmatpush1.xpose.msra.mxu0 0.0
    %2889 = vmatprep.subr.mxu0 0.0
    %2890 = vmatpush1.xpose.msra.mxu0 0.0
    %2891 = vmatprep.subr.mxu0 0.0
    %2892 = vmatpush1.xpose.msra.mxu0 0.0
    %2893 = vmatprep.subr.mxu0 0.0
    %2894 = vmatpush1.xpose.msra.mxu0 0.0
    %2895 = vmatprep.subr.mxu0 0.0
    %2896 = vmatpush1.xpose.msra.mxu0 0.0
    %2897 = vmatprep.subr.mxu0 0.0
    %2898 = vmatpush1.xpose.msra.mxu0 0.0
    %2899 = vmatprep.subr.mxu0 0.0
    %2900 = vmatpush1.xpose.msra.mxu0 0.0
    %2901 = vmatprep.subr.mxu0 0.0
    %2902 = vmatpush1.xpose.msra.mxu0 0.0
    %2903 = vmatprep.subr.mxu0 0.0
    %2904 = vmatpush1.xpose.msra.mxu0 0.0
    %2905 = vmatprep.subr.mxu0 0.0
    %2906 = vmatpush1.xpose.msra.mxu0 0.0
    %2907 = vmatprep.subr.mxu0 0.0
    %2908 = vmatpush1.xpose.msra.mxu0 0.0
    %2909 = vmatprep.subr.mxu0 0.0
    %2910 = vmatpush1.xpose.msra.mxu0 0.0
    %2911 = vmatprep.mubr.f32.mxu0 0.0
    %2912 = vmatmul.mubr.f32.gmra.mrb[0].mxu0 %v2843
    %v2913 = vpop.f32.mrb[0].mxu0
    %v2914 = vadd.f32 0.0, %v2913
    %v2915 = vpop.f32.mrb[0].mxu0
    %2916 = vdwg.mxu0
    %v2917 = vmul.f32 %v2686, 0.35355338
    %v2918 = vmul.f32 %v2762, 0.35355338
    %v2919 = vmul.f32 %v2838, 0.35355338
    %v2920 = vmul.f32 %v2914, 0.35355338
    %v2921 = vsel %vm629, %v2917, -inf
    %2922 = vmax.xlane.f32.xlu0 %v2921
    %v2923 = vpop.xlane.xlu0 %2922
    %v2924 = vsel %vm629, %v2918, -inf
    %2925 = vmax.xlane.f32.xlu0 %v2924
    %v2926 = vpop.xlane.xlu0 %2925
    %v2927 = vsel %vm629, %v2919, -inf
    %2928 = vmax.xlane.f32.xlu0 %v2927
    %v2929 = vpop.xlane.xlu0 %2928
    %v2930 = vsel %vm629, %v2920, -inf
    %2931 = vmax.xlane.f32.xlu0 %v2930
    %v2932 = vpop.xlane.xlu0 %2931
    %v2933 = vsub.f32 %v2917, %v2923
    %v2934 = vsub.f32 %v2918, %v2926
    %v2935 = vsub.f32 %v2919, %v2929
    %v2936 = vsub.f32 %v2920, %v2932
    %v2937 = vmul.f32 %v2933, 1.442695
    %v2938 = vpow.pop %v2937
    %v2939 = vmul.f32 %v2934, 1.442695
    %v2940 = vpow.pop %v2939
    %v2941 = vmul.f32 %v2935, 1.442695
    %v2942 = vpow.pop %v2941
    %v2943 = vmul.f32 %v2936, 1.442695
    %v2944 = vpow.pop %v2943
    %v2945 = vsel %vm629, %v2938, 0.0
    %2946 = vadd.xlane.f32.xlu0 %v2945
    %v2947 = vpop.xlane.xlu0 %2946
    %v2948 = vsel %vm629, %v2940, 0.0
    %2949 = vadd.xlane.f32.xlu0 %v2948
    %v2950 = vpop.xlane.xlu0 %2949
    %v2951 = vsel %vm629, %v2942, 0.0
    %2952 = vadd.xlane.f32.xlu0 %v2951
    %v2953 = vpop.xlane.xlu0 %2952
    %v2954 = vsel %vm629, %v2944, 0.0
    %2955 = vadd.xlane.f32.xlu0 %v2954
    %v2956 = vpop.xlane.xlu0 %2955
    %v2957 = vrcp.pop %v2947
    %v2958 = vrcp.pop %v2950
    %v2959 = vrcp.pop %v2953
    %v2960 = vrcp.pop %v2956
    %v2961 = vmul.f32 %v2938, %v2957
    %v2962 = vmul.f32 %v2940, %v2958
    %v2963 = vmul.f32 %v2942, %v2959
    %v2964 = vmul.f32 %v2944, %v2960
    %v2965 = vsel %vm629, %v2961, 0.0
    %v2966 = vsel %vm629, %v2962, 0.0
    %v2967 = vadd.f32 %v2965, %v2966
    %v2968 = vsel %vm629, %v2963, 0.0
    %v2969 = vadd.f32 %v2967, %v2968
    %v2970 = vsel %vm629, %v2964, 0.0
    %v2971 = vadd.f32 %v2969, %v2970
    %v2972 = vmul.f32 %v2971, %v681
    %2973 = vrot.lane.b32.xlu0 %v2603, 64
    %v2974 = vpop.permute.xlu0 %2973
    %v2976 = vsel %vm685, %v2961, 0
    %v2978 = vsel %vm689, %v2974, 0
    %2980 = vmatprep.subr.mxu0 0.0
    %2981 = vmatpush1.msra.mxu0 %v2978
    %2982 = vmatprep.subr.mxu0 0.0
    %2983 = vmatpush1.msra.mxu0 0.0
    %2984 = vmatprep.subr.mxu0 0.0
    %2985 = vmatpush1.msra.mxu0 0.0
    %2986 = vmatprep.subr.mxu0 0.0
    %2987 = vmatpush1.msra.mxu0 0.0
    %2988 = vmatprep.subr.mxu0 0.0
    %2989 = vmatpush1.msra.mxu0 0.0
    %2990 = vmatprep.subr.mxu0 0.0
    %2991 = vmatpush1.msra.mxu0 0.0
    %2992 = vmatprep.subr.mxu0 0.0
    %2993 = vmatpush1.msra.mxu0 0.0
    %2994 = vmatprep.subr.mxu0 0.0
    %2995 = vmatpush1.msra.mxu0 0.0
    %2996 = vmatprep.subr.mxu0 0.0
    %2997 = vmatpush1.msra.mxu0 0.0
    %2998 = vmatprep.subr.mxu0 0.0
    %2999 = vmatpush1.msra.mxu0 0.0
    %3000 = vmatprep.subr.mxu0 0.0
    %3001 = vmatpush1.msra.mxu0 0.0
    %3002 = vmatprep.subr.mxu0 0.0
    %3003 = vmatpush1.msra.mxu0 0.0
    %3004 = vmatprep.subr.mxu0 0.0
    %3005 = vmatpush1.msra.mxu0 0.0
    %3006 = vmatprep.subr.mxu0 0.0
    %3007 = vmatpush1.msra.mxu0 0.0
    %3008 = vmatprep.subr.mxu0 0.0
    %3009 = vmatpush1.msra.mxu0 0.0
    %3010 = vmatprep.subr.mxu0 0.0
    %3011 = vmatpush1.msra.mxu0 0.0
    %3012 = vmatprep.subr.mxu0 0.0
    %3013 = vmatpush1.msra.mxu0 0.0
    %3014 = vmatprep.subr.mxu0 0.0
    %3015 = vmatpush1.msra.mxu0 0.0
    %3016 = vmatprep.subr.mxu0 0.0
    %3017 = vmatpush1.msra.mxu0 0.0
    %3018 = vmatprep.subr.mxu0 0.0
    %3019 = vmatpush1.msra.mxu0 0.0
    %3020 = vmatprep.subr.mxu0 0.0
    %3021 = vmatpush1.msra.mxu0 0.0
    %3022 = vmatprep.subr.mxu0 0.0
    %3023 = vmatpush1.msra.mxu0 0.0
    %3024 = vmatprep.subr.mxu0 0.0
    %3025 = vmatpush1.msra.mxu0 0.0
    %3026 = vmatprep.subr.mxu0 0.0
    %3027 = vmatpush1.msra.mxu0 0.0
    %3028 = vmatprep.subr.mxu0 0.0
    %3029 = vmatpush1.msra.mxu0 0.0
    %3030 = vmatprep.subr.mxu0 0.0
    %3031 = vmatpush1.msra.mxu0 0.0
    %3032 = vmatprep.subr.mxu0 0.0
    %3033 = vmatpush1.msra.mxu0 0.0
    %3034 = vmatprep.subr.mxu0 0.0
    %3035 = vmatpush1.msra.mxu0 0.0
    %3036 = vmatprep.subr.mxu0 0.0
    %3037 = vmatpush1.msra.mxu0 0.0
    %3038 = vmatprep.subr.mxu0 0.0
    %3039 = vmatpush1.msra.mxu0 0.0
    %3040 = vmatprep.subr.mxu0 0.0
    %3041 = vmatpush1.msra.mxu0 0.0
    %3042 = vmatprep.subr.mxu0 0.0
    %3043 = vmatpush1.msra.mxu0 0.0
    %3044 = vmatprep.mubr.f32.mxu0 0.0
    %3045 = vmatmul.mubr.f32.gmra.mrb[0].mxu0 %v2976
    %v3046 = vpop.f32.mrb[0].mxu0
    %v3047 = vadd.f32 0.0, %v3046
    %v3048 = vpop.f32.mrb[0].mxu0
    %3049 = vdwg.mxu0
    %3050 = vrot.lane.b32.xlu0 %v2608, 64
    %v3051 = vpop.permute.xlu0 %3050
    %v3053 = vsel %vm685, %v2962, 0
    %v3055 = vsel %vm689, %v3051, 0
    %3057 = vmatprep.subr.mxu0 0.0
    %3058 = vmatpush1.msra.mxu0 %v3055
    %3059 = vmatprep.subr.mxu0 0.0
    %3060 = vmatpush1.msra.mxu0 0.0
    %3061 = vmatprep.subr.mxu0 0.0
    %3062 = vmatpush1.msra.mxu0 0.0
    %3063 = vmatprep.subr.mxu0 0.0
    %3064 = vmatpush1.msra.mxu0 0.0
    %3065 = vmatprep.subr.mxu0 0.0
    %3066 = vmatpush1.msra.mxu0 0.0
    %3067 = vmatprep.subr.mxu0 0.0
    %3068 = vmatpush1.msra.mxu0 0.0
    %3069 = vmatprep.subr.mxu0 0.0
    %3070 = vmatpush1.msra.mxu0 0.0
    %3071 = vmatprep.subr.mxu0 0.0
    %3072 = vmatpush1.msra.mxu0 0.0
    %3073 = vmatprep.subr.mxu0 0.0
    %3074 = vmatpush1.msra.mxu0 0.0
    %3075 = vmatprep.subr.mxu0 0.0
    %3076 = vmatpush1.msra.mxu0 0.0
    %3077 = vmatprep.subr.mxu0 0.0
    %3078 = vmatpush1.msra.mxu0 0.0
    %3079 = vmatprep.subr.mxu0 0.0
    %3080 = vmatpush1.msra.mxu0 0.0
    %3081 = vmatprep.subr.mxu0 0.0
    %3082 = vmatpush1.msra.mxu0 0.0
    %3083 = vmatprep.subr.mxu0 0.0
    %3084 = vmatpush1.msra.mxu0 0.0
    %3085 = vmatprep.subr.mxu0 0.0
    %3086 = vmatpush1.msra.mxu0 0.0
    %3087 = vmatprep.subr.mxu0 0.0
    %3088 = vmatpush1.msra.mxu0 0.0
    %3089 = vmatprep.subr.mxu0 0.0
    %3090 = vmatpush1.msra.mxu0 0.0
    %3091 = vmatprep.subr.mxu0 0.0
    %3092 = vmatpush1.msra.mxu0 0.0
    %3093 = vmatprep.subr.mxu0 0.0
    %3094 = vmatpush1.msra.mxu0 0.0
    %3095 = vmatprep.subr.mxu0 0.0
    %3096 = vmatpush1.msra.mxu0 0.0
    %3097 = vmatprep.subr.mxu0 0.0
    %3098 = vmatpush1.msra.mxu0 0.0
    %3099 = vmatprep.subr.mxu0 0.0
    %3100 = vmatpush1.msra.mxu0 0.0
    %3101 = vmatprep.subr.mxu0 0.0
    %3102 = vmatpush1.msra.mxu0 0.0
    %3103 = vmatprep.subr.mxu0 0.0
    %3104 = vmatpush1.msra.mxu0 0.0
    %3105 = vmatprep.subr.mxu0 0.0
    %3106 = vmatpush1.msra.mxu0 0.0
    %3107 = vmatprep.subr.mxu0 0.0
    %3108 = vmatpush1.msra.mxu0 0.0
    %3109 = vmatprep.subr.mxu0 0.0
    %3110 = vmatpush1.msra.mxu0 0.0
    %3111 = vmatprep.subr.mxu0 0.0
    %3112 = vmatpush1.msra.mxu0 0.0
    %3113 = vmatprep.subr.mxu0 0.0
    %3114 = vmatpush1.msra.mxu0 0.0
    %3115 = vmatprep.subr.mxu0 0.0
    %3116 = vmatpush1.msra.mxu0 0.0
    %3117 = vmatprep.subr.mxu0 0.0
    %3118 = vmatpush1.msra.mxu0 0.0
    %3119 = vmatprep.subr.mxu0 0.0
    %3120 = vmatpush1.msra.mxu0 0.0
    %3121 = vmatprep.mubr.f32.mxu0 0.0
    %3122 = vmatmul.mubr.f32.gmra.mrb[0].mxu0 %v3053
    %v3123 = vpop.f32.mrb[0].mxu0
    %v3124 = vadd.f32 0.0, %v3123
    %v3125 = vpop.f32.mrb[0].mxu0
    %3126 = vdwg.mxu0
    %3127 = vrot.lane.b32.xlu0 %v2610, 64
    %v3128 = vpop.permute.xlu0 %3127
    %v3130 = vsel %vm685, %v2963, 0
    %v3132 = vsel %vm689, %v3128, 0
    %3134 = vmatprep.subr.mxu0 0.0
    %3135 = vmatpush1.msra.mxu0 %v3132
    %3136 = vmatprep.subr.mxu0 0.0
    %3137 = vmatpush1.msra.mxu0 0.0
    %3138 = vmatprep.subr.mxu0 0.0
    %3139 = vmatpush1.msra.mxu0 0.0
    %3140 = vmatprep.subr.mxu0 0.0
    %3141 = vmatpush1.msra.mxu0 0.0
    %3142 = vmatprep.subr.mxu0 0.0
    %3143 = vmatpush1.msra.mxu0 0.0
    %3144 = vmatprep.subr.mxu0 0.0
    %3145 = vmatpush1.msra.mxu0 0.0
    %3146 = vmatprep.subr.mxu0 0.0
    %3147 = vmatpush1.msra.mxu0 0.0
    %3148 = vmatprep.subr.mxu0 0.0
    %3149 = vmatpush1.msra.mxu0 0.0
    %3150 = vmatprep.subr.mxu0 0.0
    %3151 = vmatpush1.msra.mxu0 0.0
    %3152 = vmatprep.subr.mxu0 0.0
    %3153 = vmatpush1.msra.mxu0 0.0
    %3154 = vmatprep.subr.mxu0 0.0
    %3155 = vmatpush1.msra.mxu0 0.0
    %3156 = vmatprep.subr.mxu0 0.0
    %3157 = vmatpush1.msra.mxu0 0.0
    %3158 = vmatprep.subr.mxu0 0.0
    %3159 = vmatpush1.msra.mxu0 0.0
    %3160 = vmatprep.subr.mxu0 0.0
    %3161 = vmatpush1.msra.mxu0 0.0
    %3162 = vmatprep.subr.mxu0 0.0
    %3163 = vmatpush1.msra.mxu0 0.0
    %3164 = vmatprep.subr.mxu0 0.0
    %3165 = vmatpush1.msra.mxu0 0.0
    %3166 = vmatprep.subr.mxu0 0.0
    %3167 = vmatpush1.msra.mxu0 0.0
    %3168 = vmatprep.subr.mxu0 0.0
    %3169 = vmatpush1.msra.mxu0 0.0
    %3170 = vmatprep.subr.mxu0 0.0
    %3171 = vmatpush1.msra.mxu0 0.0
    %3172 = vmatprep.subr.mxu0 0.0
    %3173 = vmatpush1.msra.mxu0 0.0
    %3174 = vmatprep.subr.mxu0 0.0
    %3175 = vmatpush1.msra.mxu0 0.0
    %3176 = vmatprep.subr.mxu0 0.0
    %3177 = vmatpush1.msra.mxu0 0.0
    %3178 = vmatprep.subr.mxu0 0.0
    %3179 = vmatpush1.msra.mxu0 0.0
    %3180 = vmatprep.subr.mxu0 0.0
    %3181 = vmatpush1.msra.mxu0 0.0
    %3182 = vmatprep.subr.mxu0 0.0
    %3183 = vmatpush1.msra.mxu0 0.0
    %3184 = vmatprep.subr.mxu0 0.0
    %3185 = vmatpush1.msra.mxu0 0.0
    %3186 = vmatprep.subr.mxu0 0.0
    %3187 = vmatpush1.msra.mxu0 0.0
    %3188 = vmatprep.subr.mxu0 0.0
    %3189 = vmatpush1.msra.mxu0 0.0
    %3190 = vmatprep.subr.mxu0 0.0
    %3191 = vmatpush1.msra.mxu0 0.0
    %3192 = vmatprep.subr.mxu0 0.0
    %3193 = vmatpush1.msra.mxu0 0.0
    %3194 = vmatprep.subr.mxu0 0.0
    %3195 = vmatpush1.msra.mxu0 0.0
    %3196 = vmatprep.subr.mxu0 0.0
    %3197 = vmatpush1.msra.mxu0 0.0
    %3198 = vmatprep.mubr.f32.mxu0 0.0
    %3199 = vmatmul.mubr.f32.gmra.mrb[0].mxu0 %v3130
    %v3200 = vpop.f32.mrb[0].mxu0
    %v3201 = vadd.f32 0.0, %v3200
    %v3202 = vpop.f32.mrb[0].mxu0
    %3203 = vdwg.mxu0
    %3204 = vrot.lane.b32.xlu0 %v2612, 64
    %v3205 = vpop.permute.xlu0 %3204
    %v3207 = vsel %vm685, %v2964, 0
    %v3209 = vsel %vm689, %v3205, 0
    %3211 = vmatprep.subr.mxu0 0.0
    %3212 = vmatpush1.msra.mxu0 %v3209
    %3213 = vmatprep.subr.mxu0 0.0
    %3214 = vmatpush1.msra.mxu0 0.0
    %3215 = vmatprep.subr.mxu0 0.0
    %3216 = vmatpush1.msra.mxu0 0.0
    %3217 = vmatprep.subr.mxu0 0.0
    %3218 = vmatpush1.msra.mxu0 0.0
    %3219 = vmatprep.subr.mxu0 0.0
    %3220 = vmatpush1.msra.mxu0 0.0
    %3221 = vmatprep.subr.mxu0 0.0
    %3222 = vmatpush1.msra.mxu0 0.0
    %3223 = vmatprep.subr.mxu0 0.0
    %3224 = vmatpush1.msra.mxu0 0.0
    %3225 = vmatprep.subr.mxu0 0.0
    %3226 = vmatpush1.msra.mxu0 0.0
    %3227 = vmatprep.subr.mxu0 0.0
    %3228 = vmatpush1.msra.mxu0 0.0
    %3229 = vmatprep.subr.mxu0 0.0
    %3230 = vmatpush1.msra.mxu0 0.0
    %3231 = vmatprep.subr.mxu0 0.0
    %3232 = vmatpush1.msra.mxu0 0.0
    %3233 = vmatprep.subr.mxu0 0.0
    %3234 = vmatpush1.msra.mxu0 0.0
    %3235 = vmatprep.subr.mxu0 0.0
    %3236 = vmatpush1.msra.mxu0 0.0
    %3237 = vmatprep.subr.mxu0 0.0
    %3238 = vmatpush1.msra.mxu0 0.0
    %3239 = vmatprep.subr.mxu0 0.0
    %3240 = vmatpush1.msra.mxu0 0.0
    %3241 = vmatprep.subr.mxu0 0.0
    %3242 = vmatpush1.msra.mxu0 0.0
    %3243 = vmatprep.subr.mxu0 0.0
    %3244 = vmatpush1.msra.mxu0 0.0
    %3245 = vmatprep.subr.mxu0 0.0
    %3246 = vmatpush1.msra.mxu0 0.0
    %3247 = vmatprep.subr.mxu0 0.0
    %3248 = vmatpush1.msra.mxu0 0.0
    %3249 = vmatprep.subr.mxu0 0.0
    %3250 = vmatpush1.msra.mxu0 0.0
    %3251 = vmatprep.subr.mxu0 0.0
    %3252 = vmatpush1.msra.mxu0 0.0
    %3253 = vmatprep.subr.mxu0 0.0
    %3254 = vmatpush1.msra.mxu0 0.0
    %3255 = vmatprep.subr.mxu0 0.0
    %3256 = vmatpush1.msra.mxu0 0.0
    %3257 = vmatprep.subr.mxu0 0.0
    %3258 = vmatpush1.msra.mxu0 0.0
    %3259 = vmatprep.subr.mxu0 0.0
    %3260 = vmatpush1.msra.mxu0 0.0
    %3261 = vmatprep.subr.mxu0 0.0
    %3262 = vmatpush1.msra.mxu0 0.0
    %3263 = vmatprep.subr.mxu0 0.0
    %3264 = vmatpush1.msra.mxu0 0.0
    %3265 = vmatprep.subr.mxu0 0.0
    %3266 = vmatpush1.msra.mxu0 0.0
    %3267 = vmatprep.subr.mxu0 0.0
    %3268 = vmatpush1.msra.mxu0 0.0
    %3269 = vmatprep.subr.mxu0 0.0
    %3270 = vmatpush1.msra.mxu0 0.0
    %3271 = vmatprep.subr.mxu0 0.0
    %3272 = vmatpush1.msra.mxu0 0.0
    %3273 = vmatprep.subr.mxu0 0.0
    %3274 = vmatpush1.msra.mxu0 0.0
    %3275 = vmatprep.mubr.f32.mxu0 0.0
    %3276 = vmatmul.mubr.f32.gmra.mrb[0].mxu0 %v3207
    %v3277 = vpop.f32.mrb[0].mxu0
    %v3278 = vadd.f32 0.0, %v3277
    %v3279 = vpop.f32.mrb[0].mxu0
    %3280 = vdwg.mxu0
    %3282 = vrot.lane.b32.xlu0 %v3124, 8
    %v3283 = vpop.permute.xlu0 %3282
    %3286 = vrot.lane.b32.xlu0 %v3201, 16
    %v3287 = vpop.permute.xlu0 %3286
    %3290 = vrot.lane.b32.xlu0 %v3278, 24
    %v3291 = vpop.permute.xlu0 %3290
    %v3293 = vsel %vm322, %v3047, %v3283
    %v3294 = vsel %vm1006, %v3293, %v3287
    %v3295 = vsel %vm1008, %v3294, %v3291
    %v3296 = vld [vmem:[%s9] sm:$0xff]
    %v3297 = vld [vmem:[%s9 + $0x8] sm:$0xff]
    %v3298 = vld [vmem:[%s9 + $0x10] sm:$0xff]
    %v3299 = vld [vmem:[%s9 + $0x18] sm:$0xff]
    %v3300 = vld [vmem:[%s10] sm:$0x1]
    %v3302 = vlaneseq
    %v3303 = vshrl.u32 %v3302, 7
    %v3304 = vsub.s32 0, %v3303
    %v3305 = vrot.slane %v3300, %v3304
    %v3308 = vsel %vm239, %v3295, 0
    %3310 = vmatprep.subr.mxu0 0.0
    %3311 = vmatpush1.msra.mxu0 %v3296
    %3312 = vmatprep.subr.mxu0 0.0
    %3313 = vmatpush1.msra.mxu0 %v3297
    %3314 = vmatprep.subr.mxu0 0.0
    %3315 = vmatpush1.msra.mxu0 %v3298
    %3316 = vmatprep.subr.mxu0 0.0
    %3317 = vmatpush1.msra.mxu0 %v3299
    %3318 = vmatprep.subr.mxu0 0.0
    %3319 = vmatpush1.msra.mxu0 0.0
    %3320 = vmatprep.subr.mxu0 0.0
    %3321 = vmatpush1.msra.mxu0 0.0
    %3322 = vmatprep.subr.mxu0 0.0
    %3323 = vmatpush1.msra.mxu0 0.0
    %3324 = vmatprep.subr.mxu0 0.0
    %3325 = vmatpush1.msra.mxu0 0.0
    %3326 = vmatprep.subr.mxu0 0.0
    %3327 = vmatpush1.msra.mxu0 0.0
    %3328 = vmatprep.subr.mxu0 0.0
    %3329 = vmatpush1.msra.mxu0 0.0
    %3330 = vmatprep.subr.mxu0 0.0
    %3331 = vmatpush1.msra.mxu0 0.0
    %3332 = vmatprep.subr.mxu0 0.0
    %3333 = vmatpush1.msra.mxu0 0.0
    %3334 = vmatprep.subr.mxu0 0.0
    %3335 = vmatpush1.msra.mxu0 0.0
    %3336 = vmatprep.subr.mxu0 0.0
    %3337 = vmatpush1.msra.mxu0 0.0
    %3338 = vmatprep.subr.mxu0 0.0
    %3339 = vmatpush1.msra.mxu0 0.0
    %3340 = vmatprep.subr.mxu0 0.0
    %3341 = vmatpush1.msra.mxu0 0.0
    %3342 = vmatprep.subr.mxu0 0.0
    %3343 = vmatpush1.msra.mxu0 0.0
    %3344 = vmatprep.subr.mxu0 0.0
    %3345 = vmatpush1.msra.mxu0 0.0
    %3346 = vmatprep.subr.mxu0 0.0
    %3347 = vmatpush1.msra.mxu0 0.0
    %3348 = vmatprep.subr.mxu0 0.0
    %3349 = vmatpush1.msra.mxu0 0.0
    %3350 = vmatprep.subr.mxu0 0.0
    %3351 = vmatpush1.msra.mxu0 0.0
    %3352 = vmatprep.subr.mxu0 0.0
    %3353 = vmatpush1.msra.mxu0 0.0
    %3354 = vmatprep.subr.mxu0 0.0
    %3355 = vmatpush1.msra.mxu0 0.0
    %3356 = vmatprep.subr.mxu0 0.0
    %3357 = vmatpush1.msra.mxu0 0.0
    %3358 = vmatprep.subr.mxu0 0.0
    %3359 = vmatpush1.msra.mxu0 0.0
    %3360 = vmatprep.subr.mxu0 0.0
    %3361 = vmatpush1.msra.mxu0 0.0
    %3362 = vmatprep.subr.mxu0 0.0
    %3363 = vmatpush1.msra.mxu0 0.0
    %3364 = vmatprep.subr.mxu0 0.0
    %3365 = vmatpush1.msra.mxu0 0.0
    %3366 = vmatprep.subr.mxu0 0.0
    %3367 = vmatpush1.msra.mxu0 0.0
    %3368 = vmatprep.subr.mxu0 0.0
    %3369 = vmatpush1.msra.mxu0 0.0
    %3370 = vmatprep.subr.mxu0 0.0
    %3371 = vmatpush1.msra.mxu0 0.0
    %3372 = vmatprep.subr.mxu0 0.0
    %3373 = vmatpush1.msra.mxu0 0.0
    %3374 = vmatprep.mubr.f32.mxu0 0.0
    %3375 = vmatmul.mubr.f32.gmra.mrb[0].mxu0 %v3308
    %v3376 = vpop.f32.mrb[0].mxu0
    %v3377 = vadd.f32 %v3305, %v3376
    %v3378 = vpop.f32.mrb[0].mxu0
    %3379 = vdwg.mxu0
    %v3380 = vadd.f32 %v2492, %v3377
    %v3381 = vld [vmem:[%s11] sm:$0x1]
    %v3382 = vld [vmem:[%s12] sm:$0x1]
    %v3383 = vsel %vm199, %v3380, 0.0
    %3384 = vadd.xlane.f32.xlu0 %v3383
    %v3385 = vpop.xlane.xlu0 %3384
    %v3386 = vmul.f32 %v3385, %v203
    %v3387 = vsub.f32 %v3380, %v3386
    %v3388 = vmul.f32 %v3387, %v3387
    %v3389 = vsel %vm199, %v3388, 0.0
    %3390 = vadd.xlane.f32.xlu0 %v3389
    %v3391 = vpop.xlane.xlu0 %3390
    %v3392 = vmul.f32 %v3391, %v203
    %v3393 = vadd.f32 %v3392, 1e-05
    %v3394 = vrsqrt.pop %v3393
    %v3395 = vmul.f32 %v3387, %v3394
    %v3397 = vlaneseq
    %v3398 = vshrl.u32 %v3397, 7
    %v3399 = vsub.s32 0, %v3398
    %v3400 = vrot.slane %v3381, %v3399
    %v3402 = vmul.f32 %v3395, %v3400
    %v3404 = vlaneseq
    %v3405 = vshrl.u32 %v3404, 7
    %v3406 = vsub.s32 0, %v3405
    %v3407 = vrot.slane %v3382, %v3406
    %v3409 = vadd.f32 %v3402, %v3407
    %v3410 = vld [vmem:[%s13] sm:$0xff]
    %v3411 = vld [vmem:[%s13 + $0x8] sm:$0xff]
    %v3412 = vld [vmem:[%s13 + $0x10] sm:$0xff]
    %v3413 = vld [vmem:[%s13 + $0x18] sm:$0xff]
    %v3414 = vld [vmem:[%s14] sm:$0x1]
    %v3416 = vlaneseq
    %v3417 = vshrl.u32 %v3416, 7
    %v3418 = vsub.s32 0, %v3417
    %v3419 = vrot.slane %v3414, %v3418
    %v3422 = vsel %vm239, %v3409, 0
    %3424 = vmatprep.subr.mxu0 0.0
    %3425 = vmatpush1.msra.mxu0 %v3410
    %3426 = vmatprep.subr.mxu0 0.0
    %3427 = vmatpush1.msra.mxu0 %v3411
    %3428 = vmatprep.subr.mxu0 0.0
    %3429 = vmatpush1.msra.mxu0 %v3412
    %3430 = vmatprep.subr.mxu0 0.0
    %3431 = vmatpush1.msra.mxu0 %v3413
    %3432 = vmatprep.subr.mxu0 0.0
    %3433 = vmatpush1.msra.mxu0 0.0
    %3434 = vmatprep.subr.mxu0 0.0
    %3435 = vmatpush1.msra.mxu0 0.0
    %3436 = vmatprep.subr.mxu0 0.0
    %3437 = vmatpush1.msra.mxu0 0.0
    %3438 = vmatprep.subr.mxu0 0.0
    %3439 = vmatpush1.msra.mxu0 0.0
    %3440 = vmatprep.subr.mxu0 0.0
    %3441 = vmatpush1.msra.mxu0 0.0
    %3442 = vmatprep.subr.mxu0 0.0
    %3443 = vmatpush1.msra.mxu0 0.0
    %3444 = vmatprep.subr.mxu0 0.0
    %3445 = vmatpush1.msra.mxu0 0.0
    %3446 = vmatprep.subr.mxu0 0.0
    %3447 = vmatpush1.msra.mxu0 0.0
    %3448 = vmatprep.subr.mxu0 0.0
    %3449 = vmatpush1.msra.mxu0 0.0
    %3450 = vmatprep.subr.mxu0 0.0
    %3451 = vmatpush1.msra.mxu0 0.0
    %3452 = vmatprep.subr.mxu0 0.0
    %3453 = vmatpush1.msra.mxu0 0.0
    %3454 = vmatprep.subr.mxu0 0.0
    %3455 = vmatpush1.msra.mxu0 0.0
    %3456 = vmatprep.subr.mxu0 0.0
    %3457 = vmatpush1.msra.mxu0 0.0
    %3458 = vmatprep.subr.mxu0 0.0
    %3459 = vmatpush1.msra.mxu0 0.0
    %3460 = vmatprep.subr.mxu0 0.0
    %3461 = vmatpush1.msra.mxu0 0.0
    %3462 = vmatprep.subr.mxu0 0.0
    %3463 = vmatpush1.msra.mxu0 0.0
    %3464 = vmatprep.subr.mxu0 0.0
    %3465 = vmatpush1.msra.mxu0 0.0
    %3466 = vmatprep.subr.mxu0 0.0
    %3467 = vmatpush1.msra.mxu0 0.0
    %3468 = vmatprep.subr.mxu0 0.0
    %3469 = vmatpush1.msra.mxu0 0.0
    %3470 = vmatprep.subr.mxu0 0.0
    %3471 = vmatpush1.msra.mxu0 0.0
    %3472 = vmatprep.subr.mxu0 0.0
    %3473 = vmatpush1.msra.mxu0 0.0
    %3474 = vmatprep.subr.mxu0 0.0
    %3475 = vmatpush1.msra.mxu0 0.0
    %3476 = vmatprep.subr.mxu0 0.0
    %3477 = vmatpush1.msra.mxu0 0.0
    %3478 = vmatprep.subr.mxu0 0.0
    %3479 = vmatpush1.msra.mxu0 0.0
    %3480 = vmatprep.subr.mxu0 0.0
    %3481 = vmatpush1.msra.mxu0 0.0
    %3482 = vmatprep.subr.mxu0 0.0
    %3483 = vmatpush1.msra.mxu0 0.0
    %3484 = vmatprep.subr.mxu0 0.0
    %3485 = vmatpush1.msra.mxu0 0.0
    %3486 = vmatprep.subr.mxu0 0.0
    %3487 = vmatpush1.msra.mxu0 0.0
    %3488 = vmatprep.mubr.f32.mxu0 0.0
    %3489 = vmatmul.mubr.f32.gmra.mrb[0].mxu0 %v3422
    %v3490 = vpop.f32.mrb[0].mxu0
    %v3491 = vadd.f32 %v3419, %v3490
    %v3492 = vpop.f32.mrb[0].mxu0
    %3493 = vdwg.mxu0
    %v3494 = vmul.f32 %v3491, 0.5
    %v3495 = vmul.f32 %v3491, 0.70710677
    %v3496 = verf.f32.pop %v3495
    %v3497 = vadd.f32 %v3496, 1.0
    %v3498 = vmul.f32 %v3494, %v3497
    %v3499 = vld [vmem:[%s15] sm:$0xff]
    %v3500 = vld [vmem:[%s15 + $0x8] sm:$0xff]
    %v3501 = vld [vmem:[%s15 + $0x10] sm:$0xff]
    %v3502 = vld [vmem:[%s15 + $0x18] sm:$0xff]
    %v3503 = vld [vmem:[%s15 + $0x20] sm:$0xff]
    %v3504 = vld [vmem:[%s15 + $0x28] sm:$0xff]
    %v3505 = vld [vmem:[%s15 + $0x30] sm:$0xff]
    %v3506 = vld [vmem:[%s15 + $0x38] sm:$0xff]
    %v3507 = vld [vmem:[%s16] sm:$0x1]
    %v3509 = vlaneseq
    %v3510 = vshrl.u32 %v3509, 7
    %v3511 = vsub.s32 0, %v3510
    %v3512 = vrot.slane %v3507, %v3511
    %v3515 = vsel %vm1228, %v3498, 0
    %3517 = vmatprep.subr.mxu0 0.0
    %3518 = vmatpush1.msra.mxu0 %v3499
    %3519 = vmatprep.subr.mxu0 0.0
    %3520 = vmatpush1.msra.mxu0 %v3500
    %3521 = vmatprep.subr.mxu0 0.0
    %3522 = vmatpush1.msra.mxu0 %v3501
    %3523 = vmatprep.subr.mxu0 0.0
    %3524 = vmatpush1.msra.mxu0 %v3502
    %3525 = vmatprep.subr.mxu0 0.0
    %3526 = vmatpush1.msra.mxu0 %v3503
    %3527 = vmatprep.subr.mxu0 0.0
    %3528 = vmatpush1.msra.mxu0 %v3504
    %3529 = vmatprep.subr.mxu0 0.0
    %3530 = vmatpush1.msra.mxu0 %v3505
    %3531 = vmatprep.subr.mxu0 0.0
    %3532 = vmatpush1.msra.mxu0 %v3506
    %3533 = vmatprep.subr.mxu0 0.0
    %3534 = vmatpush1.msra.mxu0 0.0
    %3535 = vmatprep.subr.mxu0 0.0
    %3536 = vmatpush1.msra.mxu0 0.0
    %3537 = vmatprep.subr.mxu0 0.0
    %3538 = vmatpush1.msra.mxu0 0.0
    %3539 = vmatprep.subr.mxu0 0.0
    %3540 = vmatpush1.msra.mxu0 0.0
    %3541 = vmatprep.subr.mxu0 0.0
    %3542 = vmatpush1.msra.mxu0 0.0
    %3543 = vmatprep.subr.mxu0 0.0
    %3544 = vmatpush1.msra.mxu0 0.0
    %3545 = vmatprep.subr.mxu0 0.0
    %3546 = vmatpush1.msra.mxu0 0.0
    %3547 = vmatprep.subr.mxu0 0.0
    %3548 = vmatpush1.msra.mxu0 0.0
    %3549 = vmatprep.subr.mxu0 0.0
    %3550 = vmatpush1.msra.mxu0 0.0
    %3551 = vmatprep.subr.mxu0 0.0
    %3552 = vmatpush1.msra.mxu0 0.0
    %3553 = vmatprep.subr.mxu0 0.0
    %3554 = vmatpush1.msra.mxu0 0.0
    %3555 = vmatprep.subr.mxu0 0.0
    %3556 = vmatpush1.msra.mxu0 0.0
    %3557 = vmatprep.subr.mxu0 0.0
    %3558 = vmatpush1.msra.mxu0 0.0
    %3559 = vmatprep.subr.mxu0 0.0
    %3560 = vmatpush1.msra.mxu0 0.0
    %3561 = vmatprep.subr.mxu0 0.0
    %3562 = vmatpush1.msra.mxu0 0.0
    %3563 = vmatprep.subr.mxu0 0.0
    %3564 = vmatpush1.msra.mxu0 0.0
    %3565 = vmatprep.subr.mxu0 0.0
    %3566 = vmatpush1.msra.mxu0 0.0
    %3567 = vmatprep.subr.mxu0 0.0
    %3568 = vmatpush1.msra.mxu0 0.0
    %3569 = vmatprep.subr.mxu0 0.0
    %3570 = vmatpush1.msra.mxu0 0.0
    %3571 = vmatprep.subr.mxu0 0.0
    %3572 = vmatpush1.msra.mxu0 0.0
    %3573 = vmatprep.subr.mxu0 0.0
    %3574 = vmatpush1.msra.mxu0 0.0
    %3575 = vmatprep.subr.mxu0 0.0
    %3576 = vmatpush1.msra.mxu0 0.0
    %3577 = vmatprep.subr.mxu0 0.0
    %3578 = vmatpush1.msra.mxu0 0.0
    %3579 = vmatprep.subr.mxu0 0.0
    %3580 = vmatpush1.msra.mxu0 0.0
    %3581 = vmatprep.mubr.f32.mxu0 0.0
    %3582 = vmatmul.mubr.f32.gmra.mrb[0].mxu0 %v3515
    %v3583 = vpop.f32.mrb[0].mxu0
    %v3584 = vadd.f32 %v3512, %v3583
    %v3585 = vpop.f32.mrb[0].mxu0
    %3586 = vdwg.mxu0
    %v3587 = vadd.f32 %v3380, %v3584
    %v3588 = vld [vmem:[%s1303] sm:$0x1]
    %v3589 = vld [vmem:[%s1305] sm:$0x1]
    %v3590 = vsel %vm199, %v3587, 0.0
    %3591 = vadd.xlane.f32.xlu0 %v3590
    %v3592 = vpop.xlane.xlu0 %3591
    %v3593 = vmul.f32 %v3592, %v203
    %v3594 = vsub.f32 %v3587, %v3593
    %v3595 = vmul.f32 %v3594, %v3594
    %v3596 = vsel %vm199, %v3595, 0.0
    %3597 = vadd.xlane.f32.xlu0 %v3596
    %v3598 = vpop.xlane.xlu0 %3597
    %v3599 = vmul.f32 %v3598, %v203
    %v3600 = vadd.f32 %v3599, 1e-05
    %v3601 = vrsqrt.pop %v3600
    %v3602 = vmul.f32 %v3594, %v3601
    %v3604 = vlaneseq
    %v3605 = vshrl.u32 %v3604, 7
    %v3606 = vsub.s32 0, %v3605
    %v3607 = vrot.slane %v3588, %v3606
    %v3609 = vmul.f32 %v3602, %v3607
    %v3611 = vlaneseq
    %v3612 = vshrl.u32 %v3611, 7
    %v3613 = vsub.s32 0, %v3612
    %v3614 = vrot.slane %v3589, %v3613
    %v3616 = vadd.f32 %v3609, %v3614
    %v3617 = vld [vmem:[%s1334] sm:$0xff]
    %v3618 = vld [vmem:[%s1334 + $0x8] sm:$0xff]
    %v3619 = vld [vmem:[%s1334 + $0x10] sm:$0xff]
    %v3620 = vld [vmem:[%s1334 + $0x18] sm:$0xff]
    %v3621 = vld [vmem:[%s1339] sm:$0x1]
    %v3623 = vlaneseq
    %v3624 = vshrl.u32 %v3623, 7
    %v3625 = vsub.s32 0, %v3624
    %v3626 = vrot.slane %v3621, %v3625
    %v3629 = vsel %vm239, %v3616, 0
    %3631 = vmatprep.subr.mxu0 0.0
    %3632 = vmatpush1.msra.mxu0 %v3617
    %3633 = vmatprep.subr.mxu0 0.0
    %3634 = vmatpush1.msra.mxu0 %v3618
    %3635 = vmatprep.subr.mxu0 0.0
    %3636 = vmatpush1.msra.mxu0 %v3619
    %3637 = vmatprep.subr.mxu0 0.0
    %3638 = vmatpush1.msra.mxu0 %v3620
    %3639 = vmatprep.subr.mxu0 0.0
    %3640 = vmatpush1.msra.mxu0 0.0
    %3641 = vmatprep.subr.mxu0 0.0
    %3642 = vmatpush1.msra.mxu0 0.0
    %3643 = vmatprep.subr.mxu0 0.0
    %3644 = vmatpush1.msra.mxu0 0.0
    %3645 = vmatprep.subr.mxu0 0.0
    %3646 = vmatpush1.msra.mxu0 0.0
    %3647 = vmatprep.subr.mxu0 0.0
    %3648 = vmatpush1.msra.mxu0 0.0
    %3649 = vmatprep.subr.mxu0 0.0
    %3650 = vmatpush1.msra.mxu0 0.0
    %3651 = vmatprep.subr.mxu0 0.0
    %3652 = vmatpush1.msra.mxu0 0.0
    %3653 = vmatprep.subr.mxu0 0.0
    %3654 = vmatpush1.msra.mxu0 0.0
    %3655 = vmatprep.subr.mxu0 0.0
    %3656 = vmatpush1.msra.mxu0 0.0
    %3657 = vmatprep.subr.mxu0 0.0
    %3658 = vmatpush1.msra.mxu0 0.0
    %3659 = vmatprep.subr.mxu0 0.0
    %3660 = vmatpush1.msra.mxu0 0.0
    %3661 = vmatprep.subr.mxu0 0.0
    %3662 = vmatpush1.msra.mxu0 0.0
    %3663 = vmatprep.subr.mxu0 0.0
    %3664 = vmatpush1.msra.mxu0 0.0
    %3665 = vmatprep.subr.mxu0 0.0
    %3666 = vmatpush1.msra.mxu0 0.0
    %3667 = vmatprep.subr.mxu0 0.0
    %3668 = vmatpush1.msra.mxu0 0.0
    %3669 = vmatprep.subr.mxu0 0.0
    %3670 = vmatpush1.msra.mxu0 0.0
    %3671 = vmatprep.subr.mxu0 0.0
    %3672 = vmatpush1.msra.mxu0 0.0
    %3673 = vmatprep.subr.mxu0 0.0
    %3674 = vmatpush1.msra.mxu0 0.0
    %3675 = vmatprep.subr.mxu0 0.0
    %3676 = vmatpush1.msra.mxu0 0.0
    %3677 = vmatprep.subr.mxu0 0.0
    %3678 = vmatpush1.msra.mxu0 0.0
    %3679 = vmatprep.subr.mxu0 0.0
    %3680 = vmatpush1.msra.mxu0 0.0
    %3681 = vmatprep.subr.mxu0 0.0
    %3682 = vmatpush1.msra.mxu0 0.0
    %3683 = vmatprep.subr.mxu0 0.0
    %3684 = vmatpush1.msra.mxu0 0.0
    %3685 = vmatprep.subr.mxu0 0.0
    %3686 = vmatpush1.msra.mxu0 0.0
    %3687 = vmatprep.subr.mxu0 0.0
    %3688 = vmatpush1.msra.mxu0 0.0
    %3689 = vmatprep.subr.mxu0 0.0
    %3690 = vmatpush1.msra.mxu0 0.0
    %3691 = vmatprep.subr.mxu0 0.0
    %3692 = vmatpush1.msra.mxu0 0.0
    %3693 = vmatprep.subr.mxu0 0.0
    %3694 = vmatpush1.msra.mxu0 0.0
    %3695 = vmatprep.mubr.f32.mxu0 0.0
    %3696 = vmatmul.mubr.f32.gmra.mrb[0].mxu0 %v3629
    %v3697 = vpop.f32.mrb[0].mxu0
    %v3698 = vadd.f32 %v3626, %v3697
    %v3699 = vpop.f32.mrb[0].mxu0
    %3700 = vdwg.mxu0
    %3702 = vrot.lane.b32.xlu0 %v3698, 120
    %v3703 = vpop.permute.xlu0 %3702
    %3704 = vrot.lane.b32.xlu0 %v3698, 112
    %v3705 = vpop.permute.xlu0 %3704
    %3706 = vrot.lane.b32.xlu0 %v3698, 104
    %v3707 = vpop.permute.xlu0 %3706
    %3708 = vrot.lane.b32.xlu0 %v3698, 96
    %v3709 = vpop.permute.xlu0 %3708
    %v3710 = vsel %vm322, %v3698, 0
    %v3712 = vsel %vm322, %v3709, 0
    %3714 = vmatprep.subr.mxu0 0.0
    %3715 = vmatpush1.xpose.msra.mxu0 %v3712
    %3716 = vmatprep.subr.mxu0 0.0
    %3717 = vmatpush1.xpose.msra.mxu0 0.0
    %3718 = vmatprep.subr.mxu0 0.0
    %3719 = vmatpush1.xpose.msra.mxu0 0.0
    %3720 = vmatprep.subr.mxu0 0.0
    %3721 = vmatpush1.xpose.msra.mxu0 0.0
    %3722 = vmatprep.subr.mxu0 0.0
    %3723 = vmatpush1.xpose.msra.mxu0 0.0
    %3724 = vmatprep.subr.mxu0 0.0
    %3725 = vmatpush1.xpose.msra.mxu0 0.0
    %3726 = vmatprep.subr.mxu0 0.0
    %3727 = vmatpush1.xpose.msra.mxu0 0.0
    %3728 = vmatprep.subr.mxu0 0.0
    %3729 = vmatpush1.xpose.msra.mxu0 0.0
    %3730 = vmatprep.subr.mxu0 0.0
    %3731 = vmatpush1.xpose.msra.mxu0 0.0
    %3732 = vmatprep.subr.mxu0 0.0
    %3733 = vmatpush1.xpose.msra.mxu0 0.0
    %3734 = vmatprep.subr.mxu0 0.0
    %3735 = vmatpush1.xpose.msra.mxu0 0.0
    %3736 = vmatprep.subr.mxu0 0.0
    %3737 = vmatpush1.xpose.msra.mxu0 0.0
    %3738 = vmatprep.subr.mxu0 0.0
    %3739 = vmatpush1.xpose.msra.mxu0 0.0
    %3740 = vmatprep.subr.mxu0 0.0
    %3741 = vmatpush1.xpose.msra.mxu0 0.0
    %3742 = vmatprep.subr.mxu0 0.0
    %3743 = vmatpush1.xpose.msra.mxu0 0.0
    %3744 = vmatprep.subr.mxu0 0.0
    %3745 = vmatpush1.xpose.msra.mxu0 0.0
    %3746 = vmatprep.subr.mxu0 0.0
    %3747 = vmatpush1.xpose.msra.mxu0 0.0
    %3748 = vmatprep.subr.mxu0 0.0
    %3749 = vmatpush1.xpose.msra.mxu0 0.0
    %3750 = vmatprep.subr.mxu0 0.0
    %3751 = vmatpush1.xpose.msra.mxu0 0.0
    %3752 = vmatprep.subr.mxu0 0.0
    %3753 = vmatpush1.xpose.msra.mxu0 0.0
    %3754 = vmatprep.subr.mxu0 0.0
    %3755 = vmatpush1.xpose.msra.mxu0 0.0
    %3756 = vmatprep.subr.mxu0 0.0
    %3757 = vmatpush1.xpose.msra.mxu0 0.0
    %3758 = vmatprep.subr.mxu0 0.0
    %3759 = vmatpush1.xpose.msra.mxu0 0.0
    %3760 = vmatprep.subr.mxu0 0.0
    %3761 = vmatpush1.xpose.msra.mxu0 0.0
    %3762 = vmatprep.subr.mxu0 0.0
    %3763 = vmatpush1.xpose.msra.mxu0 0.0
    %3764 = vmatprep.subr.mxu0 0.0
    %3765 = vmatpush1.xpose.msra.mxu0 0.0
    %3766 = vmatprep.subr.mxu0 0.0
    %3767 = vmatpush1.xpose.msra.mxu0 0.0
    %3768 = vmatprep.subr.mxu0 0.0
    %3769 = vmatpush1.xpose.msra.mxu0 0.0
    %3770 = vmatprep.subr.mxu0 0.0
    %3771 = vmatpush1.xpose.msra.mxu0 0.0
    %3772 = vmatprep.subr.mxu0 0.0
    %3773 = vmatpush1.xpose.msra.mxu0 0.0
    %3774 = vmatprep.subr.mxu0 0.0
    %3775 = vmatpush1.xpose.msra.mxu0 0.0
    %3776 = vmatprep.subr.mxu0 0.0
    %3777 = vmatpush1.xpose.msra.mxu0 0.0
    %3778 = vmatprep.mubr.f32.mxu0 0.0
    %3779 = vmatmul.mubr.f32.gmra.mrb[0].mxu0 %v3710
    %v3780 = vpop.f32.mrb[0].mxu0
    %v3781 = vadd.f32 0.0, %v3780
    %v3782 = vpop.f32.mrb[0].mxu0
    %3783 = vdwg.mxu0
    %3784 = vrot.lane.b32.xlu0 %v3703, 96
    %v3785 = vpop.permute.xlu0 %3784
    %v3786 = vsel %vm322, %v3703, 0
    %v3788 = vsel %vm322, %v3785, 0
    %3790 = vmatprep.subr.mxu0 0.0
    %3791 = vmatpush1.xpose.msra.mxu0 %v3788
    %3792 = vmatprep.subr.mxu0 0.0
    %3793 = vmatpush1.xpose.msra.mxu0 0.0
    %3794 = vmatprep.subr.mxu0 0.0
    %3795 = vmatpush1.xpose.msra.mxu0 0.0
    %3796 = vmatprep.subr.mxu0 0.0
    %3797 = vmatpush1.xpose.msra.mxu0 0.0
    %3798 = vmatprep.subr.mxu0 0.0
    %3799 = vmatpush1.xpose.msra.mxu0 0.0
    %3800 = vmatprep.subr.mxu0 0.0
    %3801 = vmatpush1.xpose.msra.mxu0 0.0
    %3802 = vmatprep.subr.mxu0 0.0
    %3803 = vmatpush1.xpose.msra.mxu0 0.0
    %3804 = vmatprep.subr.mxu0 0.0
    %3805 = vmatpush1.xpose.msra.mxu0 0.0
    %3806 = vmatprep.subr.mxu0 0.0
    %3807 = vmatpush1.xpose.msra.mxu0 0.0
    %3808 = vmatprep.subr.mxu0 0.0
    %3809 = vmatpush1.xpose.msra.mxu0 0.0
    %3810 = vmatprep.subr.mxu0 0.0
    %3811 = vmatpush1.xpose.msra.mxu0 0.0
    %3812 = vmatprep.subr.mxu0 0.0
    %3813 = vmatpush1.xpose.msra.mxu0 0.0
    %3814 = vmatprep.subr.mxu0 0.0
    %3815 = vmatpush1.xpose.msra.mxu0 0.0
    %3816 = vmatprep.subr.mxu0 0.0
    %3817 = vmatpush1.xpose.msra.mxu0 0.0
    %3818 = vmatprep.subr.mxu0 0.0
    %3819 = vmatpush1.xpose.msra.mxu0 0.0
    %3820 = vmatprep.subr.mxu0 0.0
    %3821 = vmatpush1.xpose.msra.mxu0 0.0
    %3822 = vmatprep.subr.mxu0 0.0
    %3823 = vmatpush1.xpose.msra.mxu0 0.0
    %3824 = vmatprep.subr.mxu0 0.0
    %3825 = vmatpush1.xpose.msra.mxu0 0.0
    %3826 = vmatprep.subr.mxu0 0.0
    %3827 = vmatpush1.xpose.msra.mxu0 0.0
    %3828 = vmatprep.subr.mxu0 0.0
    %3829 = vmatpush1.xpose.msra.mxu0 0.0
    %3830 = vmatprep.subr.mxu0 0.0
    %3831 = vmatpush1.xpose.msra.mxu0 0.0
    %3832 = vmatprep.subr.mxu0 0.0
    %3833 = vmatpush1.xpose.msra.mxu0 0.0
    %3834 = vmatprep.subr.mxu0 0.0
    %3835 = vmatpush1.xpose.msra.mxu0 0.0
    %3836 = vmatprep.subr.mxu0 0.0
    %3837 = vmatpush1.xpose.msra.mxu0 0.0
    %3838 = vmatprep.subr.mxu0 0.0
    %3839 = vmatpush1.xpose.msra.mxu0 0.0
    %3840 = vmatprep.subr.mxu0 0.0
    %3841 = vmatpush1.xpose.msra.mxu0 0.0
    %3842 = vmatprep.subr.mxu0 0.0
    %3843 = vmatpush1.xpose.msra.mxu0 0.0
    %3844 = vmatprep.subr.mxu0 0.0
    %3845 = vmatpush1.xpose.msra.mxu0 0.0
    %3846 = vmatprep.subr.mxu0 0.0
    %3847 = vmatpush1.xpose.msra.mxu0 0.0
    %3848 = vmatprep.subr.mxu0 0.0
    %3849 = vmatpush1.xpose.msra.mxu0 0.0
    %3850 = vmatprep.subr.mxu0 0.0
    %3851 = vmatpush1.xpose.msra.mxu0 0.0
    %3852 = vmatprep.subr.mxu0 0.0
    %3853 = vmatpush1.xpose.msra.mxu0 0.0
    %3854 = vmatprep.mubr.f32.mxu0 0.0
    %3855 = vmatmul.mubr.f32.gmra.mrb[0].mxu0 %v3786
    %v3856 = vpop.f32.mrb[0].mxu0
    %v3857 = vadd.f32 0.0, %v3856
    %v3858 = vpop.f32.mrb[0].mxu0
    %3859 = vdwg.mxu0
    %3860 = vrot.lane.b32.xlu0 %v3705, 96
    %v3861 = vpop.permute.xlu0 %3860
    %v3862 = vsel %vm322, %v3705, 0
    %v3864 = vsel %vm322, %v3861, 0
    %3866 = vmatprep.subr.mxu0 0.0
    %3867 = vmatpush1.xpose.msra.mxu0 %v3864
    %3868 = vmatprep.subr.mxu0 0.0
    %3869 = vmatpush1.xpose.msra.mxu0 0.0
    %3870 = vmatprep.subr.mxu0 0.0
    %3871 = vmatpush1.xpose.msra.mxu0 0.0
    %3872 = vmatprep.subr.mxu0 0.0
    %3873 = vmatpush1.xpose.msra.mxu0 0.0
    %3874 = vmatprep.subr.mxu0 0.0
    %3875 = vmatpush1.xpose.msra.mxu0 0.0
    %3876 = vmatprep.subr.mxu0 0.0
    %3877 = vmatpush1.xpose.msra.mxu0 0.0
    %3878 = vmatprep.subr.mxu0 0.0
    %3879 = vmatpush1.xpose.msra.mxu0 0.0
    %3880 = vmatprep.subr.mxu0 0.0
    %3881 = vmatpush1.xpose.msra.mxu0 0.0
    %3882 = vmatprep.subr.mxu0 0.0
    %3883 = vmatpush1.xpose.msra.mxu0 0.0
    %3884 = vmatprep.subr.mxu0 0.0
    %3885 = vmatpush1.xpose.msra.mxu0 0.0
    %3886 = vmatprep.subr.mxu0 0.0
    %3887 = vmatpush1.xpose.msra.mxu0 0.0
    %3888 = vmatprep.subr.mxu0 0.0
    %3889 = vmatpush1.xpose.msra.mxu0 0.0
    %3890 = vmatprep.subr.mxu0 0.0
    %3891 = vmatpush1.xpose.msra.mxu0 0.0
    %3892 = vmatprep.subr.mxu0 0.0
    %3893 = vmatpush1.xpose.msra.mxu0 0.0
    %3894 = vmatprep.subr.mxu0 0.0
    %3895 = vmatpush1.xpose.msra.mxu0 0.0
    %3896 = vmatprep.subr.mxu0 0.0
    %3897 = vmatpush1.xpose.msra.mxu0 0.0
    %3898 = vmatprep.subr.mxu0 0.0
    %3899 = vmatpush1.xpose.msra.mxu0 0.0
    %3900 = vmatprep.subr.mxu0 0.0
    %3901 = vmatpush1.xpose.msra.mxu0 0.0
    %3902 = vmatprep.subr.mxu0 0.0
    %3903 = vmatpush1.xpose.msra.mxu0 0.0
    %3904 = vmatprep.subr.mxu0 0.0
    %3905 = vmatpush1.xpose.msra.mxu0 0.0
    %3906 = vmatprep.subr.mxu0 0.0
    %3907 = vmatpush1.xpose.msra.mxu0 0.0
    %3908 = vmatprep.subr.mxu0 0.0
    %3909 = vmatpush1.xpose.msra.mxu0 0.0
    %3910 = vmatprep.subr.mxu0 0.0
    %3911 = vmatpush1.xpose.msra.mxu0 0.0
    %3912 = vmatprep.subr.mxu0 0.0
    %3913 = vmatpush1.xpose.msra.mxu0 0.0
    %3914 = vmatprep.subr.mxu0 0.0
    %3915 = vmatpush1.xpose.msra.mxu0 0.0
    %3916 = vmatprep.subr.mxu0 0.0
    %3917 = vmatpush1.xpose.msra.mxu0 0.0
    %3918 = vmatprep.subr.mxu0 0.0
    %3919 = vmatpush1.xpose.msra.mxu0 0.0
    %3920 = vmatprep.subr.mxu0 0.0
    %3921 = vmatpush1.xpose.msra.mxu0 0.0
    %3922 = vmatprep.subr.mxu0 0.0
    %3923 = vmatpush1.xpose.msra.mxu0 0.0
    %3924 = vmatprep.subr.mxu0 0.0
    %3925 = vmatpush1.xpose.msra.mxu0 0.0
    %3926 = vmatprep.subr.mxu0 0.0
    %3927 = vmatpush1.xpose.msra.mxu0 0.0
    %3928 = vmatprep.subr.mxu0 0.0
    %3929 = vmatpush1.xpose.msra.mxu0 0.0
    %3930 = vmatprep.mubr.f32.mxu0 0.0
    %3931 = vmatmul.mubr.f32.gmra.mrb[0].mxu0 %v3862
    %v3932 = vpop.f32.mrb[0].mxu0
    %v3933 = vadd.f32 0.0, %v3932
    %v3934 = vpop.f32.mrb[0].mxu0
    %3935 = vdwg.mxu0
    %3936 = vrot.lane.b32.xlu0 %v3707, 96
    %v3937 = vpop.permute.xlu0 %3936
    %v3938 = vsel %vm322, %v3707, 0
    %v3940 = vsel %vm322, %v3937, 0
    %3942 = vmatprep.subr.mxu0 0.0
    %3943 = vmatpush1.xpose.msra.mxu0 %v3940
    %3944 = vmatprep.subr.mxu0 0.0
    %3945 = vmatpush1.xpose.msra.mxu0 0.0
    %3946 = vmatprep.subr.mxu0 0.0
    %3947 = vmatpush1.xpose.msra.mxu0 0.0
    %3948 = vmatprep.subr.mxu0 0.0
    %3949 = vmatpush1.xpose.msra.mxu0 0.0
    %3950 = vmatprep.subr.mxu0 0.0
    %3951 = vmatpush1.xpose.msra.mxu0 0.0
    %3952 = vmatprep.subr.mxu0 0.0
    %3953 = vmatpush1.xpose.msra.mxu0 0.0
    %3954 = vmatprep.subr.mxu0 0.0
    %3955 = vmatpush1.xpose.msra.mxu0 0.0
    %3956 = vmatprep.subr.mxu0 0.0
    %3957 = vmatpush1.xpose.msra.mxu0 0.0
    %3958 = vmatprep.subr.mxu0 0.0
    %3959 = vmatpush1.xpose.msra.mxu0 0.0
    %3960 = vmatprep.subr.mxu0 0.0
    %3961 = vmatpush1.xpose.msra.mxu0 0.0
    %3962 = vmatprep.subr.mxu0 0.0
    %3963 = vmatpush1.xpose.msra.mxu0 0.0
    %3964 = vmatprep.subr.mxu0 0.0
    %3965 = vmatpush1.xpose.msra.mxu0 0.0
    %3966 = vmatprep.subr.mxu0 0.0
    %3967 = vmatpush1.xpose.msra.mxu0 0.0
    %3968 = vmatprep.subr.mxu0 0.0
    %3969 = vmatpush1.xpose.msra.mxu0 0.0
    %3970 = vmatprep.subr.mxu0 0.0
    %3971 = vmatpush1.xpose.msra.mxu0 0.0
    %3972 = vmatprep.subr.mxu0 0.0
    %3973 = vmatpush1.xpose.msra.mxu0 0.0
    %3974 = vmatprep.subr.mxu0 0.0
    %3975 = vmatpush1.xpose.msra.mxu0 0.0
    %3976 = vmatprep.subr.mxu0 0.0
    %3977 = vmatpush1.xpose.msra.mxu0 0.0
    %3978 = vmatprep.subr.mxu0 0.0
    %3979 = vmatpush1.xpose.msra.mxu0 0.0
    %3980 = vmatprep.subr.mxu0 0.0
    %3981 = vmatpush1.xpose.msra.mxu0 0.0
    %3982 = vmatprep.subr.mxu0 0.0
    %3983 = vmatpush1.xpose.msra.mxu0 0.0
    %3984 = vmatprep.subr.mxu0 0.0
    %3985 = vmatpush1.xpose.msra.mxu0 0.0
    %3986 = vmatprep.subr.mxu0 0.0
    %3987 = vmatpush1.xpose.msra.mxu0 0.0
    %3988 = vmatprep.subr.mxu0 0.0
    %3989 = vmatpush1.xpose.msra.mxu0 0.0
    %3990 = vmatprep.subr.mxu0 0.0
    %3991 = vmatpush1.xpose.msra.mxu0 0.0
    %3992 = vmatprep.subr.mxu0 0.0
    %3993 = vmatpush1.xpose.msra.mxu0 0.0
    %3994 = vmatprep.subr.mxu0 0.0
    %3995 = vmatpush1.xpose.msra.mxu0 0.0
    %3996 = vmatprep.subr.mxu0 0.0
    %3997 = vmatpush1.xpose.msra.mxu0 0.0
    %3998 = vmatprep.subr.mxu0 0.0
    %3999 = vmatpush1.xpose.msra.mxu0 0.0
    %4000 = vmatprep.subr.mxu0 0.0
    %4001 = vmatpush1.xpose.msra.mxu0 0.0
    %4002 = vmatprep.subr.mxu0 0.0
    %4003 = vmatpush1.xpose.msra.mxu0 0.0
    %4004 = vmatprep.subr.mxu0 0.0
    %4005 = vmatpush1.xpose.msra.mxu0 0.0
    %4006 = vmatprep.mubr.f32.mxu0 0.0
    %4007 = vmatmul.mubr.f32.gmra.mrb[0].mxu0 %v3938
    %v4008 = vpop.f32.mrb[0].mxu0
    %v4009 = vadd.f32 0.0, %v4008
    %v4010 = vpop.f32.mrb[0].mxu0
    %4011 = vdwg.mxu0
    %v4012 = vmul.f32 %v3781, 0.35355338
    %v4013 = vmul.f32 %v3857, 0.35355338
    %v4014 = vmul.f32 %v3933, 0.35355338
    %v4015 = vmul.f32 %v4009, 0.35355338
    %v4016 = vsel %vm629, %v4012, -inf
    %4017 = vmax.xlane.f32.xlu0 %v4016
    %v4018 = vpop.xlane.xlu0 %4017
    %v4019 = vsel %vm629, %v4013, -inf
    %4020 = vmax.xlane.f32.xlu0 %v4019
    %v4021 = vpop.xlane.xlu0 %4020
    %v4022 = vsel %vm629, %v4014, -inf
    %4023 = vmax.xlane.f32.xlu0 %v4022
    %v4024 = vpop.xlane.xlu0 %4023
    %v4025 = vsel %vm629, %v4015, -inf
    %4026 = vmax.xlane.f32.xlu0 %v4025
    %v4027 = vpop.xlane.xlu0 %4026
    %v4028 = vsub.f32 %v4012, %v4018
    %v4029 = vsub.f32 %v4013, %v4021
    %v4030 = vsub.f32 %v4014, %v4024
    %v4031 = vsub.f32 %v4015, %v4027
    %v4032 = vmul.f32 %v4028, 1.442695
    %v4033 = vpow.pop %v4032
    %v4034 = vmul.f32 %v4029, 1.442695
    %v4035 = vpow.pop %v4034
    %v4036 = vmul.f32 %v4030, 1.442695
    %v4037 = vpow.pop %v4036
    %v4038 = vmul.f32 %v4031, 1.442695
    %v4039 = vpow.pop %v4038
    %v4040 = vsel %vm629, %v4033, 0.0
    %4041 = vadd.xlane.f32.xlu0 %v4040
    %v4042 = vpop.xlane.xlu0 %4041
    %v4043 = vsel %vm629, %v4035, 0.0
    %4044 = vadd.xlane.f32.xlu0 %v4043
    %v4045 = vpop.xlane.xlu0 %4044
    %v4046 = vsel %vm629, %v4037, 0.0
    %4047 = vadd.xlane.f32.xlu0 %v4046
    %v4048 = vpop.xlane.xlu0 %4047
    %v4049 = vsel %vm629, %v4039, 0.0
    %4050 = vadd.xlane.f32.xlu0 %v4049
    %v4051 = vpop.xlane.xlu0 %4050
    %v4052 = vrcp.pop %v4042
    %v4053 = vrcp.pop %v4045
    %v4054 = vrcp.pop %v4048
    %v4055 = vrcp.pop %v4051
    %v4056 = vmul.f32 %v4033, %v4052
    %v4057 = vmul.f32 %v4035, %v4053
    %v4058 = vmul.f32 %v4037, %v4054
    %v4059 = vmul.f32 %v4039, %v4055
    %v4060 = vsel %vm629, %v4056, 0.0
    %v4061 = vsel %vm629, %v4057, 0.0
    %v4062 = vadd.f32 %v4060, %v4061
    %v4063 = vsel %vm629, %v4058, 0.0
    %v4064 = vadd.f32 %v4062, %v4063
    %v4065 = vsel %vm629, %v4059, 0.0
    %v4066 = vadd.f32 %v4064, %v4065
    %v4067 = vmul.f32 %v4066, %v681
    %4068 = vrot.lane.b32.xlu0 %v3698, 64
    %v4069 = vpop.permute.xlu0 %4068
    %v4071 = vsel %vm685, %v4056, 0
    %v4073 = vsel %vm689, %v4069, 0
    %4075 = vmatprep.subr.mxu0 0.0
    %4076 = vmatpush1.msra.mxu0 %v4073
    %4077 = vmatprep.subr.mxu0 0.0
    %4078 = vmatpush1.msra.mxu0 0.0
    %4079 = vmatprep.subr.mxu0 0.0
    %4080 = vmatpush1.msra.mxu0 0.0
    %4081 = vmatprep.subr.mxu0 0.0
    %4082 = vmatpush1.msra.mxu0 0.0
    %4083 = vmatprep.subr.mxu0 0.0
    %4084 = vmatpush1.msra.mxu0 0.0
    %4085 = vmatprep.subr.mxu0 0.0
    %4086 = vmatpush1.msra.mxu0 0.0
    %4087 = vmatprep.subr.mxu0 0.0
    %4088 = vmatpush1.msra.mxu0 0.0
    %4089 = vmatprep.subr.mxu0 0.0
    %4090 = vmatpush1.msra.mxu0 0.0
    %4091 = vmatprep.subr.mxu0 0.0
    %4092 = vmatpush1.msra.mxu0 0.0
    %4093 = vmatprep.subr.mxu0 0.0
    %4094 = vmatpush1.msra.mxu0 0.0
    %4095 = vmatprep.subr.mxu0 0.0
    %4096 = vmatpush1.msra.mxu0 0.0
    %4097 = vmatprep.subr.mxu0 0.0
    %4098 = vmatpush1.msra.mxu0 0.0
    %4099 = vmatprep.subr.mxu0 0.0
    %4100 = vmatpush1.msra.mxu0 0.0
    %4101 = vmatprep.subr.mxu0 0.0
    %4102 = vmatpush1.msra.mxu0 0.0
    %4103 = vmatprep.subr.mxu0 0.0
    %4104 = vmatpush1.msra.mxu0 0.0
    %4105 = vmatprep.subr.mxu0 0.0
    %4106 = vmatpush1.msra.mxu0 0.0
    %4107 = vmatprep.subr.mxu0 0.0
    %4108 = vmatpush1.msra.mxu0 0.0
    %4109 = vmatprep.subr.mxu0 0.0
    %4110 = vmatpush1.msra.mxu0 0.0
    %4111 = vmatprep.subr.mxu0 0.0
    %4112 = vmatpush1.msra.mxu0 0.0
    %4113 = vmatprep.subr.mxu0 0.0
    %4114 = vmatpush1.msra.mxu0 0.0
    %4115 = vmatprep.subr.mxu0 0.0
    %4116 = vmatpush1.msra.mxu0 0.0
    %4117 = vmatprep.subr.mxu0 0.0
    %4118 = vmatpush1.msra.mxu0 0.0
    %4119 = vmatprep.subr.mxu0 0.0
    %4120 = vmatpush1.msra.mxu0 0.0
    %4121 = vmatprep.subr.mxu0 0.0
    %4122 = vmatpush1.msra.mxu0 0.0
    %4123 = vmatprep.subr.mxu0 0.0
    %4124 = vmatpush1.msra.mxu0 0.0
    %4125 = vmatprep.subr.mxu0 0.0
    %4126 = vmatpush1.msra.mxu0 0.0
    %4127 = vmatprep.subr.mxu0 0.0
    %4128 = vmatpush1.msra.mxu0 0.0
    %4129 = vmatprep.subr.mxu0 0.0
    %4130 = vmatpush1.msra.mxu0 0.0
    %4131 = vmatprep.subr.mxu0 0.0
    %4132 = vmatpush1.msra.mxu0 0.0
    %4133 = vmatprep.subr.mxu0 0.0
    %4134 = vmatpush1.msra.mxu0 0.0
    %4135 = vmatprep.subr.mxu0 0.0
    %4136 = vmatpush1.msra.mxu0 0.0
    %4137 = vmatprep.subr.mxu0 0.0
    %4138 = vmatpush1.msra.mxu0 0.0
    %4139 = vmatprep.mubr.f32.mxu0 0.0
    %4140 = vmatmul.mubr.f32.gmra.mrb[0].mxu0 %v4071
    %v4141 = vpop.f32.mrb[0].mxu0
    %v4142 = vadd.f32 0.0, %v4141
    %v4143 = vpop.f32.mrb[0].mxu0
    %4144 = vdwg.mxu0
    %4145 = vrot.lane.b32.xlu0 %v3703, 64
    %v4146 = vpop.permute.xlu0 %4145
    %v4148 = vsel %vm685, %v4057, 0
    %v4150 = vsel %vm689, %v4146, 0
    %4152 = vmatprep.subr.mxu0 0.0
    %4153 = vmatpush1.msra.mxu0 %v4150
    %4154 = vmatprep.subr.mxu0 0.0
    %4155 = vmatpush1.msra.mxu0 0.0
    %4156 = vmatprep.subr.mxu0 0.0
    %4157 = vmatpush1.msra.mxu0 0.0
    %4158 = vmatprep.subr.mxu0 0.0
    %4159 = vmatpush1.msra.mxu0 0.0
    %4160 = vmatprep.subr.mxu0 0.0
    %4161 = vmatpush1.msra.mxu0 0.0
    %4162 = vmatprep.subr.mxu0 0.0
    %4163 = vmatpush1.msra.mxu0 0.0
    %4164 = vmatprep.subr.mxu0 0.0
    %4165 = vmatpush1.msra.mxu0 0.0
    %4166 = vmatprep.subr.mxu0 0.0
    %4167 = vmatpush1.msra.mxu0 0.0
    %4168 = vmatprep.subr.mxu0 0.0
    %4169 = vmatpush1.msra.mxu0 0.0
    %4170 = vmatprep.subr.mxu0 0.0
    %4171 = vmatpush1.msra.mxu0 0.0
    %4172 = vmatprep.subr.mxu0 0.0
    %4173 = vmatpush1.msra.mxu0 0.0
    %4174 = vmatprep.subr.mxu0 0.0
    %4175 = vmatpush1.msra.mxu0 0.0
    %4176 = vmatprep.subr.mxu0 0.0
    %4177 = vmatpush1.msra.mxu0 0.0
    %4178 = vmatprep.subr.mxu0 0.0
    %4179 = vmatpush1.msra.mxu0 0.0
    %4180 = vmatprep.subr.mxu0 0.0
    %4181 = vmatpush1.msra.mxu0 0.0
    %4182 = vmatprep.subr.mxu0 0.0
    %4183 = vmatpush1.msra.mxu0 0.0
    %4184 = vmatprep.subr.mxu0 0.0
    %4185 = vmatpush1.msra.mxu0 0.0
    %4186 = vmatprep.subr.mxu0 0.0
    %4187 = vmatpush1.msra.mxu0 0.0
    %4188 = vmatprep.subr.mxu0 0.0
    %4189 = vmatpush1.msra.mxu0 0.0
    %4190 = vmatprep.subr.mxu0 0.0
    %4191 = vmatpush1.msra.mxu0 0.0
    %4192 = vmatprep.subr.mxu0 0.0
    %4193 = vmatpush1.msra.mxu0 0.0
    %4194 = vmatprep.subr.mxu0 0.0
    %4195 = vmatpush1.msra.mxu0 0.0
    %4196 = vmatprep.subr.mxu0 0.0
    %4197 = vmatpush1.msra.mxu0 0.0
    %4198 = vmatprep.subr.mxu0 0.0
    %4199 = vmatpush1.msra.mxu0 0.0
    %4200 = vmatprep.subr.mxu0 0.0
    %4201 = vmatpush1.msra.mxu0 0.0
    %4202 = vmatprep.subr.mxu0 0.0
    %4203 = vmatpush1.msra.mxu0 0.0
    %4204 = vmatprep.subr.mxu0 0.0
    %4205 = vmatpush1.msra.mxu0 0.0
    %4206 = vmatprep.subr.mxu0 0.0
    %4207 = vmatpush1.msra.mxu0 0.0
    %4208 = vmatprep.subr.mxu0 0.0
    %4209 = vmatpush1.msra.mxu0 0.0
    %4210 = vmatprep.subr.mxu0 0.0
    %4211 = vmatpush1.msra.mxu0 0.0
    %4212 = vmatprep.subr.mxu0 0.0
    %4213 = vmatpush1.msra.mxu0 0.0
    %4214 = vmatprep.subr.mxu0 0.0
    %4215 = vmatpush1.msra.mxu0 0.0
    %4216 = vmatprep.mubr.f32.mxu0 0.0
    %4217 = vmatmul.mubr.f32.gmra.mrb[0].mxu0 %v4148
    %v4218 = vpop.f32.mrb[0].mxu0
    %v4219 = vadd.f32 0.0, %v4218
    %v4220 = vpop.f32.mrb[0].mxu0
    %4221 = vdwg.mxu0
    %4222 = vrot.lane.b32.xlu0 %v3705, 64
    %v4223 = vpop.permute.xlu0 %4222
    %v4225 = vsel %vm685, %v4058, 0
    %v4227 = vsel %vm689, %v4223, 0
    %4229 = vmatprep.subr.mxu0 0.0
    %4230 = vmatpush1.msra.mxu0 %v4227
    %4231 = vmatprep.subr.mxu0 0.0
    %4232 = vmatpush1.msra.mxu0 0.0
    %4233 = vmatprep.subr.mxu0 0.0
    %4234 = vmatpush1.msra.mxu0 0.0
    %4235 = vmatprep.subr.mxu0 0.0
    %4236 = vmatpush1.msra.mxu0 0.0
    %4237 = vmatprep.subr.mxu0 0.0
    %4238 = vmatpush1.msra.mxu0 0.0
    %4239 = vmatprep.subr.mxu0 0.0
    %4240 = vmatpush1.msra.mxu0 0.0
    %4241 = vmatprep.subr.mxu0 0.0
    %4242 = vmatpush1.msra.mxu0 0.0
    %4243 = vmatprep.subr.mxu0 0.0
    %4244 = vmatpush1.msra.mxu0 0.0
    %4245 = vmatprep.subr.mxu0 0.0
    %4246 = vmatpush1.msra.mxu0 0.0
    %4247 = vmatprep.subr.mxu0 0.0
    %4248 = vmatpush1.msra.mxu0 0.0
    %4249 = vmatprep.subr.mxu0 0.0
    %4250 = vmatpush1.msra.mxu0 0.0
    %4251 = vmatprep.subr.mxu0 0.0
    %4252 = vmatpush1.msra.mxu0 0.0
    %4253 = vmatprep.subr.mxu0 0.0
    %4254 = vmatpush1.msra.mxu0 0.0
    %4255 = vmatprep.subr.mxu0 0.0
    %4256 = vmatpush1.msra.mxu0 0.0
    %4257 = vmatprep.subr.mxu0 0.0
    %4258 = vmatpush1.msra.mxu0 0.0
    %4259 = vmatprep.subr.mxu0 0.0
    %4260 = vmatpush1.msra.mxu0 0.0
    %4261 = vmatprep.subr.mxu0 0.0
    %4262 = vmatpush1.msra.mxu0 0.0
    %4263 = vmatprep.subr.mxu0 0.0
    %4264 = vmatpush1.msra.mxu0 0.0
    %4265 = vmatprep.subr.mxu0 0.0
    %4266 = vmatpush1.msra.mxu0 0.0
    %4267 = vmatprep.subr.mxu0 0.0
    %4268 = vmatpush1.msra.mxu0 0.0
    %4269 = vmatprep.subr.mxu0 0.0
    %4270 = vmatpush1.msra.mxu0 0.0
    %4271 = vmatprep.subr.mxu0 0.0
    %4272 = vmatpush1.msra.mxu0 0.0
    %4273 = vmatprep.subr.mxu0 0.0
    %4274 = vmatpush1.msra.mxu0 0.0
    %4275 = vmatprep.subr.mxu0 0.0
    %4276 = vmatpush1.msra.mxu0 0.0
    %4277 = vmatprep.subr.mxu0 0.0
    %4278 = vmatpush1.msra.mxu0 0.0
    %4279 = vmatprep.subr.mxu0 0.0
    %4280 = vmatpush1.msra.mxu0 0.0
    %4281 = vmatprep.subr.mxu0 0.0
    %4282 = vmatpush1.msra.mxu0 0.0
    %4283 = vmatprep.subr.mxu0 0.0
    %4284 = vmatpush1.msra.mxu0 0.0
    %4285 = vmatprep.subr.mxu0 0.0
    %4286 = vmatpush1.msra.mxu0 0.0
    %4287 = vmatprep.subr.mxu0 0.0
    %4288 = vmatpush1.msra.mxu0 0.0
    %4289 = vmatprep.subr.mxu0 0.0
    %4290 = vmatpush1.msra.mxu0 0.0
    %4291 = vmatprep.subr.mxu0 0.0
    %4292 = vmatpush1.msra.mxu0 0.0
    %4293 = vmatprep.mubr.f32.mxu0 0.0
    %4294 = vmatmul.mubr.f32.gmra.mrb[0].mxu0 %v4225
    %v4295 = vpop.f32.mrb[0].mxu0
    %v4296 = vadd.f32 0.0, %v4295
    %v4297 = vpop.f32.mrb[0].mxu0
    %4298 = vdwg.mxu0
    %4299 = vrot.lane.b32.xlu0 %v3707, 64
    %v4300 = vpop.permute.xlu0 %4299
    %v4302 = vsel %vm685, %v4059, 0
    %v4304 = vsel %vm689, %v4300, 0
    %4306 = vmatprep.subr.mxu0 0.0
    %4307 = vmatpush1.msra.mxu0 %v4304
    %4308 = vmatprep.subr.mxu0 0.0
    %4309 = vmatpush1.msra.mxu0 0.0
    %4310 = vmatprep.subr.mxu0 0.0
    %4311 = vmatpush1.msra.mxu0 0.0
    %4312 = vmatprep.subr.mxu0 0.0
    %4313 = vmatpush1.msra.mxu0 0.0
    %4314 = vmatprep.subr.mxu0 0.0
    %4315 = vmatpush1.msra.mxu0 0.0
    %4316 = vmatprep.subr.mxu0 0.0
    %4317 = vmatpush1.msra.mxu0 0.0
    %4318 = vmatprep.subr.mxu0 0.0
    %4319 = vmatpush1.msra.mxu0 0.0
    %4320 = vmatprep.subr.mxu0 0.0
    %4321 = vmatpush1.msra.mxu0 0.0
    %4322 = vmatprep.subr.mxu0 0.0
    %4323 = vmatpush1.msra.mxu0 0.0
    %4324 = vmatprep.subr.mxu0 0.0
    %4325 = vmatpush1.msra.mxu0 0.0
    %4326 = vmatprep.subr.mxu0 0.0
    %4327 = vmatpush1.msra.mxu0 0.0
    %4328 = vmatprep.subr.mxu0 0.0
    %4329 = vmatpush1.msra.mxu0 0.0
    %4330 = vmatprep.subr.mxu0 0.0
    %4331 = vmatpush1.msra.mxu0 0.0
    %4332 = vmatprep.subr.mxu0 0.0
    %4333 = vmatpush1.msra.mxu0 0.0
    %4334 = vmatprep.subr.mxu0 0.0
    %4335 = vmatpush1.msra.mxu0 0.0
    %4336 = vmatprep.subr.mxu0 0.0
    %4337 = vmatpush1.msra.mxu0 0.0
    %4338 = vmatprep.subr.mxu0 0.0
    %4339 = vmatpush1.msra.mxu0 0.0
    %4340 = vmatprep.subr.mxu0 0.0
    %4341 = vmatpush1.msra.mxu0 0.0
    %4342 = vmatprep.subr.mxu0 0.0
    %4343 = vmatpush1.msra.mxu0 0.0
    %4344 = vmatprep.subr.mxu0 0.0
    %4345 = vmatpush1.msra.mxu0 0.0
    %4346 = vmatprep.subr.mxu0 0.0
    %4347 = vmatpush1.msra.mxu0 0.0
    %4348 = vmatprep.subr.mxu0 0.0
    %4349 = vmatpush1.msra.mxu0 0.0
    %4350 = vmatprep.subr.mxu0 0.0
    %4351 = vmatpush1.msra.mxu0 0.0
    %4352 = vmatprep.subr.mxu0 0.0
    %4353 = vmatpush1.msra.mxu0 0.0
    %4354 = vmatprep.subr.mxu0 0.0
    %4355 = vmatpush1.msra.mxu0 0.0
    %4356 = vmatprep.subr.mxu0 0.0
    %4357 = vmatpush1.msra.mxu0 0.0
    %4358 = vmatprep.subr.mxu0 0.0
    %4359 = vmatpush1.msra.mxu0 0.0
    %4360 = vmatprep.subr.mxu0 0.0
    %4361 = vmatpush1.msra.mxu0 0.0
    %4362 = vmatprep.subr.mxu0 0.0
    %4363 = vmatpush1.msra.mxu0 0.0
    %4364 = vmatprep.subr.mxu0 0.0
    %4365 = vmatpush1.msra.mxu0 0.0
    %4366 = vmatprep.subr.mxu0 0.0
    %4367 = vmatpush1.msra.mxu0 0.0
    %4368 = vmatprep.subr.mxu0 0.0
    %4369 = vmatpush1.msra.mxu0 0.0
    %4370 = vmatprep.mubr.f32.mxu0 0.0
    %4371 = vmatmul.mubr.f32.gmra.mrb[0].mxu0 %v4302
    %v4372 = vpop.f32.mrb[0].mxu0
    %v4373 = vadd.f32 0.0, %v4372
    %v4374 = vpop.f32.mrb[0].mxu0
    %4375 = vdwg.mxu0
    %4377 = vrot.lane.b32.xlu0 %v4219, 8
    %v4378 = vpop.permute.xlu0 %4377
    %4381 = vrot.lane.b32.xlu0 %v4296, 16
    %v4382 = vpop.permute.xlu0 %4381
    %4385 = vrot.lane.b32.xlu0 %v4373, 24
    %v4386 = vpop.permute.xlu0 %4385
    %v4388 = vsel %vm322, %v4142, %v4378
    %v4389 = vsel %vm1006, %v4388, %v4382
    %v4390 = vsel %vm1008, %v4389, %v4386
    %v4391 = vld [vmem:[%s2110] sm:$0xff]
    %v4392 = vld [vmem:[%s2110 + $0x8] sm:$0xff]
    %v4393 = vld [vmem:[%s2110 + $0x10] sm:$0xff]
    %v4394 = vld [vmem:[%s2110 + $0x18] sm:$0xff]
    %v4395 = vld [vmem:[%s2115] sm:$0x1]
    %v4397 = vlaneseq
    %v4398 = vshrl.u32 %v4397, 7
    %v4399 = vsub.s32 0, %v4398
    %v4400 = vrot.slane %v4395, %v4399
    %v4403 = vsel %vm239, %v4390, 0
    %4405 = vmatprep.subr.mxu0 0.0
    %4406 = vmatpush1.msra.mxu0 %v4391
    %4407 = vmatprep.subr.mxu0 0.0
    %4408 = vmatpush1.msra.mxu0 %v4392
    %4409 = vmatprep.subr.mxu0 0.0
    %4410 = vmatpush1.msra.mxu0 %v4393
    %4411 = vmatprep.subr.mxu0 0.0
    %4412 = vmatpush1.msra.mxu0 %v4394
    %4413 = vmatprep.subr.mxu0 0.0
    %4414 = vmatpush1.msra.mxu0 0.0
    %4415 = vmatprep.subr.mxu0 0.0
    %4416 = vmatpush1.msra.mxu0 0.0
    %4417 = vmatprep.subr.mxu0 0.0
    %4418 = vmatpush1.msra.mxu0 0.0
    %4419 = vmatprep.subr.mxu0 0.0
    %4420 = vmatpush1.msra.mxu0 0.0
    %4421 = vmatprep.subr.mxu0 0.0
    %4422 = vmatpush1.msra.mxu0 0.0
    %4423 = vmatprep.subr.mxu0 0.0
    %4424 = vmatpush1.msra.mxu0 0.0
    %4425 = vmatprep.subr.mxu0 0.0
    %4426 = vmatpush1.msra.mxu0 0.0
    %4427 = vmatprep.subr.mxu0 0.0
    %4428 = vmatpush1.msra.mxu0 0.0
    %4429 = vmatprep.subr.mxu0 0.0
    %4430 = vmatpush1.msra.mxu0 0.0
    %4431 = vmatprep.subr.mxu0 0.0
    %4432 = vmatpush1.msra.mxu0 0.0
    %4433 = vmatprep.subr.mxu0 0.0
    %4434 = vmatpush1.msra.mxu0 0.0
    %4435 = vmatprep.subr.mxu0 0.0
    %4436 = vmatpush1.msra.mxu0 0.0
    %4437 = vmatprep.subr.mxu0 0.0
    %4438 = vmatpush1.msra.mxu0 0.0
    %4439 = vmatprep.subr.mxu0 0.0
    %4440 = vmatpush1.msra.mxu0 0.0
    %4441 = vmatprep.subr.mxu0 0.0
    %4442 = vmatpush1.msra.mxu0 0.0
    %4443 = vmatprep.subr.mxu0 0.0
    %4444 = vmatpush1.msra.mxu0 0.0
    %4445 = vmatprep.subr.mxu0 0.0
    %4446 = vmatpush1.msra.mxu0 0.0
    %4447 = vmatprep.subr.mxu0 0.0
    %4448 = vmatpush1.msra.mxu0 0.0
    %4449 = vmatprep.subr.mxu0 0.0
    %4450 = vmatpush1.msra.mxu0 0.0
    %4451 = vmatprep.subr.mxu0 0.0
    %4452 = vmatpush1.msra.mxu0 0.0
    %4453 = vmatprep.subr.mxu0 0.0
    %4454 = vmatpush1.msra.mxu0 0.0
    %4455 = vmatprep.subr.mxu0 0.0
    %4456 = vmatpush1.msra.mxu0 0.0
    %4457 = vmatprep.subr.mxu0 0.0
    %4458 = vmatpush1.msra.mxu0 0.0
    %4459 = vmatprep.subr.mxu0 0.0
    %4460 = vmatpush1.msra.mxu0 0.0
    %4461 = vmatprep.subr.mxu0 0.0
    %4462 = vmatpush1.msra.mxu0 0.0
    %4463 = vmatprep.subr.mxu0 0.0
    %4464 = vmatpush1.msra.mxu0 0.0
    %4465 = vmatprep.subr.mxu0 0.0
    %4466 = vmatpush1.msra.mxu0 0.0
    %4467 = vmatprep.subr.mxu0 0.0
    %4468 = vmatpush1.msra.mxu0 0.0
    %4469 = vmatprep.mubr.f32.mxu0 0.0
    %4470 = vmatmul.mubr.f32.gmra.mrb[0].mxu0 %v4403
    %v4471 = vpop.f32.mrb[0].mxu0
    %v4472 = vadd.f32 %v4400, %v4471
    %v4473 = vpop.f32.mrb[0].mxu0
    %4474 = vdwg.mxu0
    %v4475 = vadd.f32 %v3587, %v4472
    %v4476 = vld [vmem:[%s2197] sm:$0x1]
    %v4477 = vld [vmem:[%s2199] sm:$0x1]
    %v4478 = vsel %vm199, %v4475, 0.0
    %4479 = vadd.xlane.f32.xlu0 %v4478
    %v4480 = vpop.xlane.xlu0 %4479
    %v4481 = vmul.f32 %v4480, %v203
    %v4482 = vsub.f32 %v4475, %v4481
    %v4483 = vmul.f32 %v4482, %v4482
    %v4484 = vsel %vm199, %v4483, 0.0
    %4485 = vadd.xlane.f32.xlu0 %v4484
    %v4486 = vpop.xlane.xlu0 %4485
    %v4487 = vmul.f32 %v4486, %v203
    %v4488 = vadd.f32 %v4487, 1e-05
    %v4489 = vrsqrt.pop %v4488
    %v4490 = vmul.f32 %v4482, %v4489
    %v4492 = vlaneseq
    %v4493 = vshrl.u32 %v4492, 7
    %v4494 = vsub.s32 0, %v4493
    %v4495 = vrot.slane %v4476, %v4494
    %v4497 = vmul.f32 %v4490, %v4495
    %v4499 = vlaneseq
    %v4500 = vshrl.u32 %v4499, 7
    %v4501 = vsub.s32 0, %v4500
    %v4502 = vrot.slane %v4477, %v4501
    %v4504 = vadd.f32 %v4497, %v4502
    %v4505 = vld [vmem:[%s2228] sm:$0xff]
    %v4506 = vld [vmem:[%s2228 + $0x8] sm:$0xff]
    %v4507 = vld [vmem:[%s2228 + $0x10] sm:$0xff]
    %v4508 = vld [vmem:[%s2228 + $0x18] sm:$0xff]
    %v4509 = vld [vmem:[%s2233] sm:$0x1]
    %v4511 = vlaneseq
    %v4512 = vshrl.u32 %v4511, 7
    %v4513 = vsub.s32 0, %v4512
    %v4514 = vrot.slane %v4509, %v4513
    %v4517 = vsel %vm239, %v4504, 0
    %4519 = vmatprep.subr.mxu0 0.0
    %4520 = vmatpush1.msra.mxu0 %v4505
    %4521 = vmatprep.subr.mxu0 0.0
    %4522 = vmatpush1.msra.mxu0 %v4506
    %4523 = vmatprep.subr.mxu0 0.0
    %4524 = vmatpush1.msra.mxu0 %v4507
    %4525 = vmatprep.subr.mxu0 0.0
    %4526 = vmatpush1.msra.mxu0 %v4508
    %4527 = vmatprep.subr.mxu0 0.0
    %4528 = vmatpush1.msra.mxu0 0.0
    %4529 = vmatprep.subr.mxu0 0.0
    %4530 = vmatpush1.msra.mxu0 0.0
    %4531 = vmatprep.subr.mxu0 0.0
    %4532 = vmatpush1.msra.mxu0 0.0
    %4533 = vmatprep.subr.mxu0 0.0
    %4534 = vmatpush1.msra.mxu0 0.0
    %4535 = vmatprep.subr.mxu0 0.0
    %4536 = vmatpush1.msra.mxu0 0.0
    %4537 = vmatprep.subr.mxu0 0.0
    %4538 = vmatpush1.msra.mxu0 0.0
    %4539 = vmatprep.subr.mxu0 0.0
    %4540 = vmatpush1.msra.mxu0 0.0
    %4541 = vmatprep.subr.mxu0 0.0
    %4542 = vmatpush1.msra.mxu0 0.0
    %4543 = vmatprep.subr.mxu0 0.0
    %4544 = vmatpush1.msra.mxu0 0.0
    %4545 = vmatprep.subr.mxu0 0.0
    %4546 = vmatpush1.msra.mxu0 0.0
    %4547 = vmatprep.subr.mxu0 0.0
    %4548 = vmatpush1.msra.mxu0 0.0
    %4549 = vmatprep.subr.mxu0 0.0
    %4550 = vmatpush1.msra.mxu0 0.0
    %4551 = vmatprep.subr.mxu0 0.0
    %4552 = vmatpush1.msra.mxu0 0.0
    %4553 = vmatprep.subr.mxu0 0.0
    %4554 = vmatpush1.msra.mxu0 0.0
    %4555 = vmatprep.subr.mxu0 0.0
    %4556 = vmatpush1.msra.mxu0 0.0
    %4557 = vmatprep.subr.mxu0 0.0
    %4558 = vmatpush1.msra.mxu0 0.0
    %4559 = vmatprep.subr.mxu0 0.0
    %4560 = vmatpush1.msra.mxu0 0.0
    %4561 = vmatprep.subr.mxu0 0.0
    %4562 = vmatpush1.msra.mxu0 0.0
    %4563 = vmatprep.subr.mxu0 0.0
    %4564 = vmatpush1.msra.mxu0 0.0
    %4565 = vmatprep.subr.mxu0 0.0
    %4566 = vmatpush1.msra.mxu0 0.0
    %4567 = vmatprep.subr.mxu0 0.0
    %4568 = vmatpush1.msra.mxu0 0.0
    %4569 = vmatprep.subr.mxu0 0.0
    %4570 = vmatpush1.msra.mxu0 0.0
    %4571 = vmatprep.subr.mxu0 0.0
    %4572 = vmatpush1.msra.mxu0 0.0
    %4573 = vmatprep.subr.mxu0 0.0
    %4574 = vmatpush1.msra.mxu0 0.0
    %4575 = vmatprep.subr.mxu0 0.0
    %4576 = vmatpush1.msra.mxu0 0.0
    %4577 = vmatprep.subr.mxu0 0.0
    %4578 = vmatpush1.msra.mxu0 0.0
    %4579 = vmatprep.subr.mxu0 0.0
    %4580 = vmatpush1.msra.mxu0 0.0
    %4581 = vmatprep.subr.mxu0 0.0
    %4582 = vmatpush1.msra.mxu0 0.0
    %4583 = vmatprep.mubr.f32.mxu0 0.0
    %4584 = vmatmul.mubr.f32.gmra.mrb[0].mxu0 %v4517
    %v4585 = vpop.f32.mrb[0].mxu0
    %v4586 = vadd.f32 %v4514, %v4585
    %v4587 = vpop.f32.mrb[0].mxu0
    %4588 = vdwg.mxu0
    %v4589 = vmul.f32 %v4586, 0.5
    %v4590 = vmul.f32 %v4586, 0.70710677
    %v4591 = verf.f32.pop %v4590
    %v4592 = vadd.f32 %v4591, 1.0
    %v4593 = vmul.f32 %v4589, %v4592
    %v4594 = vld [vmem:[%s2319] sm:$0xff]
    %v4595 = vld [vmem:[%s2319 + $0x8] sm:$0xff]
    %v4596 = vld [vmem:[%s2319 + $0x10] sm:$0xff]
    %v4597 = vld [vmem:[%s2319 + $0x18] sm:$0xff]
    %v4598 = vld [vmem:[%s2319 + $0x20] sm:$0xff]
    %v4599 = vld [vmem:[%s2319 + $0x28] sm:$0xff]
    %v4600 = vld [vmem:[%s2319 + $0x30] sm:$0xff]
    %v4601 = vld [vmem:[%s2319 + $0x38] sm:$0xff]
    %v4602 = vld [vmem:[%s2328] sm:$0x1]
    %v4604 = vlaneseq
    %v4605 = vshrl.u32 %v4604, 7
    %v4606 = vsub.s32 0, %v4605
    %v4607 = vrot.slane %v4602, %v4606
    %v4610 = vsel %vm1228, %v4593, 0
    %4612 = vmatprep.subr.mxu0 0.0
    %4613 = vmatpush1.msra.mxu0 %v4594
    %4614 = vmatprep.subr.mxu0 0.0
    %4615 = vmatpush1.msra.mxu0 %v4595
    %4616 = vmatprep.subr.mxu0 0.0
    %4617 = vmatpush1.msra.mxu0 %v4596
    %4618 = vmatprep.subr.mxu0 0.0
    %4619 = vmatpush1.msra.mxu0 %v4597
    %4620 = vmatprep.subr.mxu0 0.0
    %4621 = vmatpush1.msra.mxu0 %v4598
    %4622 = vmatprep.subr.mxu0 0.0
    %4623 = vmatpush1.msra.mxu0 %v4599
    %4624 = vmatprep.subr.mxu0 0.0
    %4625 = vmatpush1.msra.mxu0 %v4600
    %4626 = vmatprep.subr.mxu0 0.0
    %4627 = vmatpush1.msra.mxu0 %v4601
    %4628 = vmatprep.subr.mxu0 0.0
    %4629 = vmatpush1.msra.mxu0 0.0
    %4630 = vmatprep.subr.mxu0 0.0
    %4631 = vmatpush1.msra.mxu0 0.0
    %4632 = vmatprep.subr.mxu0 0.0
    %4633 = vmatpush1.msra.mxu0 0.0
    %4634 = vmatprep.subr.mxu0 0.0
    %4635 = vmatpush1.msra.mxu0 0.0
    %4636 = vmatprep.subr.mxu0 0.0
    %4637 = vmatpush1.msra.mxu0 0.0
    %4638 = vmatprep.subr.mxu0 0.0
    %4639 = vmatpush1.msra.mxu0 0.0
    %4640 = vmatprep.subr.mxu0 0.0
    %4641 = vmatpush1.msra.mxu0 0.0
    %4642 = vmatprep.subr.mxu0 0.0
    %4643 = vmatpush1.msra.mxu0 0.0
    %4644 = vmatprep.subr.mxu0 0.0
    %4645 = vmatpush1.msra.mxu0 0.0
    %4646 = vmatprep.subr.mxu0 0.0
    %4647 = vmatpush1.msra.mxu0 0.0
    %4648 = vmatprep.subr.mxu0 0.0
    %4649 = vmatpush1.msra.mxu0 0.0
    %4650 = vmatprep.subr.mxu0 0.0
    %4651 = vmatpush1.msra.mxu0 0.0
    %4652 = vmatprep.subr.mxu0 0.0
    %4653 = vmatpush1.msra.mxu0 0.0
    %4654 = vmatprep.subr.mxu0 0.0
    %4655 = vmatpush1.msra.mxu0 0.0
    %4656 = vmatprep.subr.mxu0 0.0
    %4657 = vmatpush1.msra.mxu0 0.0
    %4658 = vmatprep.subr.mxu0 0.0
    %4659 = vmatpush1.msra.mxu0 0.0
    %4660 = vmatprep.subr.mxu0 0.0
    %4661 = vmatpush1.msra.mxu0 0.0
    %4662 = vmatprep.subr.mxu0 0.0
    %4663 = vmatpush1.msra.mxu0 0.0
    %4664 = vmatprep.subr.mxu0 0.0
    %4665 = vmatpush1.msra.mxu0 0.0
    %4666 = vmatprep.subr.mxu0 0.0
    %4667 = vmatpush1.msra.mxu0 0.0
    %4668 = vmatprep.subr.mxu0 0.0
    %4669 = vmatpush1.msra.mxu0 0.0
    %4670 = vmatprep.subr.mxu0 0.0
    %4671 = vmatpush1.msra.mxu0 0.0
    %4672 = vmatprep.subr.mxu0 0.0
    %4673 = vmatpush1.msra.mxu0 0.0
    %4674 = vmatprep.subr.mxu0 0.0
    %4675 = vmatpush1.msra.mxu0 0.0
    %4676 = vmatprep.mubr.f32.mxu0 0.0
    %4677 = vmatmul.mubr.f32.gmra.mrb[0].mxu0 %v4610
    %v4678 = vpop.f32.mrb[0].mxu0
    %v4679 = vadd.f32 %v4607, %v4678
    %v4680 = vpop.f32.mrb[0].mxu0
    %4681 = vdwg.mxu0
    %v4682 = vadd.f32 %v4475, %v4679
    %v4683 = vmul.f32 %v4067, 0.5
    %v4684 = vadd.f32 %v4683, %v2411
    %v4686 = vsel %vm685, %v4684, 0
    %v4689 = vsel %vm689, %v2972, 0
    %4691 = vmatprep.subr.mxu0 0.0
    %4692 = vmatpush1.msra.mxu0 %v4689
    %4693 = vmatprep.subr.mxu0 0.0
    %4694 = vmatpush1.msra.mxu0 0.0
    %4695 = vmatprep.subr.mxu0 0.0
    %4696 = vmatpush1.msra.mxu0 0.0
    %4697 = vmatprep.subr.mxu0 0.0
    %4698 = vmatpush1.msra.mxu0 0.0
    %4699 = vmatprep.subr.mxu0 0.0
    %4700 = vmatpush1.msra.mxu0 0.0
    %4701 = vmatprep.subr.mxu0 0.0
    %4702 = vmatpush1.msra.mxu0 0.0
    %4703 = vmatprep.subr.mxu0 0.0
    %4704 = vmatpush1.msra.mxu0 0.0
    %4705 = vmatprep.subr.mxu0 0.0
    %4706 = vmatpush1.msra.mxu0 0.0
    %4707 = vmatprep.subr.mxu0 0.0
    %4708 = vmatpush1.msra.mxu0 0.0
    %4709 = vmatprep.subr.mxu0 0.0
    %4710 = vmatpush1.msra.mxu0 0.0
    %4711 = vmatprep.subr.mxu0 0.0
    %4712 = vmatpush1.msra.mxu0 0.0
    %4713 = vmatprep.subr.mxu0 0.0
    %4714 = vmatpush1.msra.mxu0 0.0
    %4715 = vmatprep.subr.mxu0 0.0
    %4716 = vmatpush1.msra.mxu0 0.0
    %4717 = vmatprep.subr.mxu0 0.0
    %4718 = vmatpush1.msra.mxu0 0.0
    %4719 = vmatprep.subr.mxu0 0.0
    %4720 = vmatpush1.msra.mxu0 0.0
    %4721 = vmatprep.subr.mxu0 0.0
    %4722 = vmatpush1.msra.mxu0 0.0
    %4723 = vmatprep.subr.mxu0 0.0
    %4724 = vmatpush1.msra.mxu0 0.0
    %4725 = vmatprep.subr.mxu0 0.0
    %4726 = vmatpush1.msra.mxu0 0.0
    %4727 = vmatprep.subr.mxu0 0.0
    %4728 = vmatpush1.msra.mxu0 0.0
    %4729 = vmatprep.subr.mxu0 0.0
    %4730 = vmatpush1.msra.mxu0 0.0
    %4731 = vmatprep.subr.mxu0 0.0
    %4732 = vmatpush1.msra.mxu0 0.0
    %4733 = vmatprep.subr.mxu0 0.0
    %4734 = vmatpush1.msra.mxu0 0.0
    %4735 = vmatprep.subr.mxu0 0.0
    %4736 = vmatpush1.msra.mxu0 0.0
    %4737 = vmatprep.subr.mxu0 0.0
    %4738 = vmatpush1.msra.mxu0 0.0
    %4739 = vmatprep.subr.mxu0 0.0
    %4740 = vmatpush1.msra.mxu0 0.0
    %4741 = vmatprep.subr.mxu0 0.0
    %4742 = vmatpush1.msra.mxu0 0.0
    %4743 = vmatprep.subr.mxu0 0.0
    %4744 = vmatpush1.msra.mxu0 0.0
    %4745 = vmatprep.subr.mxu0 0.0
    %4746 = vmatpush1.msra.mxu0 0.0
    %4747 = vmatprep.subr.mxu0 0.0
    %4748 = vmatpush1.msra.mxu0 0.0
    %4749 = vmatprep.subr.mxu0 0.0
    %4750 = vmatpush1.msra.mxu0 0.0
    %4751 = vmatprep.subr.mxu0 0.0
    %4752 = vmatpush1.msra.mxu0 0.0
    %4753 = vmatprep.subr.mxu0 0.0
    %4754 = vmatpush1.msra.mxu0 0.0
    %4755 = vmatprep.mubr.f32.mxu0 0.0
    %4756 = vmatmul.mubr.f32.gmra.mrb[0].mxu0 %v4686
    %v4757 = vpop.f32.mrb[0].mxu0
    %v4758 = vadd.f32 0.0, %v4757
    %v4759 = vpop.f32.mrb[0].mxu0
    %4760 = vdwg.mxu0
    %v4762 = vrot.slane %v4682, 7
    %v4764 = vsel %vm194, %v2409, %v4762
    %v4765 = vld [vmem:[%s17] sm:$0x1]
    %v4766 = vld [vmem:[%s18] sm:$0x1]
    %vm4767 = vcmask 254976
    %v4768 = vsel %vm4767, %v4764, 0.0
    %4769 = vadd.xlane.f32.xlu0 %v4768
    %v4770 = vpop.xlane.xlu0 %4769
    %v4771 = vmul.f32 %v4770, %v203
    %v4772 = vsub.f32 %v4764, %v4771
    %v4773 = vmul.f32 %v4772, %v4772
    %v4774 = vsel %vm4767, %v4773, 0.0
    %4775 = vadd.xlane.f32.xlu0 %v4774
    %v4776 = vpop.xlane.xlu0 %4775
    %v4777 = vmul.f32 %v4776, %v203
    %v4778 = vadd.f32 %v4777, 1e-05
    %v4779 = vrsqrt.pop %v4778
    %v4780 = vmul.f32 %v4772, %v4779
    %v4782 = vlaneseq
    %v4783 = vshrl.u32 %v4782, 7
    %v4784 = vsub.s32 0, %v4783
    %v4785 = vrot.slane %v4765, %v4784
    %v4787 = vmul.f32 %v4780, %v4785
    %v4789 = vlaneseq
    %v4790 = vshrl.u32 %v4789, 7
    %v4791 = vsub.s32 0, %v4790
    %v4792 = vrot.slane %v4766, %v4791
    %v4794 = vadd.f32 %v4787, %v4792
    %v4795 = vld [vmem:[%s19] sm:$0xff]
    %v4796 = vld [vmem:[%s19 + $0x8] sm:$0xff]
    %v4797 = vld [vmem:[%s19 + $0x10] sm:$0xff]
    %v4798 = vld [vmem:[%s19 + $0x18] sm:$0xff]
    %v4799 = vld [vmem:[%s20] sm:$0x1]
    %v4801 = vlaneseq
    %v4802 = vshrl.u32 %v4801, 7
    %v4803 = vsub.s32 0, %v4802
    %v4804 = vrot.slane %v4799, %v4803
    %v4807 = vsel %vm239, %v4794, 0
    %4809 = vmatprep.subr.mxu0 0.0
    %4810 = vmatpush1.msra.mxu0 %v4795
    %4811 = vmatprep.subr.mxu0 0.0
    %4812 = vmatpush1.msra.mxu0 %v4796
    %4813 = vmatprep.subr.mxu0 0.0
    %4814 = vmatpush1.msra.mxu0 %v4797
    %4815 = vmatprep.subr.mxu0 0.0
    %4816 = vmatpush1.msra.mxu0 %v4798
    %4817 = vmatprep.subr.mxu0 0.0
    %4818 = vmatpush1.msra.mxu0 0.0
    %4819 = vmatprep.subr.mxu0 0.0
    %4820 = vmatpush1.msra.mxu0 0.0
    %4821 = vmatprep.subr.mxu0 0.0
    %4822 = vmatpush1.msra.mxu0 0.0
    %4823 = vmatprep.subr.mxu0 0.0
    %4824 = vmatpush1.msra.mxu0 0.0
    %4825 = vmatprep.subr.mxu0 0.0
    %4826 = vmatpush1.msra.mxu0 0.0
    %4827 = vmatprep.subr.mxu0 0.0
    %4828 = vmatpush1.msra.mxu0 0.0
    %4829 = vmatprep.subr.mxu0 0.0
    %4830 = vmatpush1.msra.mxu0 0.0
    %4831 = vmatprep.subr.mxu0 0.0
    %4832 = vmatpush1.msra.mxu0 0.0
    %4833 = vmatprep.subr.mxu0 0.0
    %4834 = vmatpush1.msra.mxu0 0.0
    %4835 = vmatprep.subr.mxu0 0.0
    %4836 = vmatpush1.msra.mxu0 0.0
    %4837 = vmatprep.subr.mxu0 0.0
    %4838 = vmatpush1.msra.mxu0 0.0
    %4839 = vmatprep.subr.mxu0 0.0
    %4840 = vmatpush1.msra.mxu0 0.0
    %4841 = vmatprep.subr.mxu0 0.0
    %4842 = vmatpush1.msra.mxu0 0.0
    %4843 = vmatprep.subr.mxu0 0.0
    %4844 = vmatpush1.msra.mxu0 0.0
    %4845 = vmatprep.subr.mxu0 0.0
    %4846 = vmatpush1.msra.mxu0 0.0
    %4847 = vmatprep.subr.mxu0 0.0
    %4848 = vmatpush1.msra.mxu0 0.0
    %4849 = vmatprep.subr.mxu0 0.0
    %4850 = vmatpush1.msra.mxu0 0.0
    %4851 = vmatprep.subr.mxu0 0.0
    %4852 = vmatpush1.msra.mxu0 0.0
    %4853 = vmatprep.subr.mxu0 0.0
    %4854 = vmatpush1.msra.mxu0 0.0
    %4855 = vmatprep.subr.mxu0 0.0
    %4856 = vmatpush1.msra.mxu0 0.0
    %4857 = vmatprep.subr.mxu0 0.0
    %4858 = vmatpush1.msra.mxu0 0.0
    %4859 = vmatprep.subr.mxu0 0.0
    %4860 = vmatpush1.msra.mxu0 0.0
    %4861 = vmatprep.subr.mxu0 0.0
    %4862 = vmatpush1.msra.mxu0 0.0
    %4863 = vmatprep.subr.mxu0 0.0
    %4864 = vmatpush1.msra.mxu0 0.0
    %4865 = vmatprep.subr.mxu0 0.0
    %4866 = vmatpush1.msra.mxu0 0.0
    %4867 = vmatprep.subr.mxu0 0.0
    %4868 = vmatpush1.msra.mxu0 0.0
    %4869 = vmatprep.subr.mxu0 0.0
    %4870 = vmatpush1.msra.mxu0 0.0
    %4871 = vmatprep.subr.mxu0 0.0
    %4872 = vmatpush1.msra.mxu0 0.0
    %4873 = vmatprep.mubr.f32.mxu0 0.0
    %4874 = vmatmul.mubr.f32.gmra.mrb[0].mxu0 %v4807
    %v4875 = vpop.f32.mrb[0].mxu0
    %v4876 = vadd.f32 %v4804, %v4875
    %v4877 = vpop.f32.mrb[0].mxu0
    %4878 = vdwg.mxu0
    %vm4879 = vcmask 74752
    %4880 = vst.msk [vmem:[#allocation2] sm:$0x3] %vm4879, %v4876
    %4881 = vst.msk [vmem:[%s22] sm:$0x1f] %vm629, %v2486
    %4882 = vst.msk [vmem:[%s22 + $0x8] sm:$0x1f] %vm629, %v4758
    // Predicated region
    $region86: #{vit_forward.1} parent=1 // pred_check
      _
    $region87: #{vit_forward.1} parent=1 // pred_check_branch
      %4884 = sbr.rel (0) target = $region89
    $region88: #{vit_forward.1} parent=1 // pred_region
      %s4886 = ssub.s32 32, 32
      %4887 = vsyncadd [#allocation3], %s4886
      %s4889 = sshll.u32 [#allocation2], 4
      %s4890 = int_to_ptr.vmem [resolvable:$true] %s4889
      %4892 = dma.vmem_to_hbm [thread:$0]  %s4890, 32, %s21, [#allocation3]
    $region89: #{vit_forward.1} parent=1 // pred_fallthru
      _
    // Predicated region
    $region90: #{vit_forward.1} parent=1 // pred_check
      _
    $region91: #{vit_forward.1} parent=1 // pred_check_branch
      %4894 = sbr.rel (0) target = $region93
    $region92: #{vit_forward.1} parent=1 // pred_region
      _
    $region93: #{vit_forward.1} parent=1 // pred_fallthru
      _
    // Predicated region
    $region94: #{vit_forward.1} parent=1 // pred_check
      _
    $region95: #{vit_forward.1} parent=1 // pred_check_branch
      %4896 = sbr.rel (0) target = $region97
    $region96: #{vit_forward.1} parent=1 // pred_region
      %4897 = dma.done [#allocation3], 32
    $region97: #{vit_forward.1} parent=1 // pred_fallthru
      _
    // Predicated region
    $region98: #{vit_forward.1} parent=1 // pred_check
      _
    $region99: #{vit_forward.1} parent=1 // pred_check_branch
      %4899 = sbr.rel (0) target = $region101
    $region100: #{vit_forward.1} parent=1 // pred_region
      _
    $region101: #{vit_forward.1} parent=1 // pred_fallthru
      _
    %4900 = vsyncpa [#allocation3], 1

</llo_original>
